<compile_context>
chip_gen: v7x
topology: tpu7x:2x2x1
jax: 0.10.0
libtpu: 0.0.40
codegen_flags: <defaults>
</compile_context>

<pallas_src>
import jax
import jax.numpy as jnp
from jax.experimental import pallas as pl
from jax.experimental.pallas import tpu as pltpu

FEAT = 1024      # base_model feature dim
HID = 512        # hidden dim
OUT = 4          # logits
OUT_PAD = 128    # lane-dense padded output width
TB_MAX = 512     # max batch tile (rows per grid step)


def _round_up(n, m):
    return ((n + m - 1) // m) * m


def _head_kernel(x_ref,
                 wfc_ref, bfc_ref,
                 w1_ref, b1_ref,
                 w2_ref, b2_ref,
                 w3_ref, b3_ref,
                 o_ref):
    # x tile arrives as f32 straight from HBM; cast to bf16 on the VPU inside the
    # kernel (hidden under the MXU) instead of a separate XLA cast pass over HBM.
    x = x_ref[...].astype(jnp.bfloat16)

    # fc: Linear(1024 -> 512), f32 accumulation on the MXU
    h = jnp.dot(x, wfc_ref[...], preferred_element_type=jnp.float32) + bfc_ref[...]

    # Flatten is a no-op on (TB, 512).
    # Linear(512->512) with BatchNorm1d folded in + ReLU (+ Dropout identity, eval mode)
    h = jnp.dot(h.astype(jnp.bfloat16), w1_ref[...],
                preferred_element_type=jnp.float32) + b1_ref[...]
    h = jnp.maximum(h, 0.0)

    # Linear(512->512) + folded BatchNorm1d + ReLU (+ Dropout identity)
    h = jnp.dot(h.astype(jnp.bfloat16), w2_ref[...],
                preferred_element_type=jnp.float32) + b2_ref[...]
    h = jnp.maximum(h, 0.0)

    # Linear(512 -> 4), zero-padded to 128 lanes for a lane-dense store.
    out = jnp.dot(h.astype(jnp.bfloat16), w3_ref[...],
                  preferred_element_type=jnp.float32) + b3_ref[...]
    o_ref[...] = out.astype(o_ref.dtype)


def _choose_tb(batch):
    """Adaptive batch tile: multiple of 16, <= TB_MAX, and >= 2 grid steps when the
    batch is big enough to split across v7x's two TensorCores."""
    tb = min(TB_MAX, _round_up(batch, 16))
    if batch >= 32 and pl.cdiv(batch, tb) < 2:
        tb = _round_up(pl.cdiv(batch, 2), 16)
    return tb


@jax.jit
def custom_model_head(x, params):
    """x: (B, 1024) float32 features from base_model. Returns (B, 4) float32 logits."""
    wfc, bfc, w1f, b1f, w2f, b2f, w3p, b3p = params
    B = x.shape[0]
    if B == 0:
        return jnp.zeros((0, OUT), jnp.float32)

    tb = _choose_tb(B)
    nb = pl.cdiv(B, tb)
    B_pad = nb * tb

    xp = x
    if B_pad != B:
        xp = jnp.pad(x, ((0, B_pad - B), (0, 0)))

    out_padded = pl.pallas_call(
        _head_kernel,
        out_shape=jax.ShapeDtypeStruct((B_pad, OUT_PAD), jnp.bfloat16),
        grid_spec=pltpu.PrefetchScalarGridSpec(
            num_scalar_prefetch=0,
            grid=(nb,),
            in_specs=[
                pl.BlockSpec((tb, FEAT), lambda i: (i, 0)),         # x tile (f32)
                pl.BlockSpec((FEAT, HID), lambda i: (0, 0)),        # Wfc (resident)
                pl.BlockSpec((1, HID), lambda i: (0, 0)),           # bfc
                pl.BlockSpec((HID, HID), lambda i: (0, 0)),         # W1' (BN folded)
                pl.BlockSpec((1, HID), lambda i: (0, 0)),           # b1'
                pl.BlockSpec((HID, HID), lambda i: (0, 0)),         # W2' (BN folded)
                pl.BlockSpec((1, HID), lambda i: (0, 0)),           # b2'
                pl.BlockSpec((HID, OUT_PAD), lambda i: (0, 0)),     # W3 padded
                pl.BlockSpec((1, OUT_PAD), lambda i: (0, 0)),       # b3 padded
            ],
            out_specs=pl.BlockSpec((tb, OUT_PAD), lambda i: (i, 0)),
        ),
        compiler_params=pltpu.CompilerParams(
            dimension_semantics=("parallel",),
        ),
    )(xp, wfc, bfc, w1f, b1f, w2f, b2f, w3p, b3p)

    return out_padded[:B, :OUT].astype(jnp.float32)


# ------------------------- host-side parameter construction -------------------------

def _linear_init(key, fan_in, fan_out):
    """PyTorch-style uniform(-1/sqrt(fan_in), 1/sqrt(fan_in)) init.
    Returns W (fan_in, fan_out) f32 and b (1, fan_out) f32."""
    kw, kb = jax.random.split(key)
    bound = 1.0 / jnp.sqrt(jnp.float32(fan_in))
    w = jax.random.uniform(kw, (fan_in, fan_out), jnp.float32, -bound, bound)
    b = jax.random.uniform(kb, (1, fan_out), jnp.float32, -bound, bound)
    return w, b


def _bn_stats(key, n, eps=1e-5):
    """Eval-mode BatchNorm1d(n) running stats (slightly perturbed so the fold is
    actually exercised). Returns per-feature (scale, shift)."""
    kg, kb_, km, kv = jax.random.split(key, 4)
    gamma = 1.0 + 0.1 * jax.random.normal(kg, (1, n), jnp.float32)
    beta = 0.1 * jax.random.normal(kb_, (1, n), jnp.float32)
    mean = 0.1 * jax.random.normal(km, (1, n), jnp.float32)
    var = 1.0 + 0.1 * jax.random.uniform(kv, (1, n), jnp.float32)
    scale = gamma / jnp.sqrt(var + eps)
    shift = beta - mean * scale
    return scale, shift


def make_raw_params(key):
    """Raw, unfolded f32 parameters (what the PyTorch module holds)."""
    k = jax.random.split(key, 6)
    wfc, bfc = _linear_init(k[0], FEAT, HID)
    w1, b1 = _linear_init(k[1], HID, HID)
    w2, b2 = _linear_init(k[2], HID, HID)
    w3, b3 = _linear_init(k[3], HID, OUT)
    s1, t1 = _bn_stats(k[4], HID)
    s2, t2 = _bn_stats(k[5], HID)
    return (wfc, bfc, w1, b1, s1, t1, w2, b2, s2, t2, w3, b3)


def fold_params(raw):
    """Host-side constant folding + quantization for the kernel:
       * BN scale/shift folded into W1/b1 and W2/b2,
       * weights cast to bf16 (biases stay f32; they add to the f32 accumulator),
       * W3/b3 zero-padded to 128 output columns (lane-dense store)."""
    wfc, bfc, w1, b1, s1, t1, w2, b2, s2, t2, w3, b3 = raw

    w1f = (w1 * s1).astype(jnp.bfloat16)           # column-scale: s1 is per output feature
    b1f = (b1 * s1 + t1).astype(jnp.float32)
    w2f = (w2 * s2).astype(jnp.bfloat16)
    b2f = (b2 * s2 + t2).astype(jnp.float32)

    w3p = jnp.zeros((HID, OUT_PAD), jnp.float32).at[:, :OUT].set(w3).astype(jnp.bfloat16)
    b3p = jnp.zeros((1, OUT_PAD), jnp.float32).at[:, :OUT].set(b3)

    return (wfc.astype(jnp.bfloat16), bfc.astype(jnp.float32),
            w1f, b1f, w2f, b2f, w3p, b3p)


# ------------------------------------ references ------------------------------------

def _reference_folded(x, folded):
    """Same math as the kernel (bf16 operands, f32 accumulation, bf16 output store)
    in plain JAX."""
    wfc, bfc, w1f, b1f, w2f, b2f, w3p, b3p = folded
    h = jnp.dot(x.astype(jnp.bfloat16), wfc, preferred_element_type=jnp.float32) + bfc
    h = jnp.maximum(jnp.dot(h.astype(jnp.bfloat16), w1f,
                            preferred_element_type=jnp.float32) + b1f, 0.0)
    h = jnp.maximum(jnp.dot(h.astype(jnp.bfloat16), w2f,
                            preferred_element_type=jnp.float32) + b2f, 0.0)
    out = jnp.dot(h.astype(jnp.bfloat16), w3p, preferred_element_type=jnp.float32) + b3p
    return out[:, :OUT].astype(jnp.bfloat16).astype(jnp.float32)


def _reference_f32(x, raw):
    """Full-precision, unfolded reference (module semantics in eval mode)."""
    wfc, bfc, w1, b1, s1, t1, w2, b2, s2, t2, w3, b3 = raw
    h = x @ wfc + bfc
    h = jnp.maximum((h @ w1 + b1) * s1 + t1, 0.0)
    h = jnp.maximum((h @ w2 + b2) * s2 + t2, 0.0)
    return h @ w3 + b3


if __name__ == "__main__":
    key = jax.random.PRNGKey(0)
    kx, kx2, kp = jax.random.split(key, 3)

    raw_params = make_raw_params(kp)
    params = fold_params(raw_params)

    # Small-batch path (B=8 -> single 16-row tile), i.e. `x` = base_model(x_image).
    B = 8
    x = jax.random.normal(kx, (B, FEAT), jnp.float32)
    out = jax.block_until_ready(custom_model_head(x, params))
    assert out.shape == (B, OUT), out.shape
    ref_b = _reference_folded(x, params)
    assert jnp.allclose(out, ref_b, atol=1e-2, rtol=1e-2), "mismatch vs bf16 JAX reference"
    ref_f = _reference_f32(x, raw_params)
    assert jnp.allclose(out, ref_f, atol=1e-1), "mismatch vs f32 module reference"

    # Multi-tile path (B=48 -> 2 grid steps of 32 rows, with row padding).
    B2 = 48
    x2 = jax.random.normal(kx2, (B2, FEAT), jnp.float32)
    out2 = jax.block_until_ready(custom_model_head(x2, params))
    assert out2.shape == (B2, OUT), out2.shape
    ref_b2 = _reference_folded(x2, params)
    assert jnp.allclose(out2, ref_b2, atol=1e-2, rtol=1e-2), "mismatch vs bf16 JAX reference (B=48)"
    ref_f2 = _reference_f32(x2, raw_params)
    assert jnp.allclose(out2, ref_f2, atol=1e-1), "mismatch vs f32 module reference (B=48)"

    print("KERNEL_OK")
</pallas_src>

<mosaic_0001>
module attributes {stable_mosaic.version = 11 : i64} {
  func.func @_head_kernel(%arg0: i32, %arg1: memref<16x1024xf32, #tpu.memory_space<vmem>>, %arg2: memref<1024x512xbf16, #tpu.memory_space<vmem>>, %arg3: memref<1x512xf32, #tpu.memory_space<vmem>>, %arg4: memref<512x512xbf16, #tpu.memory_space<vmem>>, %arg5: memref<1x512xf32, #tpu.memory_space<vmem>>, %arg6: memref<512x512xbf16, #tpu.memory_space<vmem>>, %arg7: memref<1x512xf32, #tpu.memory_space<vmem>>, %arg8: memref<512x128xbf16, #tpu.memory_space<vmem>>, %arg9: memref<1x128xf32, #tpu.memory_space<vmem>>, %arg10: memref<16x128xbf16, #tpu.memory_space<vmem>>) attributes {dimension_semantics = [#tpu.dimension_semantics<parallel>], iteration_bounds = array<i64: 1>, scalar_prefetch = 0 : i64, scratch_operands = 0 : i64, tpu.core_type = #tpu.core_type<tc>, window_params = [{transform_indices = @transform_0, window_bounds = array<i64: 16, 1024>}, {pipeline_mode = #tpu.pipeline_mode<synchronous>, transform_indices = @transform_1, window_bounds = array<i64: 1024, 512>}, {pipeline_mode = #tpu.pipeline_mode<synchronous>, transform_indices = @transform_2, window_bounds = array<i64: 1, 512>}, {pipeline_mode = #tpu.pipeline_mode<synchronous>, transform_indices = @transform_3, window_bounds = array<i64: 512, 512>}, {pipeline_mode = #tpu.pipeline_mode<synchronous>, transform_indices = @transform_4, window_bounds = array<i64: 1, 512>}, {pipeline_mode = #tpu.pipeline_mode<synchronous>, transform_indices = @transform_5, window_bounds = array<i64: 512, 512>}, {pipeline_mode = #tpu.pipeline_mode<synchronous>, transform_indices = @transform_6, window_bounds = array<i64: 1, 512>}, {pipeline_mode = #tpu.pipeline_mode<synchronous>, transform_indices = @transform_7, window_bounds = array<i64: 512, 128>}, {pipeline_mode = #tpu.pipeline_mode<synchronous>, transform_indices = @transform_8, window_bounds = array<i64: 1, 128>}, {transform_indices = @transform_9, window_bounds = array<i64: 16, 128>}]} {
    %c0 = arith.constant 0 : index
    %c0_0 = arith.constant 0 : index
    %0 = vector.load %arg1[%c0, %c0_0] : memref<16x1024xf32, #tpu.memory_space<vmem>>, vector<16x1024xf32>
    %1 = arith.truncf %0 : vector<16x1024xf32> to vector<16x1024xbf16>
    %c0_1 = arith.constant 0 : index
    %c0_2 = arith.constant 0 : index
    %2 = vector.load %arg2[%c0_1, %c0_2] : memref<1024x512xbf16, #tpu.memory_space<vmem>>, vector<1024x512xbf16>
    %cst = arith.constant dense<0.000000e+00> : vector<16x512xf32>
    %3 = tpu.matmul %1, %2, %cst {dimension_numbers = #tpu.dot_dimension_numbers<[1], [0], [0], [1], [0, 0, 1, 1], [], []>} : vector<16x1024xbf16>, vector<1024x512xbf16>, vector<16x512xf32> -> vector<16x512xf32>
    %c0_3 = arith.constant 0 : index
    %c0_4 = arith.constant 0 : index
    %4 = vector.load %arg3[%c0_3, %c0_4] : memref<1x512xf32, #tpu.memory_space<vmem>>, vector<1x512xf32>
    %5 = vector.broadcast %4 : vector<1x512xf32> to vector<16x512xf32>
    %6 = arith.addf %3, %5 : vector<16x512xf32>
    %7 = arith.truncf %6 : vector<16x512xf32> to vector<16x512xbf16>
    %c0_5 = arith.constant 0 : index
    %c0_6 = arith.constant 0 : index
    %8 = vector.load %arg4[%c0_5, %c0_6] : memref<512x512xbf16, #tpu.memory_space<vmem>>, vector<512x512xbf16>
    %cst_7 = arith.constant dense<0.000000e+00> : vector<16x512xf32>
    %9 = tpu.matmul %7, %8, %cst_7 {dimension_numbers = #tpu.dot_dimension_numbers<[1], [0], [0], [1], [0, 0, 1, 1], [], []>} : vector<16x512xbf16>, vector<512x512xbf16>, vector<16x512xf32> -> vector<16x512xf32>
    %c0_8 = arith.constant 0 : index
    %c0_9 = arith.constant 0 : index
    %10 = vector.load %arg5[%c0_8, %c0_9] : memref<1x512xf32, #tpu.memory_space<vmem>>, vector<1x512xf32>
    %11 = vector.broadcast %10 : vector<1x512xf32> to vector<16x512xf32>
    %12 = arith.addf %9, %11 : vector<16x512xf32>
    %cst_10 = arith.constant 0.000000e+00 : f32
    %13 = vector.broadcast %cst_10 : f32 to vector<16x512xf32>
    %14 = arith.maximumf %12, %13 : vector<16x512xf32>
    %15 = arith.truncf %14 : vector<16x512xf32> to vector<16x512xbf16>
    %c0_11 = arith.constant 0 : index
    %c0_12 = arith.constant 0 : index
    %16 = vector.load %arg6[%c0_11, %c0_12] : memref<512x512xbf16, #tpu.memory_space<vmem>>, vector<512x512xbf16>
    %cst_13 = arith.constant dense<0.000000e+00> : vector<16x512xf32>
    %17 = tpu.matmul %15, %16, %cst_13 {dimension_numbers = #tpu.dot_dimension_numbers<[1], [0], [0], [1], [0, 0, 1, 1], [], []>} : vector<16x512xbf16>, vector<512x512xbf16>, vector<16x512xf32> -> vector<16x512xf32>
    %c0_14 = arith.constant 0 : index
    %c0_15 = arith.constant 0 : index
    %18 = vector.load %arg7[%c0_14, %c0_15] : memref<1x512xf32, #tpu.memory_space<vmem>>, vector<1x512xf32>
    %19 = vector.broadcast %18 : vector<1x512xf32> to vector<16x512xf32>
    %20 = arith.addf %17, %19 : vector<16x512xf32>
    %cst_16 = arith.constant 0.000000e+00 : f32
    %21 = vector.broadcast %cst_16 : f32 to vector<16x512xf32>
    %22 = arith.maximumf %20, %21 : vector<16x512xf32>
    %23 = arith.truncf %22 : vector<16x512xf32> to vector<16x512xbf16>
    %c0_17 = arith.constant 0 : index
    %c0_18 = arith.constant 0 : index
    %24 = vector.load %arg8[%c0_17, %c0_18] : memref<512x128xbf16, #tpu.memory_space<vmem>>, vector<512x128xbf16>
    %cst_19 = arith.constant dense<0.000000e+00> : vector<16x128xf32>
    %25 = tpu.matmul %23, %24, %cst_19 {dimension_numbers = #tpu.dot_dimension_numbers<[1], [0], [0], [1], [0, 0, 1, 1], [], []>} : vector<16x512xbf16>, vector<512x128xbf16>, vector<16x128xf32> -> vector<16x128xf32>
    %c0_20 = arith.constant 0 : index
    %c0_21 = arith.constant 0 : index
    %26 = vector.load %arg9[%c0_20, %c0_21] : memref<1x128xf32, #tpu.memory_space<vmem>>, vector<1x128xf32>
    %27 = vector.broadcast %26 : vector<1x128xf32> to vector<16x128xf32>
    %28 = arith.addf %25, %27 : vector<16x128xf32>
    %29 = arith.truncf %28 : vector<16x128xf32> to vector<16x128xbf16>
    %c0_22 = arith.constant 0 : index
    %c0_23 = arith.constant 0 : index
    %30 = vector.load %arg10[%c0_22, %c0_23] : memref<16x128xbf16, #tpu.memory_space<vmem>>, vector<16x128xbf16>
    tpu.vector_store %arg10[%c0_22, %c0_23], %29 {strides = array<i32>} : memref<16x128xbf16, #tpu.memory_space<vmem>>, vector<16x128xbf16>,
    return
  }
  func.func @transform_0(%arg0: i32) -> (i32, i32) {
    %c0_i32 = arith.constant 0 : i32
    %c0_i32_0 = arith.constant 0 : i32
    return %arg0, %c0_i32 : i32, i32
  }
  func.func @transform_1(%arg0: i32) -> (i32, i32) {
    %c0_i32 = arith.constant 0 : i32
    %c0_i32_0 = arith.constant 0 : i32
    %c0_i32_1 = arith.constant 0 : i32
    return %c0_i32, %c0_i32_0 : i32, i32
  }
  func.func @transform_2(%arg0: i32) -> (i32, i32) {
    %c0_i32 = arith.constant 0 : i32
    %c0_i32_0 = arith.constant 0 : i32
    %c0_i32_1 = arith.constant 0 : i32
    return %c0_i32, %c0_i32_0 : i32, i32
  }
  func.func @transform_3(%arg0: i32) -> (i32, i32) {
    %c0_i32 = arith.constant 0 : i32
    %c0_i32_0 = arith.constant 0 : i32
    %c0_i32_1 = arith.constant 0 : i32
    return %c0_i32, %c0_i32_0 : i32, i32
  }
  func.func @transform_4(%arg0: i32) -> (i32, i32) {
    %c0_i32 = arith.constant 0 : i32
    %c0_i32_0 = arith.constant 0 : i32
    %c0_i32_1 = arith.constant 0 : i32
    return %c0_i32, %c0_i32_0 : i32, i32
  }
  func.func @transform_5(%arg0: i32) -> (i32, i32) {
    %c0_i32 = arith.constant 0 : i32
    %c0_i32_0 = arith.constant 0 : i32
    %c0_i32_1 = arith.constant 0 : i32
    return %c0_i32, %c0_i32_0 : i32, i32
  }
  func.func @transform_6(%arg0: i32) -> (i32, i32) {
    %c0_i32 = arith.constant 0 : i32
    %c0_i32_0 = arith.constant 0 : i32
    %c0_i32_1 = arith.constant 0 : i32
    return %c0_i32, %c0_i32_0 : i32, i32
  }
  func.func @transform_7(%arg0: i32) -> (i32, i32) {
    %c0_i32 = arith.constant 0 : i32
    %c0_i32_0 = arith.constant 0 : i32
    %c0_i32_1 = arith.constant 0 : i32
    return %c0_i32, %c0_i32_0 : i32, i32
  }
  func.func @transform_8(%arg0: i32) -> (i32, i32) {
    %c0_i32 = arith.constant 0 : i32
    %c0_i32_0 = arith.constant 0 : i32
    %c0_i32_1 = arith.constant 0 : i32
    return %c0_i32, %c0_i32_0 : i32, i32
  }
  func.func @transform_9(%arg0: i32) -> (i32, i32) {
    %c0_i32 = arith.constant 0 : i32
    %c0_i32_0 = arith.constant 0 : i32
    return %arg0, %c0_i32 : i32, i32
  }
}

</mosaic_0001>

<llo_original>
// kernel: custom_model_head.1
$region0: #{custom_model_head.1}
  #allocation0 [shape = 'u32[]', space=smem, size = 0x4, offset = 0x4, fixed_abs, tag = 'smem constant byte address 0x4 - core index']
  #allocation1 [shape = 'u32[144,128]{1,0:T(1,128)}', space=vmem, size = 0x12000, scoped, tag = 'internal scratch']
  %s0 = inlined_call_operand.vmem [shape: f32[16,1024], index: 0, kind: input, shape index: {}]
  %s1 = inlined_call_operand.hbm [shape: bf16[1024,512], index: 1, kind: input, shape index: {}]
  %s2 = inlined_call_operand.vmem [shape: f32[1,512], index: 2, kind: input, shape index: {}]
  %s3 = inlined_call_operand.hbm [shape: bf16[512,512], index: 3, kind: input, shape index: {}]
  %s4 = inlined_call_operand.vmem [shape: f32[1,512], index: 4, kind: input, shape index: {}]
  %s5 = inlined_call_operand.hbm [shape: bf16[512,512], index: 5, kind: input, shape index: {}]
  %s6 = inlined_call_operand.vmem [shape: f32[1,512], index: 6, kind: input, shape index: {}]
  %s7 = inlined_call_operand.hbm [shape: bf16[512,128], index: 7, kind: input, shape index: {}]
  %s8 = inlined_call_operand.vmem [shape: f32[1,128], index: 8, kind: input, shape index: {}]
  %s9 = inlined_call_operand.vmem [shape: bf16[16,128], index: 9, kind: output, shape index: {}]
  %s10 = sld [smem:[#allocation0]]
  $region62: #{custom_model_head.1} parent=0
    _
  %s12 = ssub.s32 1, %s10
  %s13 = scalar_select 0, %s12, %s10
  $region1: #{custom_model_head.1} parent=0
    #allocation2 [shape = 'u8[1048576]{0}', space=vmem, size = 0x100000, scoped, tag = 'input window, operand 1, single buffered']
    #allocation3 [shape = 's32[1]{0}', space=sflag, size = 0x4, scoped, tag = 'scoped memory for custom_model_head.1']
    #allocation4 [shape = 'u8[524288]{0}', space=vmem, size = 0x80000, scoped, tag = 'input window, operand 3, single buffered']
    #allocation5 [shape = 's32[1]{0}', space=sflag, size = 0x4, scoped, tag = 'scoped memory for custom_model_head.1']
    #allocation6 [shape = 'u8[524288]{0}', space=vmem, size = 0x80000, scoped, tag = 'input window, operand 5, single buffered']
    #allocation7 [shape = 'u8[131072]{0}', space=vmem, size = 0x20000, scoped, tag = 'input window, operand 7, single buffered']
    #allocation8 [shape = 's32[1]{0}', space=sflag, size = 0x4, scoped, tag = 'scoped memory for custom_model_head.1']
    %14 = vsyncpa [#allocation3], 0
    %15 = vsyncpa [#allocation5], 0
    %16 = vsyncpa [#allocation8], 0
    // Predicated region
    $region2: #{custom_model_head.1} parent=1 // pred_check
      _
    $region3: #{custom_model_head.1} parent=1 // pred_check_branch
      %18 = sbr.rel (0) target = $region5
    $region4: #{custom_model_head.1} parent=1 // pred_region
      _
    $region5: #{custom_model_head.1} parent=1 // pred_fallthru
      _
    // Predicated region
    $region6: #{custom_model_head.1} parent=1 // pred_check
      _
    $region7: #{custom_model_head.1} parent=1 // pred_check_branch
      %20 = sbr.rel (0) target = $region9
    $region8: #{custom_model_head.1} parent=1 // pred_region
      %s22 = ssub.s32 32768, 32768
      %23 = vsyncadd [#allocation3], %s22
      %s24 = sshll.u32 [#allocation2], 4
      %s25 = int_to_ptr.vmem [resolvable:$true] %s24
      %30 = dma.hbm_to_vmem [thread:$0]  %s1, 32768, %s25, [#allocation3], 256, 256, 16
    $region9: #{custom_model_head.1} parent=1 // pred_fallthru
      _
    // Predicated region
    $region10: #{custom_model_head.1} parent=1 // pred_check
      _
    $region11: #{custom_model_head.1} parent=1 // pred_check_branch
      %32 = sbr.rel (0) target = $region13
    $region12: #{custom_model_head.1} parent=1 // pred_region
      _
    $region13: #{custom_model_head.1} parent=1 // pred_fallthru
      _
    // Predicated region
    $region14: #{custom_model_head.1} parent=1 // pred_check
      _
    $region15: #{custom_model_head.1} parent=1 // pred_check_branch
      %34 = sbr.rel (0) target = $region17
    $region16: #{custom_model_head.1} parent=1 // pred_region
      %s36 = ssub.s32 16384, 16384
      %37 = vsyncadd [#allocation5], %s36
      %s38 = sshll.u32 [#allocation4], 4
      %s39 = int_to_ptr.vmem [resolvable:$true] %s38
      %44 = dma.hbm_to_vmem [thread:$0]  %s3, 16384, %s39, [#allocation5], 256, 256, 16
    $region17: #{custom_model_head.1} parent=1 // pred_fallthru
      _
    // Predicated region
    $region18: #{custom_model_head.1} parent=1 // pred_check
      _
    $region19: #{custom_model_head.1} parent=1 // pred_check_branch
      %46 = sbr.rel (0) target = $region21
    $region20: #{custom_model_head.1} parent=1 // pred_region
      _
    $region21: #{custom_model_head.1} parent=1 // pred_fallthru
      _
    // Predicated region
    $region22: #{custom_model_head.1} parent=1 // pred_check
      _
    $region23: #{custom_model_head.1} parent=1 // pred_check_branch
      %48 = sbr.rel (0) target = $region25
    $region24: #{custom_model_head.1} parent=1 // pred_region
      %s50 = ssub.s32 16384, 16384
      %51 = vsyncadd [#allocation5], %s50
      %s52 = sshll.u32 [#allocation6], 4
      %s53 = int_to_ptr.vmem [resolvable:$true] %s52
      %58 = dma.hbm_to_vmem [thread:$0]  %s5, 16384, %s53, [#allocation5], 256, 256, 16
    $region25: #{custom_model_head.1} parent=1 // pred_fallthru
      _
    // Predicated region
    $region26: #{custom_model_head.1} parent=1 // pred_check
      _
    $region27: #{custom_model_head.1} parent=1 // pred_check_branch
      %60 = sbr.rel (0) target = $region29
    $region28: #{custom_model_head.1} parent=1 // pred_region
      _
    $region29: #{custom_model_head.1} parent=1 // pred_fallthru
      _
    // Predicated region
    $region30: #{custom_model_head.1} parent=1 // pred_check
      _
    $region31: #{custom_model_head.1} parent=1 // pred_check_branch
      %62 = sbr.rel (0) target = $region33
    $region32: #{custom_model_head.1} parent=1 // pred_region
      %s64 = ssub.s32 4096, 4096
      %65 = vsyncadd [#allocation8], %s64
      %s66 = sshll.u32 [#allocation7], 4
      %s67 = int_to_ptr.vmem [resolvable:$true] %s66
      %72 = dma.hbm_to_vmem [thread:$0]  %s7, 4096, %s67, [#allocation8], 64, 64, 4
    $region33: #{custom_model_head.1} parent=1 // pred_fallthru
      _
    // Predicated region
    $region34: #{custom_model_head.1} parent=1 // pred_check
      _
    $region35: #{custom_model_head.1} parent=1 // pred_check_branch
      %74 = sbr.rel (0) target = $region37
    $region36: #{custom_model_head.1} parent=1 // pred_region
      _
    $region37: #{custom_model_head.1} parent=1 // pred_fallthru
      _
    // Predicated region
    $region38: #{custom_model_head.1} parent=1 // pred_check
      _
    $region39: #{custom_model_head.1} parent=1 // pred_check_branch
      %76 = sbr.rel (0) target = $region41
    $region40: #{custom_model_head.1} parent=1 // pred_region
      %77 = dma.done [#allocation3], 32768
    $region41: #{custom_model_head.1} parent=1 // pred_fallthru
      _
    // Predicated region
    $region42: #{custom_model_head.1} parent=1 // pred_check
      _
    $region43: #{custom_model_head.1} parent=1 // pred_check_branch
      %79 = sbr.rel (0) target = $region45
    $region44: #{custom_model_head.1} parent=1 // pred_region
      %80 = dma.done [#allocation5], 16384
    $region45: #{custom_model_head.1} parent=1 // pred_fallthru
      _
    // Predicated region
    $region46: #{custom_model_head.1} parent=1 // pred_check
      _
    $region47: #{custom_model_head.1} parent=1 // pred_check_branch
      %82 = sbr.rel (0) target = $region49
    $region48: #{custom_model_head.1} parent=1 // pred_region
      %83 = dma.done [#allocation5], 16384
    $region49: #{custom_model_head.1} parent=1 // pred_fallthru
      _
    // Predicated region
    $region50: #{custom_model_head.1} parent=1 // pred_check
      _
    $region51: #{custom_model_head.1} parent=1 // pred_check_branch
      %85 = sbr.rel (0) target = $region53
    $region52: #{custom_model_head.1} parent=1 // pred_region
      %86 = dma.done [#allocation8], 4096
    $region53: #{custom_model_head.1} parent=1 // pred_fallthru
      _
    %v88 = vld [vmem:[%s0] sm:$0xff]
    %v89 = vld [vmem:[%s0 + $0x8] sm:$0xff]
    %v90 = vld [vmem:[%s0 + $0x10] sm:$0xff]
    %v91 = vld [vmem:[%s0 + $0x18] sm:$0xff]
    %v92 = vld [vmem:[%s0 + $0x20] sm:$0xff]
    %v93 = vld [vmem:[%s0 + $0x28] sm:$0xff]
    %v94 = vld [vmem:[%s0 + $0x30] sm:$0xff]
    %v95 = vld [vmem:[%s0 + $0x38] sm:$0xff]
    %v96 = vld [vmem:[%s0 + $0x40] sm:$0xff]
    %v97 = vld [vmem:[%s0 + $0x48] sm:$0xff]
    %v98 = vld [vmem:[%s0 + $0x50] sm:$0xff]
    %v99 = vld [vmem:[%s0 + $0x58] sm:$0xff]
    %v100 = vld [vmem:[%s0 + $0x60] sm:$0xff]
    %v101 = vld [vmem:[%s0 + $0x68] sm:$0xff]
    %v102 = vld [vmem:[%s0 + $0x70] sm:$0xff]
    %v103 = vld [vmem:[%s0 + $0x78] sm:$0xff]
    %v104 = vpack.c.bf16 %v96, %v88
    %v105 = vpack.c.bf16 %v97, %v89
    %v106 = vpack.c.bf16 %v98, %v90
    %v107 = vpack.c.bf16 %v99, %v91
    %v108 = vpack.c.bf16 %v100, %v92
    %v109 = vpack.c.bf16 %v101, %v93
    %v110 = vpack.c.bf16 %v102, %v94
    %v111 = vpack.c.bf16 %v103, %v95
    %v112 = vld [vmem:[#allocation2] sm:$0xff]
    %v113 = vld [vmem:[#allocation2 + $0x8] sm:$0xff]
    %v114 = vld [vmem:[#allocation2 + $0x10] sm:$0xff]
    %v115 = vld [vmem:[#allocation2 + $0x18] sm:$0xff]
    %v116 = vld [vmem:[#allocation2 + $0x20] sm:$0xff]
    %v117 = vld [vmem:[#allocation2 + $0x28] sm:$0xff]
    %v118 = vld [vmem:[#allocation2 + $0x30] sm:$0xff]
    %v119 = vld [vmem:[#allocation2 + $0x38] sm:$0xff]
    %v120 = vld [vmem:[#allocation2 + $0x40] sm:$0xff]
    %v121 = vld [vmem:[#allocation2 + $0x48] sm:$0xff]
    %v122 = vld [vmem:[#allocation2 + $0x50] sm:$0xff]
    %v123 = vld [vmem:[#allocation2 + $0x58] sm:$0xff]
    %v124 = vld [vmem:[#allocation2 + $0x60] sm:$0xff]
    %v125 = vld [vmem:[#allocation2 + $0x68] sm:$0xff]
    %v126 = vld [vmem:[#allocation2 + $0x70] sm:$0xff]
    %v127 = vld [vmem:[#allocation2 + $0x78] sm:$0xff]
    %v128 = vld [vmem:[#allocation2 + $0x80] sm:$0xff]
    %v129 = vld [vmem:[#allocation2 + $0x88] sm:$0xff]
    %v130 = vld [vmem:[#allocation2 + $0x90] sm:$0xff]
    %v131 = vld [vmem:[#allocation2 + $0x98] sm:$0xff]
    %v132 = vld [vmem:[#allocation2 + $0xa0] sm:$0xff]
    %v133 = vld [vmem:[#allocation2 + $0xa8] sm:$0xff]
    %v134 = vld [vmem:[#allocation2 + $0xb0] sm:$0xff]
    %v135 = vld [vmem:[#allocation2 + $0xb8] sm:$0xff]
    %v136 = vld [vmem:[#allocation2 + $0xc0] sm:$0xff]
    %v137 = vld [vmem:[#allocation2 + $0xc8] sm:$0xff]
    %v138 = vld [vmem:[#allocation2 + $0xd0] sm:$0xff]
    %v139 = vld [vmem:[#allocation2 + $0xd8] sm:$0xff]
    %v140 = vld [vmem:[#allocation2 + $0xe0] sm:$0xff]
    %v141 = vld [vmem:[#allocation2 + $0xe8] sm:$0xff]
    %v142 = vld [vmem:[#allocation2 + $0xf0] sm:$0xff]
    %v143 = vld [vmem:[#allocation2 + $0xf8] sm:$0xff]
    %v144 = vld [vmem:[#allocation2 + $0x100] sm:$0xff]
    %v145 = vld [vmem:[#allocation2 + $0x108] sm:$0xff]
    %v146 = vld [vmem:[#allocation2 + $0x110] sm:$0xff]
    %v147 = vld [vmem:[#allocation2 + $0x118] sm:$0xff]
    %v148 = vld [vmem:[#allocation2 + $0x120] sm:$0xff]
    %v149 = vld [vmem:[#allocation2 + $0x128] sm:$0xff]
    %v150 = vld [vmem:[#allocation2 + $0x130] sm:$0xff]
    %v151 = vld [vmem:[#allocation2 + $0x138] sm:$0xff]
    %v152 = vld [vmem:[#allocation2 + $0x140] sm:$0xff]
    %v153 = vld [vmem:[#allocation2 + $0x148] sm:$0xff]
    %v154 = vld [vmem:[#allocation2 + $0x150] sm:$0xff]
    %v155 = vld [vmem:[#allocation2 + $0x158] sm:$0xff]
    %v156 = vld [vmem:[#allocation2 + $0x160] sm:$0xff]
    %v157 = vld [vmem:[#allocation2 + $0x168] sm:$0xff]
    %v158 = vld [vmem:[#allocation2 + $0x170] sm:$0xff]
    %v159 = vld [vmem:[#allocation2 + $0x178] sm:$0xff]
    %v160 = vld [vmem:[#allocation2 + $0x180] sm:$0xff]
    %v161 = vld [vmem:[#allocation2 + $0x188] sm:$0xff]
    %v162 = vld [vmem:[#allocation2 + $0x190] sm:$0xff]
    %v163 = vld [vmem:[#allocation2 + $0x198] sm:$0xff]
    %v164 = vld [vmem:[#allocation2 + $0x1a0] sm:$0xff]
    %v165 = vld [vmem:[#allocation2 + $0x1a8] sm:$0xff]
    %v166 = vld [vmem:[#allocation2 + $0x1b0] sm:$0xff]
    %v167 = vld [vmem:[#allocation2 + $0x1b8] sm:$0xff]
    %v168 = vld [vmem:[#allocation2 + $0x1c0] sm:$0xff]
    %v169 = vld [vmem:[#allocation2 + $0x1c8] sm:$0xff]
    %v170 = vld [vmem:[#allocation2 + $0x1d0] sm:$0xff]
    %v171 = vld [vmem:[#allocation2 + $0x1d8] sm:$0xff]
    %v172 = vld [vmem:[#allocation2 + $0x1e0] sm:$0xff]
    %v173 = vld [vmem:[#allocation2 + $0x1e8] sm:$0xff]
    %v174 = vld [vmem:[#allocation2 + $0x1f0] sm:$0xff]
    %v175 = vld [vmem:[#allocation2 + $0x1f8] sm:$0xff]
    %v176 = vld [vmem:[#allocation2 + $0x200] sm:$0xff]
    %v177 = vld [vmem:[#allocation2 + $0x208] sm:$0xff]
    %v178 = vld [vmem:[#allocation2 + $0x210] sm:$0xff]
    %v179 = vld [vmem:[#allocation2 + $0x218] sm:$0xff]
    %v180 = vld [vmem:[#allocation2 + $0x220] sm:$0xff]
    %v181 = vld [vmem:[#allocation2 + $0x228] sm:$0xff]
    %v182 = vld [vmem:[#allocation2 + $0x230] sm:$0xff]
    %v183 = vld [vmem:[#allocation2 + $0x238] sm:$0xff]
    %v184 = vld [vmem:[#allocation2 + $0x240] sm:$0xff]
    %v185 = vld [vmem:[#allocation2 + $0x248] sm:$0xff]
    %v186 = vld [vmem:[#allocation2 + $0x250] sm:$0xff]
    %v187 = vld [vmem:[#allocation2 + $0x258] sm:$0xff]
    %v188 = vld [vmem:[#allocation2 + $0x260] sm:$0xff]
    %v189 = vld [vmem:[#allocation2 + $0x268] sm:$0xff]
    %v190 = vld [vmem:[#allocation2 + $0x270] sm:$0xff]
    %v191 = vld [vmem:[#allocation2 + $0x278] sm:$0xff]
    %v192 = vld [vmem:[#allocation2 + $0x280] sm:$0xff]
    %v193 = vld [vmem:[#allocation2 + $0x288] sm:$0xff]
    %v194 = vld [vmem:[#allocation2 + $0x290] sm:$0xff]
    %v195 = vld [vmem:[#allocation2 + $0x298] sm:$0xff]
    %v196 = vld [vmem:[#allocation2 + $0x2a0] sm:$0xff]
    %v197 = vld [vmem:[#allocation2 + $0x2a8] sm:$0xff]
    %v198 = vld [vmem:[#allocation2 + $0x2b0] sm:$0xff]
    %v199 = vld [vmem:[#allocation2 + $0x2b8] sm:$0xff]
    %v200 = vld [vmem:[#allocation2 + $0x2c0] sm:$0xff]
    %v201 = vld [vmem:[#allocation2 + $0x2c8] sm:$0xff]
    %v202 = vld [vmem:[#allocation2 + $0x2d0] sm:$0xff]
    %v203 = vld [vmem:[#allocation2 + $0x2d8] sm:$0xff]
    %v204 = vld [vmem:[#allocation2 + $0x2e0] sm:$0xff]
    %v205 = vld [vmem:[#allocation2 + $0x2e8] sm:$0xff]
    %v206 = vld [vmem:[#allocation2 + $0x2f0] sm:$0xff]
    %v207 = vld [vmem:[#allocation2 + $0x2f8] sm:$0xff]
    %v208 = vld [vmem:[#allocation2 + $0x300] sm:$0xff]
    %v209 = vld [vmem:[#allocation2 + $0x308] sm:$0xff]
    %v210 = vld [vmem:[#allocation2 + $0x310] sm:$0xff]
    %v211 = vld [vmem:[#allocation2 + $0x318] sm:$0xff]
    %v212 = vld [vmem:[#allocation2 + $0x320] sm:$0xff]
    %v213 = vld [vmem:[#allocation2 + $0x328] sm:$0xff]
    %v214 = vld [vmem:[#allocation2 + $0x330] sm:$0xff]
    %v215 = vld [vmem:[#allocation2 + $0x338] sm:$0xff]
    %v216 = vld [vmem:[#allocation2 + $0x340] sm:$0xff]
    %v217 = vld [vmem:[#allocation2 + $0x348] sm:$0xff]
    %v218 = vld [vmem:[#allocation2 + $0x350] sm:$0xff]
    %v219 = vld [vmem:[#allocation2 + $0x358] sm:$0xff]
    %v220 = vld [vmem:[#allocation2 + $0x360] sm:$0xff]
    %v221 = vld [vmem:[#allocation2 + $0x368] sm:$0xff]
    %v222 = vld [vmem:[#allocation2 + $0x370] sm:$0xff]
    %v223 = vld [vmem:[#allocation2 + $0x378] sm:$0xff]
    %v224 = vld [vmem:[#allocation2 + $0x380] sm:$0xff]
    %v225 = vld [vmem:[#allocation2 + $0x388] sm:$0xff]
    %v226 = vld [vmem:[#allocation2 + $0x390] sm:$0xff]
    %v227 = vld [vmem:[#allocation2 + $0x398] sm:$0xff]
    %v228 = vld [vmem:[#allocation2 + $0x3a0] sm:$0xff]
    %v229 = vld [vmem:[#allocation2 + $0x3a8] sm:$0xff]
    %v230 = vld [vmem:[#allocation2 + $0x3b0] sm:$0xff]
    %v231 = vld [vmem:[#allocation2 + $0x3b8] sm:$0xff]
    %v232 = vld [vmem:[#allocation2 + $0x3c0] sm:$0xff]
    %v233 = vld [vmem:[#allocation2 + $0x3c8] sm:$0xff]
    %v234 = vld [vmem:[#allocation2 + $0x3d0] sm:$0xff]
    %v235 = vld [vmem:[#allocation2 + $0x3d8] sm:$0xff]
    %v236 = vld [vmem:[#allocation2 + $0x3e0] sm:$0xff]
    %v237 = vld [vmem:[#allocation2 + $0x3e8] sm:$0xff]
    %v238 = vld [vmem:[#allocation2 + $0x3f0] sm:$0xff]
    %v239 = vld [vmem:[#allocation2 + $0x3f8] sm:$0xff]
    %v240 = vld [vmem:[#allocation2 + $0x400] sm:$0xff]
    %v241 = vld [vmem:[#allocation2 + $0x408] sm:$0xff]
    %v242 = vld [vmem:[#allocation2 + $0x410] sm:$0xff]
    %v243 = vld [vmem:[#allocation2 + $0x418] sm:$0xff]
    %v244 = vld [vmem:[#allocation2 + $0x420] sm:$0xff]
    %v245 = vld [vmem:[#allocation2 + $0x428] sm:$0xff]
    %v246 = vld [vmem:[#allocation2 + $0x430] sm:$0xff]
    %v247 = vld [vmem:[#allocation2 + $0x438] sm:$0xff]
    %v248 = vld [vmem:[#allocation2 + $0x440] sm:$0xff]
    %v249 = vld [vmem:[#allocation2 + $0x448] sm:$0xff]
    %v250 = vld [vmem:[#allocation2 + $0x450] sm:$0xff]
    %v251 = vld [vmem:[#allocation2 + $0x458] sm:$0xff]
    %v252 = vld [vmem:[#allocation2 + $0x460] sm:$0xff]
    %v253 = vld [vmem:[#allocation2 + $0x468] sm:$0xff]
    %v254 = vld [vmem:[#allocation2 + $0x470] sm:$0xff]
    %v255 = vld [vmem:[#allocation2 + $0x478] sm:$0xff]
    %v256 = vld [vmem:[#allocation2 + $0x480] sm:$0xff]
    %v257 = vld [vmem:[#allocation2 + $0x488] sm:$0xff]
    %v258 = vld [vmem:[#allocation2 + $0x490] sm:$0xff]
    %v259 = vld [vmem:[#allocation2 + $0x498] sm:$0xff]
    %v260 = vld [vmem:[#allocation2 + $0x4a0] sm:$0xff]
    %v261 = vld [vmem:[#allocation2 + $0x4a8] sm:$0xff]
    %v262 = vld [vmem:[#allocation2 + $0x4b0] sm:$0xff]
    %v263 = vld [vmem:[#allocation2 + $0x4b8] sm:$0xff]
    %v264 = vld [vmem:[#allocation2 + $0x4c0] sm:$0xff]
    %v265 = vld [vmem:[#allocation2 + $0x4c8] sm:$0xff]
    %v266 = vld [vmem:[#allocation2 + $0x4d0] sm:$0xff]
    %v267 = vld [vmem:[#allocation2 + $0x4d8] sm:$0xff]
    %v268 = vld [vmem:[#allocation2 + $0x4e0] sm:$0xff]
    %v269 = vld [vmem:[#allocation2 + $0x4e8] sm:$0xff]
    %v270 = vld [vmem:[#allocation2 + $0x4f0] sm:$0xff]
    %v271 = vld [vmem:[#allocation2 + $0x4f8] sm:$0xff]
    %v272 = vld [vmem:[#allocation2 + $0x500] sm:$0xff]
    %v273 = vld [vmem:[#allocation2 + $0x508] sm:$0xff]
    %v274 = vld [vmem:[#allocation2 + $0x510] sm:$0xff]
    %v275 = vld [vmem:[#allocation2 + $0x518] sm:$0xff]
    %v276 = vld [vmem:[#allocation2 + $0x520] sm:$0xff]
    %v277 = vld [vmem:[#allocation2 + $0x528] sm:$0xff]
    %v278 = vld [vmem:[#allocation2 + $0x530] sm:$0xff]
    %v279 = vld [vmem:[#allocation2 + $0x538] sm:$0xff]
    %v280 = vld [vmem:[#allocation2 + $0x540] sm:$0xff]
    %v281 = vld [vmem:[#allocation2 + $0x548] sm:$0xff]
    %v282 = vld [vmem:[#allocation2 + $0x550] sm:$0xff]
    %v283 = vld [vmem:[#allocation2 + $0x558] sm:$0xff]
    %v284 = vld [vmem:[#allocation2 + $0x560] sm:$0xff]
    %v285 = vld [vmem:[#allocation2 + $0x568] sm:$0xff]
    %v286 = vld [vmem:[#allocation2 + $0x570] sm:$0xff]
    %v287 = vld [vmem:[#allocation2 + $0x578] sm:$0xff]
    %v288 = vld [vmem:[#allocation2 + $0x580] sm:$0xff]
    %v289 = vld [vmem:[#allocation2 + $0x588] sm:$0xff]
    %v290 = vld [vmem:[#allocation2 + $0x590] sm:$0xff]
    %v291 = vld [vmem:[#allocation2 + $0x598] sm:$0xff]
    %v292 = vld [vmem:[#allocation2 + $0x5a0] sm:$0xff]
    %v293 = vld [vmem:[#allocation2 + $0x5a8] sm:$0xff]
    %v294 = vld [vmem:[#allocation2 + $0x5b0] sm:$0xff]
    %v295 = vld [vmem:[#allocation2 + $0x5b8] sm:$0xff]
    %v296 = vld [vmem:[#allocation2 + $0x5c0] sm:$0xff]
    %v297 = vld [vmem:[#allocation2 + $0x5c8] sm:$0xff]
    %v298 = vld [vmem:[#allocation2 + $0x5d0] sm:$0xff]
    %v299 = vld [vmem:[#allocation2 + $0x5d8] sm:$0xff]
    %v300 = vld [vmem:[#allocation2 + $0x5e0] sm:$0xff]
    %v301 = vld [vmem:[#allocation2 + $0x5e8] sm:$0xff]
    %v302 = vld [vmem:[#allocation2 + $0x5f0] sm:$0xff]
    %v303 = vld [vmem:[#allocation2 + $0x5f8] sm:$0xff]
    %v304 = vld [vmem:[#allocation2 + $0x600] sm:$0xff]
    %v305 = vld [vmem:[#allocation2 + $0x608] sm:$0xff]
    %v306 = vld [vmem:[#allocation2 + $0x610] sm:$0xff]
    %v307 = vld [vmem:[#allocation2 + $0x618] sm:$0xff]
    %v308 = vld [vmem:[#allocation2 + $0x620] sm:$0xff]
    %v309 = vld [vmem:[#allocation2 + $0x628] sm:$0xff]
    %v310 = vld [vmem:[#allocation2 + $0x630] sm:$0xff]
    %v311 = vld [vmem:[#allocation2 + $0x638] sm:$0xff]
    %v312 = vld [vmem:[#allocation2 + $0x640] sm:$0xff]
    %v313 = vld [vmem:[#allocation2 + $0x648] sm:$0xff]
    %v314 = vld [vmem:[#allocation2 + $0x650] sm:$0xff]
    %v315 = vld [vmem:[#allocation2 + $0x658] sm:$0xff]
    %v316 = vld [vmem:[#allocation2 + $0x660] sm:$0xff]
    %v317 = vld [vmem:[#allocation2 + $0x668] sm:$0xff]
    %v318 = vld [vmem:[#allocation2 + $0x670] sm:$0xff]
    %v319 = vld [vmem:[#allocation2 + $0x678] sm:$0xff]
    %v320 = vld [vmem:[#allocation2 + $0x680] sm:$0xff]
    %v321 = vld [vmem:[#allocation2 + $0x688] sm:$0xff]
    %v322 = vld [vmem:[#allocation2 + $0x690] sm:$0xff]
    %v323 = vld [vmem:[#allocation2 + $0x698] sm:$0xff]
    %v324 = vld [vmem:[#allocation2 + $0x6a0] sm:$0xff]
    %v325 = vld [vmem:[#allocation2 + $0x6a8] sm:$0xff]
    %v326 = vld [vmem:[#allocation2 + $0x6b0] sm:$0xff]
    %v327 = vld [vmem:[#allocation2 + $0x6b8] sm:$0xff]
    %v328 = vld [vmem:[#allocation2 + $0x6c0] sm:$0xff]
    %v329 = vld [vmem:[#allocation2 + $0x6c8] sm:$0xff]
    %v330 = vld [vmem:[#allocation2 + $0x6d0] sm:$0xff]
    %v331 = vld [vmem:[#allocation2 + $0x6d8] sm:$0xff]
    %v332 = vld [vmem:[#allocation2 + $0x6e0] sm:$0xff]
    %v333 = vld [vmem:[#allocation2 + $0x6e8] sm:$0xff]
    %v334 = vld [vmem:[#allocation2 + $0x6f0] sm:$0xff]
    %v335 = vld [vmem:[#allocation2 + $0x6f8] sm:$0xff]
    %v336 = vld [vmem:[#allocation2 + $0x700] sm:$0xff]
    %v337 = vld [vmem:[#allocation2 + $0x708] sm:$0xff]
    %v338 = vld [vmem:[#allocation2 + $0x710] sm:$0xff]
    %v339 = vld [vmem:[#allocation2 + $0x718] sm:$0xff]
    %v340 = vld [vmem:[#allocation2 + $0x720] sm:$0xff]
    %v341 = vld [vmem:[#allocation2 + $0x728] sm:$0xff]
    %v342 = vld [vmem:[#allocation2 + $0x730] sm:$0xff]
    %v343 = vld [vmem:[#allocation2 + $0x738] sm:$0xff]
    %v344 = vld [vmem:[#allocation2 + $0x740] sm:$0xff]
    %v345 = vld [vmem:[#allocation2 + $0x748] sm:$0xff]
    %v346 = vld [vmem:[#allocation2 + $0x750] sm:$0xff]
    %v347 = vld [vmem:[#allocation2 + $0x758] sm:$0xff]
    %v348 = vld [vmem:[#allocation2 + $0x760] sm:$0xff]
    %v349 = vld [vmem:[#allocation2 + $0x768] sm:$0xff]
    %v350 = vld [vmem:[#allocation2 + $0x770] sm:$0xff]
    %v351 = vld [vmem:[#allocation2 + $0x778] sm:$0xff]
    %v352 = vld [vmem:[#allocation2 + $0x780] sm:$0xff]
    %v353 = vld [vmem:[#allocation2 + $0x788] sm:$0xff]
    %v354 = vld [vmem:[#allocation2 + $0x790] sm:$0xff]
    %v355 = vld [vmem:[#allocation2 + $0x798] sm:$0xff]
    %v356 = vld [vmem:[#allocation2 + $0x7a0] sm:$0xff]
    %v357 = vld [vmem:[#allocation2 + $0x7a8] sm:$0xff]
    %v358 = vld [vmem:[#allocation2 + $0x7b0] sm:$0xff]
    %v359 = vld [vmem:[#allocation2 + $0x7b8] sm:$0xff]
    %v360 = vld [vmem:[#allocation2 + $0x7c0] sm:$0xff]
    %v361 = vld [vmem:[#allocation2 + $0x7c8] sm:$0xff]
    %v362 = vld [vmem:[#allocation2 + $0x7d0] sm:$0xff]
    %v363 = vld [vmem:[#allocation2 + $0x7d8] sm:$0xff]
    %v364 = vld [vmem:[#allocation2 + $0x7e0] sm:$0xff]
    %v365 = vld [vmem:[#allocation2 + $0x7e8] sm:$0xff]
    %v366 = vld [vmem:[#allocation2 + $0x7f0] sm:$0xff]
    %v367 = vld [vmem:[#allocation2 + $0x7f8] sm:$0xff]
    %v368 = vld [vmem:[%s2] sm:$0xf]
    %v370 = vlaneseq
    %v371 = vshrl.u32 %v370, 7
    %v372 = vsub.s32 0, %v371
    %v373 = vrot.slane %v368, %v372
    %v374 = vlaneseq
    %v375 = vshrl.u32 %v374, 7
    %v376 = vsub.s32 1, %v375
    %v377 = vrot.slane %v368, %v376
    %v378 = vlaneseq
    %v379 = vshrl.u32 %v378, 7
    %v380 = vsub.s32 2, %v379
    %v381 = vrot.slane %v368, %v380
    %v382 = vlaneseq
    %v383 = vshrl.u32 %v382, 7
    %v384 = vsub.s32 3, %v383
    %v385 = vrot.slane %v368, %v384
    %v646 = vunpack.c.l.b16 %v112
    %v647 = vunpack.c.h.b16 %v112
    %v648 = vunpack.c.l.b16 %v113
    %v649 = vunpack.c.h.b16 %v113
    %v650 = vunpack.c.l.b16 %v114
    %v651 = vunpack.c.h.b16 %v114
    %v652 = vunpack.c.l.b16 %v115
    %v653 = vunpack.c.h.b16 %v115
    %v654 = vunpack.c.l.b16 %v116
    %v655 = vunpack.c.h.b16 %v116
    %v656 = vunpack.c.l.b16 %v117
    %v657 = vunpack.c.h.b16 %v117
    %v658 = vunpack.c.l.b16 %v118
    %v659 = vunpack.c.h.b16 %v118
    %v660 = vunpack.c.l.b16 %v119
    %v661 = vunpack.c.h.b16 %v119
    %v662 = vunpack.c.l.b16 %v120
    %v663 = vunpack.c.h.b16 %v120
    %v664 = vunpack.c.l.b16 %v121
    %v665 = vunpack.c.h.b16 %v121
    %v666 = vunpack.c.l.b16 %v122
    %v667 = vunpack.c.h.b16 %v122
    %v668 = vunpack.c.l.b16 %v123
    %v669 = vunpack.c.h.b16 %v123
    %v670 = vunpack.c.l.b16 %v124
    %v671 = vunpack.c.h.b16 %v124
    %v672 = vunpack.c.l.b16 %v125
    %v673 = vunpack.c.h.b16 %v125
    %v674 = vunpack.c.l.b16 %v126
    %v675 = vunpack.c.h.b16 %v126
    %v676 = vunpack.c.l.b16 %v127
    %v677 = vunpack.c.h.b16 %v127
    %v678 = vunpack.c.l.b16 %v128
    %v679 = vunpack.c.h.b16 %v128
    %v680 = vunpack.c.l.b16 %v129
    %v681 = vunpack.c.h.b16 %v129
    %v682 = vunpack.c.l.b16 %v130
    %v683 = vunpack.c.h.b16 %v130
    %v684 = vunpack.c.l.b16 %v131
    %v685 = vunpack.c.h.b16 %v131
    %v686 = vunpack.c.l.b16 %v132
    %v687 = vunpack.c.h.b16 %v132
    %v688 = vunpack.c.l.b16 %v133
    %v689 = vunpack.c.h.b16 %v133
    %v690 = vunpack.c.l.b16 %v134
    %v691 = vunpack.c.h.b16 %v134
    %v692 = vunpack.c.l.b16 %v135
    %v693 = vunpack.c.h.b16 %v135
    %v694 = vunpack.c.l.b16 %v136
    %v695 = vunpack.c.h.b16 %v136
    %v696 = vunpack.c.l.b16 %v137
    %v697 = vunpack.c.h.b16 %v137
    %v698 = vunpack.c.l.b16 %v138
    %v699 = vunpack.c.h.b16 %v138
    %v700 = vunpack.c.l.b16 %v139
    %v701 = vunpack.c.h.b16 %v139
    %v702 = vunpack.c.l.b16 %v140
    %v703 = vunpack.c.h.b16 %v140
    %v704 = vunpack.c.l.b16 %v141
    %v705 = vunpack.c.h.b16 %v141
    %v706 = vunpack.c.l.b16 %v142
    %v707 = vunpack.c.h.b16 %v142
    %v708 = vunpack.c.l.b16 %v143
    %v709 = vunpack.c.h.b16 %v143
    %v710 = vunpack.c.l.b16 %v144
    %v711 = vunpack.c.h.b16 %v144
    %v712 = vunpack.c.l.b16 %v145
    %v713 = vunpack.c.h.b16 %v145
    %v714 = vunpack.c.l.b16 %v146
    %v715 = vunpack.c.h.b16 %v146
    %v716 = vunpack.c.l.b16 %v147
    %v717 = vunpack.c.h.b16 %v147
    %v718 = vunpack.c.l.b16 %v148
    %v719 = vunpack.c.h.b16 %v148
    %v720 = vunpack.c.l.b16 %v149
    %v721 = vunpack.c.h.b16 %v149
    %v722 = vunpack.c.l.b16 %v150
    %v723 = vunpack.c.h.b16 %v150
    %v724 = vunpack.c.l.b16 %v151
    %v725 = vunpack.c.h.b16 %v151
    %v726 = vunpack.c.l.b16 %v152
    %v727 = vunpack.c.h.b16 %v152
    %v728 = vunpack.c.l.b16 %v153
    %v729 = vunpack.c.h.b16 %v153
    %v730 = vunpack.c.l.b16 %v154
    %v731 = vunpack.c.h.b16 %v154
    %v732 = vunpack.c.l.b16 %v155
    %v733 = vunpack.c.h.b16 %v155
    %v734 = vunpack.c.l.b16 %v156
    %v735 = vunpack.c.h.b16 %v156
    %v736 = vunpack.c.l.b16 %v157
    %v737 = vunpack.c.h.b16 %v157
    %v738 = vunpack.c.l.b16 %v158
    %v739 = vunpack.c.h.b16 %v158
    %v740 = vunpack.c.l.b16 %v159
    %v741 = vunpack.c.h.b16 %v159
    %v742 = vunpack.c.l.b16 %v160
    %v743 = vunpack.c.h.b16 %v160
    %v744 = vunpack.c.l.b16 %v161
    %v745 = vunpack.c.h.b16 %v161
    %v746 = vunpack.c.l.b16 %v162
    %v747 = vunpack.c.h.b16 %v162
    %v748 = vunpack.c.l.b16 %v163
    %v749 = vunpack.c.h.b16 %v163
    %v750 = vunpack.c.l.b16 %v164
    %v751 = vunpack.c.h.b16 %v164
    %v752 = vunpack.c.l.b16 %v165
    %v753 = vunpack.c.h.b16 %v165
    %v754 = vunpack.c.l.b16 %v166
    %v755 = vunpack.c.h.b16 %v166
    %v756 = vunpack.c.l.b16 %v167
    %v757 = vunpack.c.h.b16 %v167
    %v758 = vunpack.c.l.b16 %v168
    %v759 = vunpack.c.h.b16 %v168
    %v760 = vunpack.c.l.b16 %v169
    %v761 = vunpack.c.h.b16 %v169
    %v762 = vunpack.c.l.b16 %v170
    %v763 = vunpack.c.h.b16 %v170
    %v764 = vunpack.c.l.b16 %v171
    %v765 = vunpack.c.h.b16 %v171
    %v766 = vunpack.c.l.b16 %v172
    %v767 = vunpack.c.h.b16 %v172
    %v768 = vunpack.c.l.b16 %v173
    %v769 = vunpack.c.h.b16 %v173
    %v770 = vunpack.c.l.b16 %v174
    %v771 = vunpack.c.h.b16 %v174
    %v772 = vunpack.c.l.b16 %v175
    %v773 = vunpack.c.h.b16 %v175
    %v774 = vunpack.c.l.b16 %v176
    %v775 = vunpack.c.h.b16 %v176
    %v776 = vunpack.c.l.b16 %v177
    %v777 = vunpack.c.h.b16 %v177
    %v778 = vunpack.c.l.b16 %v178
    %v779 = vunpack.c.h.b16 %v178
    %v780 = vunpack.c.l.b16 %v179
    %v781 = vunpack.c.h.b16 %v179
    %v782 = vunpack.c.l.b16 %v180
    %v783 = vunpack.c.h.b16 %v180
    %v784 = vunpack.c.l.b16 %v181
    %v785 = vunpack.c.h.b16 %v181
    %v786 = vunpack.c.l.b16 %v182
    %v787 = vunpack.c.h.b16 %v182
    %v788 = vunpack.c.l.b16 %v183
    %v789 = vunpack.c.h.b16 %v183
    %v790 = vunpack.c.l.b16 %v184
    %v791 = vunpack.c.h.b16 %v184
    %v792 = vunpack.c.l.b16 %v185
    %v793 = vunpack.c.h.b16 %v185
    %v794 = vunpack.c.l.b16 %v186
    %v795 = vunpack.c.h.b16 %v186
    %v796 = vunpack.c.l.b16 %v187
    %v797 = vunpack.c.h.b16 %v187
    %v798 = vunpack.c.l.b16 %v188
    %v799 = vunpack.c.h.b16 %v188
    %v800 = vunpack.c.l.b16 %v189
    %v801 = vunpack.c.h.b16 %v189
    %v802 = vunpack.c.l.b16 %v190
    %v803 = vunpack.c.h.b16 %v190
    %v804 = vunpack.c.l.b16 %v191
    %v805 = vunpack.c.h.b16 %v191
    %v806 = vunpack.c.l.b16 %v192
    %v807 = vunpack.c.h.b16 %v192
    %v808 = vunpack.c.l.b16 %v193
    %v809 = vunpack.c.h.b16 %v193
    %v810 = vunpack.c.l.b16 %v194
    %v811 = vunpack.c.h.b16 %v194
    %v812 = vunpack.c.l.b16 %v195
    %v813 = vunpack.c.h.b16 %v195
    %v814 = vunpack.c.l.b16 %v196
    %v815 = vunpack.c.h.b16 %v196
    %v816 = vunpack.c.l.b16 %v197
    %v817 = vunpack.c.h.b16 %v197
    %v818 = vunpack.c.l.b16 %v198
    %v819 = vunpack.c.h.b16 %v198
    %v820 = vunpack.c.l.b16 %v199
    %v821 = vunpack.c.h.b16 %v199
    %v822 = vunpack.c.l.b16 %v200
    %v823 = vunpack.c.h.b16 %v200
    %v824 = vunpack.c.l.b16 %v201
    %v825 = vunpack.c.h.b16 %v201
    %v826 = vunpack.c.l.b16 %v202
    %v827 = vunpack.c.h.b16 %v202
    %v828 = vunpack.c.l.b16 %v203
    %v829 = vunpack.c.h.b16 %v203
    %v830 = vunpack.c.l.b16 %v204
    %v831 = vunpack.c.h.b16 %v204
    %v832 = vunpack.c.l.b16 %v205
    %v833 = vunpack.c.h.b16 %v205
    %v834 = vunpack.c.l.b16 %v206
    %v835 = vunpack.c.h.b16 %v206
    %v836 = vunpack.c.l.b16 %v207
    %v837 = vunpack.c.h.b16 %v207
    %v838 = vunpack.c.l.b16 %v208
    %v839 = vunpack.c.h.b16 %v208
    %v840 = vunpack.c.l.b16 %v209
    %v841 = vunpack.c.h.b16 %v209
    %v842 = vunpack.c.l.b16 %v210
    %v843 = vunpack.c.h.b16 %v210
    %v844 = vunpack.c.l.b16 %v211
    %v845 = vunpack.c.h.b16 %v211
    %v846 = vunpack.c.l.b16 %v212
    %v847 = vunpack.c.h.b16 %v212
    %v848 = vunpack.c.l.b16 %v213
    %v849 = vunpack.c.h.b16 %v213
    %v850 = vunpack.c.l.b16 %v214
    %v851 = vunpack.c.h.b16 %v214
    %v852 = vunpack.c.l.b16 %v215
    %v853 = vunpack.c.h.b16 %v215
    %v854 = vunpack.c.l.b16 %v216
    %v855 = vunpack.c.h.b16 %v216
    %v856 = vunpack.c.l.b16 %v217
    %v857 = vunpack.c.h.b16 %v217
    %v858 = vunpack.c.l.b16 %v218
    %v859 = vunpack.c.h.b16 %v218
    %v860 = vunpack.c.l.b16 %v219
    %v861 = vunpack.c.h.b16 %v219
    %v862 = vunpack.c.l.b16 %v220
    %v863 = vunpack.c.h.b16 %v220
    %v864 = vunpack.c.l.b16 %v221
    %v865 = vunpack.c.h.b16 %v221
    %v866 = vunpack.c.l.b16 %v222
    %v867 = vunpack.c.h.b16 %v222
    %v868 = vunpack.c.l.b16 %v223
    %v869 = vunpack.c.h.b16 %v223
    %v870 = vunpack.c.l.b16 %v224
    %v871 = vunpack.c.h.b16 %v224
    %v872 = vunpack.c.l.b16 %v225
    %v873 = vunpack.c.h.b16 %v225
    %v874 = vunpack.c.l.b16 %v226
    %v875 = vunpack.c.h.b16 %v226
    %v876 = vunpack.c.l.b16 %v227
    %v877 = vunpack.c.h.b16 %v227
    %v878 = vunpack.c.l.b16 %v228
    %v879 = vunpack.c.h.b16 %v228
    %v880 = vunpack.c.l.b16 %v229
    %v881 = vunpack.c.h.b16 %v229
    %v882 = vunpack.c.l.b16 %v230
    %v883 = vunpack.c.h.b16 %v230
    %v884 = vunpack.c.l.b16 %v231
    %v885 = vunpack.c.h.b16 %v231
    %v886 = vunpack.c.l.b16 %v232
    %v887 = vunpack.c.h.b16 %v232
    %v888 = vunpack.c.l.b16 %v233
    %v889 = vunpack.c.h.b16 %v233
    %v890 = vunpack.c.l.b16 %v234
    %v891 = vunpack.c.h.b16 %v234
    %v892 = vunpack.c.l.b16 %v235
    %v893 = vunpack.c.h.b16 %v235
    %v894 = vunpack.c.l.b16 %v236
    %v895 = vunpack.c.h.b16 %v236
    %v896 = vunpack.c.l.b16 %v237
    %v897 = vunpack.c.h.b16 %v237
    %v898 = vunpack.c.l.b16 %v238
    %v899 = vunpack.c.h.b16 %v238
    %v900 = vunpack.c.l.b16 %v239
    %v901 = vunpack.c.h.b16 %v239
    %v902 = vunpack.c.l.b16 %v240
    %v903 = vunpack.c.h.b16 %v240
    %v904 = vunpack.c.l.b16 %v241
    %v905 = vunpack.c.h.b16 %v241
    %v906 = vunpack.c.l.b16 %v242
    %v907 = vunpack.c.h.b16 %v242
    %v908 = vunpack.c.l.b16 %v243
    %v909 = vunpack.c.h.b16 %v243
    %v910 = vunpack.c.l.b16 %v244
    %v911 = vunpack.c.h.b16 %v244
    %v912 = vunpack.c.l.b16 %v245
    %v913 = vunpack.c.h.b16 %v245
    %v914 = vunpack.c.l.b16 %v246
    %v915 = vunpack.c.h.b16 %v246
    %v916 = vunpack.c.l.b16 %v247
    %v917 = vunpack.c.h.b16 %v247
    %v918 = vunpack.c.l.b16 %v248
    %v919 = vunpack.c.h.b16 %v248
    %v920 = vunpack.c.l.b16 %v249
    %v921 = vunpack.c.h.b16 %v249
    %v922 = vunpack.c.l.b16 %v250
    %v923 = vunpack.c.h.b16 %v250
    %v924 = vunpack.c.l.b16 %v251
    %v925 = vunpack.c.h.b16 %v251
    %v926 = vunpack.c.l.b16 %v252
    %v927 = vunpack.c.h.b16 %v252
    %v928 = vunpack.c.l.b16 %v253
    %v929 = vunpack.c.h.b16 %v253
    %v930 = vunpack.c.l.b16 %v254
    %v931 = vunpack.c.h.b16 %v254
    %v932 = vunpack.c.l.b16 %v255
    %v933 = vunpack.c.h.b16 %v255
    %v934 = vunpack.c.l.b16 %v256
    %v935 = vunpack.c.h.b16 %v256
    %v936 = vunpack.c.l.b16 %v257
    %v937 = vunpack.c.h.b16 %v257
    %v938 = vunpack.c.l.b16 %v258
    %v939 = vunpack.c.h.b16 %v258
    %v940 = vunpack.c.l.b16 %v259
    %v941 = vunpack.c.h.b16 %v259
    %v942 = vunpack.c.l.b16 %v260
    %v943 = vunpack.c.h.b16 %v260
    %v944 = vunpack.c.l.b16 %v261
    %v945 = vunpack.c.h.b16 %v261
    %v946 = vunpack.c.l.b16 %v262
    %v947 = vunpack.c.h.b16 %v262
    %v948 = vunpack.c.l.b16 %v263
    %v949 = vunpack.c.h.b16 %v263
    %v950 = vunpack.c.l.b16 %v264
    %v951 = vunpack.c.h.b16 %v264
    %v952 = vunpack.c.l.b16 %v265
    %v953 = vunpack.c.h.b16 %v265
    %v954 = vunpack.c.l.b16 %v266
    %v955 = vunpack.c.h.b16 %v266
    %v956 = vunpack.c.l.b16 %v267
    %v957 = vunpack.c.h.b16 %v267
    %v958 = vunpack.c.l.b16 %v268
    %v959 = vunpack.c.h.b16 %v268
    %v960 = vunpack.c.l.b16 %v269
    %v961 = vunpack.c.h.b16 %v269
    %v962 = vunpack.c.l.b16 %v270
    %v963 = vunpack.c.h.b16 %v270
    %v964 = vunpack.c.l.b16 %v271
    %v965 = vunpack.c.h.b16 %v271
    %v966 = vunpack.c.l.b16 %v272
    %v967 = vunpack.c.h.b16 %v272
    %v968 = vunpack.c.l.b16 %v273
    %v969 = vunpack.c.h.b16 %v273
    %v970 = vunpack.c.l.b16 %v274
    %v971 = vunpack.c.h.b16 %v274
    %v972 = vunpack.c.l.b16 %v275
    %v973 = vunpack.c.h.b16 %v275
    %v974 = vunpack.c.l.b16 %v276
    %v975 = vunpack.c.h.b16 %v276
    %v976 = vunpack.c.l.b16 %v277
    %v977 = vunpack.c.h.b16 %v277
    %v978 = vunpack.c.l.b16 %v278
    %v979 = vunpack.c.h.b16 %v278
    %v980 = vunpack.c.l.b16 %v279
    %v981 = vunpack.c.h.b16 %v279
    %v982 = vunpack.c.l.b16 %v280
    %v983 = vunpack.c.h.b16 %v280
    %v984 = vunpack.c.l.b16 %v281
    %v985 = vunpack.c.h.b16 %v281
    %v986 = vunpack.c.l.b16 %v282
    %v987 = vunpack.c.h.b16 %v282
    %v988 = vunpack.c.l.b16 %v283
    %v989 = vunpack.c.h.b16 %v283
    %v990 = vunpack.c.l.b16 %v284
    %v991 = vunpack.c.h.b16 %v284
    %v992 = vunpack.c.l.b16 %v285
    %v993 = vunpack.c.h.b16 %v285
    %v994 = vunpack.c.l.b16 %v286
    %v995 = vunpack.c.h.b16 %v286
    %v996 = vunpack.c.l.b16 %v287
    %v997 = vunpack.c.h.b16 %v287
    %v998 = vunpack.c.l.b16 %v288
    %v999 = vunpack.c.h.b16 %v288
    %v1000 = vunpack.c.l.b16 %v289
    %v1001 = vunpack.c.h.b16 %v289
    %v1002 = vunpack.c.l.b16 %v290
    %v1003 = vunpack.c.h.b16 %v290
    %v1004 = vunpack.c.l.b16 %v291
    %v1005 = vunpack.c.h.b16 %v291
    %v1006 = vunpack.c.l.b16 %v292
    %v1007 = vunpack.c.h.b16 %v292
    %v1008 = vunpack.c.l.b16 %v293
    %v1009 = vunpack.c.h.b16 %v293
    %v1010 = vunpack.c.l.b16 %v294
    %v1011 = vunpack.c.h.b16 %v294
    %v1012 = vunpack.c.l.b16 %v295
    %v1013 = vunpack.c.h.b16 %v295
    %v1014 = vunpack.c.l.b16 %v296
    %v1015 = vunpack.c.h.b16 %v296
    %v1016 = vunpack.c.l.b16 %v297
    %v1017 = vunpack.c.h.b16 %v297
    %v1018 = vunpack.c.l.b16 %v298
    %v1019 = vunpack.c.h.b16 %v298
    %v1020 = vunpack.c.l.b16 %v299
    %v1021 = vunpack.c.h.b16 %v299
    %v1022 = vunpack.c.l.b16 %v300
    %v1023 = vunpack.c.h.b16 %v300
    %v1024 = vunpack.c.l.b16 %v301
    %v1025 = vunpack.c.h.b16 %v301
    %v1026 = vunpack.c.l.b16 %v302
    %v1027 = vunpack.c.h.b16 %v302
    %v1028 = vunpack.c.l.b16 %v303
    %v1029 = vunpack.c.h.b16 %v303
    %v1030 = vunpack.c.l.b16 %v304
    %v1031 = vunpack.c.h.b16 %v304
    %v1032 = vunpack.c.l.b16 %v305
    %v1033 = vunpack.c.h.b16 %v305
    %v1034 = vunpack.c.l.b16 %v306
    %v1035 = vunpack.c.h.b16 %v306
    %v1036 = vunpack.c.l.b16 %v307
    %v1037 = vunpack.c.h.b16 %v307
    %v1038 = vunpack.c.l.b16 %v308
    %v1039 = vunpack.c.h.b16 %v308
    %v1040 = vunpack.c.l.b16 %v309
    %v1041 = vunpack.c.h.b16 %v309
    %v1042 = vunpack.c.l.b16 %v310
    %v1043 = vunpack.c.h.b16 %v310
    %v1044 = vunpack.c.l.b16 %v311
    %v1045 = vunpack.c.h.b16 %v311
    %v1046 = vunpack.c.l.b16 %v312
    %v1047 = vunpack.c.h.b16 %v312
    %v1048 = vunpack.c.l.b16 %v313
    %v1049 = vunpack.c.h.b16 %v313
    %v1050 = vunpack.c.l.b16 %v314
    %v1051 = vunpack.c.h.b16 %v314
    %v1052 = vunpack.c.l.b16 %v315
    %v1053 = vunpack.c.h.b16 %v315
    %v1054 = vunpack.c.l.b16 %v316
    %v1055 = vunpack.c.h.b16 %v316
    %v1056 = vunpack.c.l.b16 %v317
    %v1057 = vunpack.c.h.b16 %v317
    %v1058 = vunpack.c.l.b16 %v318
    %v1059 = vunpack.c.h.b16 %v318
    %v1060 = vunpack.c.l.b16 %v319
    %v1061 = vunpack.c.h.b16 %v319
    %v1062 = vunpack.c.l.b16 %v320
    %v1063 = vunpack.c.h.b16 %v320
    %v1064 = vunpack.c.l.b16 %v321
    %v1065 = vunpack.c.h.b16 %v321
    %v1066 = vunpack.c.l.b16 %v322
    %v1067 = vunpack.c.h.b16 %v322
    %v1068 = vunpack.c.l.b16 %v323
    %v1069 = vunpack.c.h.b16 %v323
    %v1070 = vunpack.c.l.b16 %v324
    %v1071 = vunpack.c.h.b16 %v324
    %v1072 = vunpack.c.l.b16 %v325
    %v1073 = vunpack.c.h.b16 %v325
    %v1074 = vunpack.c.l.b16 %v326
    %v1075 = vunpack.c.h.b16 %v326
    %v1076 = vunpack.c.l.b16 %v327
    %v1077 = vunpack.c.h.b16 %v327
    %v1078 = vunpack.c.l.b16 %v328
    %v1079 = vunpack.c.h.b16 %v328
    %v1080 = vunpack.c.l.b16 %v329
    %v1081 = vunpack.c.h.b16 %v329
    %v1082 = vunpack.c.l.b16 %v330
    %v1083 = vunpack.c.h.b16 %v330
    %v1084 = vunpack.c.l.b16 %v331
    %v1085 = vunpack.c.h.b16 %v331
    %v1086 = vunpack.c.l.b16 %v332
    %v1087 = vunpack.c.h.b16 %v332
    %v1088 = vunpack.c.l.b16 %v333
    %v1089 = vunpack.c.h.b16 %v333
    %v1090 = vunpack.c.l.b16 %v334
    %v1091 = vunpack.c.h.b16 %v334
    %v1092 = vunpack.c.l.b16 %v335
    %v1093 = vunpack.c.h.b16 %v335
    %v1094 = vunpack.c.l.b16 %v336
    %v1095 = vunpack.c.h.b16 %v336
    %v1096 = vunpack.c.l.b16 %v337
    %v1097 = vunpack.c.h.b16 %v337
    %v1098 = vunpack.c.l.b16 %v338
    %v1099 = vunpack.c.h.b16 %v338
    %v1100 = vunpack.c.l.b16 %v339
    %v1101 = vunpack.c.h.b16 %v339
    %v1102 = vunpack.c.l.b16 %v340
    %v1103 = vunpack.c.h.b16 %v340
    %v1104 = vunpack.c.l.b16 %v341
    %v1105 = vunpack.c.h.b16 %v341
    %v1106 = vunpack.c.l.b16 %v342
    %v1107 = vunpack.c.h.b16 %v342
    %v1108 = vunpack.c.l.b16 %v343
    %v1109 = vunpack.c.h.b16 %v343
    %v1110 = vunpack.c.l.b16 %v344
    %v1111 = vunpack.c.h.b16 %v344
    %v1112 = vunpack.c.l.b16 %v345
    %v1113 = vunpack.c.h.b16 %v345
    %v1114 = vunpack.c.l.b16 %v346
    %v1115 = vunpack.c.h.b16 %v346
    %v1116 = vunpack.c.l.b16 %v347
    %v1117 = vunpack.c.h.b16 %v347
    %v1118 = vunpack.c.l.b16 %v348
    %v1119 = vunpack.c.h.b16 %v348
    %v1120 = vunpack.c.l.b16 %v349
    %v1121 = vunpack.c.h.b16 %v349
    %v1122 = vunpack.c.l.b16 %v350
    %v1123 = vunpack.c.h.b16 %v350
    %v1124 = vunpack.c.l.b16 %v351
    %v1125 = vunpack.c.h.b16 %v351
    %v1126 = vunpack.c.l.b16 %v352
    %v1127 = vunpack.c.h.b16 %v352
    %v1128 = vunpack.c.l.b16 %v353
    %v1129 = vunpack.c.h.b16 %v353
    %v1130 = vunpack.c.l.b16 %v354
    %v1131 = vunpack.c.h.b16 %v354
    %v1132 = vunpack.c.l.b16 %v355
    %v1133 = vunpack.c.h.b16 %v355
    %v1134 = vunpack.c.l.b16 %v356
    %v1135 = vunpack.c.h.b16 %v356
    %v1136 = vunpack.c.l.b16 %v357
    %v1137 = vunpack.c.h.b16 %v357
    %v1138 = vunpack.c.l.b16 %v358
    %v1139 = vunpack.c.h.b16 %v358
    %v1140 = vunpack.c.l.b16 %v359
    %v1141 = vunpack.c.h.b16 %v359
    %v1142 = vunpack.c.l.b16 %v360
    %v1143 = vunpack.c.h.b16 %v360
    %v1144 = vunpack.c.l.b16 %v361
    %v1145 = vunpack.c.h.b16 %v361
    %v1146 = vunpack.c.l.b16 %v362
    %v1147 = vunpack.c.h.b16 %v362
    %v1148 = vunpack.c.l.b16 %v363
    %v1149 = vunpack.c.h.b16 %v363
    %v1150 = vunpack.c.l.b16 %v364
    %v1151 = vunpack.c.h.b16 %v364
    %v1152 = vunpack.c.l.b16 %v365
    %v1153 = vunpack.c.h.b16 %v365
    %v1154 = vunpack.c.l.b16 %v366
    %v1155 = vunpack.c.h.b16 %v366
    %v1156 = vunpack.c.l.b16 %v367
    %v1157 = vunpack.c.h.b16 %v367
    %v1158 = vpack.c.b16 %v650, %v646
    %v1159 = vpack.c.b16 %v651, %v647
    %v1160 = vpack.c.b16 %v652, %v648
    %v1161 = vpack.c.b16 %v653, %v649
    %v1162 = vpack.c.b16 %v658, %v654
    %v1163 = vpack.c.b16 %v659, %v655
    %v1164 = vpack.c.b16 %v660, %v656
    %v1165 = vpack.c.b16 %v661, %v657
    %v1166 = vpack.c.b16 %v666, %v662
    %v1167 = vpack.c.b16 %v667, %v663
    %v1168 = vpack.c.b16 %v668, %v664
    %v1169 = vpack.c.b16 %v669, %v665
    %v1170 = vpack.c.b16 %v674, %v670
    %v1171 = vpack.c.b16 %v675, %v671
    %v1172 = vpack.c.b16 %v676, %v672
    %v1173 = vpack.c.b16 %v677, %v673
    %v1174 = vpack.c.b16 %v682, %v678
    %v1175 = vpack.c.b16 %v683, %v679
    %v1176 = vpack.c.b16 %v684, %v680
    %v1177 = vpack.c.b16 %v685, %v681
    %v1178 = vpack.c.b16 %v690, %v686
    %v1179 = vpack.c.b16 %v691, %v687
    %v1180 = vpack.c.b16 %v692, %v688
    %v1181 = vpack.c.b16 %v693, %v689
    %v1182 = vpack.c.b16 %v698, %v694
    %v1183 = vpack.c.b16 %v699, %v695
    %v1184 = vpack.c.b16 %v700, %v696
    %v1185 = vpack.c.b16 %v701, %v697
    %v1186 = vpack.c.b16 %v706, %v702
    %v1187 = vpack.c.b16 %v707, %v703
    %v1188 = vpack.c.b16 %v708, %v704
    %v1189 = vpack.c.b16 %v709, %v705
    %v1190 = vpack.c.b16 %v714, %v710
    %v1191 = vpack.c.b16 %v715, %v711
    %v1192 = vpack.c.b16 %v716, %v712
    %v1193 = vpack.c.b16 %v717, %v713
    %v1194 = vpack.c.b16 %v722, %v718
    %v1195 = vpack.c.b16 %v723, %v719
    %v1196 = vpack.c.b16 %v724, %v720
    %v1197 = vpack.c.b16 %v725, %v721
    %v1198 = vpack.c.b16 %v730, %v726
    %v1199 = vpack.c.b16 %v731, %v727
    %v1200 = vpack.c.b16 %v732, %v728
    %v1201 = vpack.c.b16 %v733, %v729
    %v1202 = vpack.c.b16 %v738, %v734
    %v1203 = vpack.c.b16 %v739, %v735
    %v1204 = vpack.c.b16 %v740, %v736
    %v1205 = vpack.c.b16 %v741, %v737
    %v1206 = vpack.c.b16 %v746, %v742
    %v1207 = vpack.c.b16 %v747, %v743
    %v1208 = vpack.c.b16 %v748, %v744
    %v1209 = vpack.c.b16 %v749, %v745
    %v1210 = vpack.c.b16 %v754, %v750
    %v1211 = vpack.c.b16 %v755, %v751
    %v1212 = vpack.c.b16 %v756, %v752
    %v1213 = vpack.c.b16 %v757, %v753
    %v1214 = vpack.c.b16 %v762, %v758
    %v1215 = vpack.c.b16 %v763, %v759
    %v1216 = vpack.c.b16 %v764, %v760
    %v1217 = vpack.c.b16 %v765, %v761
    %v1218 = vpack.c.b16 %v770, %v766
    %v1219 = vpack.c.b16 %v771, %v767
    %v1220 = vpack.c.b16 %v772, %v768
    %v1221 = vpack.c.b16 %v773, %v769
    %v1222 = vpack.c.b16 %v778, %v774
    %v1223 = vpack.c.b16 %v779, %v775
    %v1224 = vpack.c.b16 %v780, %v776
    %v1225 = vpack.c.b16 %v781, %v777
    %v1226 = vpack.c.b16 %v786, %v782
    %v1227 = vpack.c.b16 %v787, %v783
    %v1228 = vpack.c.b16 %v788, %v784
    %v1229 = vpack.c.b16 %v789, %v785
    %v1230 = vpack.c.b16 %v794, %v790
    %v1231 = vpack.c.b16 %v795, %v791
    %v1232 = vpack.c.b16 %v796, %v792
    %v1233 = vpack.c.b16 %v797, %v793
    %v1234 = vpack.c.b16 %v802, %v798
    %v1235 = vpack.c.b16 %v803, %v799
    %v1236 = vpack.c.b16 %v804, %v800
    %v1237 = vpack.c.b16 %v805, %v801
    %v1238 = vpack.c.b16 %v810, %v806
    %v1239 = vpack.c.b16 %v811, %v807
    %v1240 = vpack.c.b16 %v812, %v808
    %v1241 = vpack.c.b16 %v813, %v809
    %v1242 = vpack.c.b16 %v818, %v814
    %v1243 = vpack.c.b16 %v819, %v815
    %v1244 = vpack.c.b16 %v820, %v816
    %v1245 = vpack.c.b16 %v821, %v817
    %v1246 = vpack.c.b16 %v826, %v822
    %v1247 = vpack.c.b16 %v827, %v823
    %v1248 = vpack.c.b16 %v828, %v824
    %v1249 = vpack.c.b16 %v829, %v825
    %v1250 = vpack.c.b16 %v834, %v830
    %v1251 = vpack.c.b16 %v835, %v831
    %v1252 = vpack.c.b16 %v836, %v832
    %v1253 = vpack.c.b16 %v837, %v833
    %v1254 = vpack.c.b16 %v842, %v838
    %v1255 = vpack.c.b16 %v843, %v839
    %v1256 = vpack.c.b16 %v844, %v840
    %v1257 = vpack.c.b16 %v845, %v841
    %v1258 = vpack.c.b16 %v850, %v846
    %v1259 = vpack.c.b16 %v851, %v847
    %v1260 = vpack.c.b16 %v852, %v848
    %v1261 = vpack.c.b16 %v853, %v849
    %v1262 = vpack.c.b16 %v858, %v854
    %v1263 = vpack.c.b16 %v859, %v855
    %v1264 = vpack.c.b16 %v860, %v856
    %v1265 = vpack.c.b16 %v861, %v857
    %v1266 = vpack.c.b16 %v866, %v862
    %v1267 = vpack.c.b16 %v867, %v863
    %v1268 = vpack.c.b16 %v868, %v864
    %v1269 = vpack.c.b16 %v869, %v865
    %v1270 = vpack.c.b16 %v874, %v870
    %v1271 = vpack.c.b16 %v875, %v871
    %v1272 = vpack.c.b16 %v876, %v872
    %v1273 = vpack.c.b16 %v877, %v873
    %v1274 = vpack.c.b16 %v882, %v878
    %v1275 = vpack.c.b16 %v883, %v879
    %v1276 = vpack.c.b16 %v884, %v880
    %v1277 = vpack.c.b16 %v885, %v881
    %v1278 = vpack.c.b16 %v890, %v886
    %v1279 = vpack.c.b16 %v891, %v887
    %v1280 = vpack.c.b16 %v892, %v888
    %v1281 = vpack.c.b16 %v893, %v889
    %v1282 = vpack.c.b16 %v898, %v894
    %v1283 = vpack.c.b16 %v899, %v895
    %v1284 = vpack.c.b16 %v900, %v896
    %v1285 = vpack.c.b16 %v901, %v897
    %v1286 = vpack.c.b16 %v906, %v902
    %v1287 = vpack.c.b16 %v907, %v903
    %v1288 = vpack.c.b16 %v908, %v904
    %v1289 = vpack.c.b16 %v909, %v905
    %v1290 = vpack.c.b16 %v914, %v910
    %v1291 = vpack.c.b16 %v915, %v911
    %v1292 = vpack.c.b16 %v916, %v912
    %v1293 = vpack.c.b16 %v917, %v913
    %v1294 = vpack.c.b16 %v922, %v918
    %v1295 = vpack.c.b16 %v923, %v919
    %v1296 = vpack.c.b16 %v924, %v920
    %v1297 = vpack.c.b16 %v925, %v921
    %v1298 = vpack.c.b16 %v930, %v926
    %v1299 = vpack.c.b16 %v931, %v927
    %v1300 = vpack.c.b16 %v932, %v928
    %v1301 = vpack.c.b16 %v933, %v929
    %v1302 = vpack.c.b16 %v938, %v934
    %v1303 = vpack.c.b16 %v939, %v935
    %v1304 = vpack.c.b16 %v940, %v936
    %v1305 = vpack.c.b16 %v941, %v937
    %v1306 = vpack.c.b16 %v946, %v942
    %v1307 = vpack.c.b16 %v947, %v943
    %v1308 = vpack.c.b16 %v948, %v944
    %v1309 = vpack.c.b16 %v949, %v945
    %v1310 = vpack.c.b16 %v954, %v950
    %v1311 = vpack.c.b16 %v955, %v951
    %v1312 = vpack.c.b16 %v956, %v952
    %v1313 = vpack.c.b16 %v957, %v953
    %v1314 = vpack.c.b16 %v962, %v958
    %v1315 = vpack.c.b16 %v963, %v959
    %v1316 = vpack.c.b16 %v964, %v960
    %v1317 = vpack.c.b16 %v965, %v961
    %v1318 = vpack.c.b16 %v970, %v966
    %v1319 = vpack.c.b16 %v971, %v967
    %v1320 = vpack.c.b16 %v972, %v968
    %v1321 = vpack.c.b16 %v973, %v969
    %v1322 = vpack.c.b16 %v978, %v974
    %v1323 = vpack.c.b16 %v979, %v975
    %v1324 = vpack.c.b16 %v980, %v976
    %v1325 = vpack.c.b16 %v981, %v977
    %v1326 = vpack.c.b16 %v986, %v982
    %v1327 = vpack.c.b16 %v987, %v983
    %v1328 = vpack.c.b16 %v988, %v984
    %v1329 = vpack.c.b16 %v989, %v985
    %v1330 = vpack.c.b16 %v994, %v990
    %v1331 = vpack.c.b16 %v995, %v991
    %v1332 = vpack.c.b16 %v996, %v992
    %v1333 = vpack.c.b16 %v997, %v993
    %v1334 = vpack.c.b16 %v1002, %v998
    %v1335 = vpack.c.b16 %v1003, %v999
    %v1336 = vpack.c.b16 %v1004, %v1000
    %v1337 = vpack.c.b16 %v1005, %v1001
    %v1338 = vpack.c.b16 %v1010, %v1006
    %v1339 = vpack.c.b16 %v1011, %v1007
    %v1340 = vpack.c.b16 %v1012, %v1008
    %v1341 = vpack.c.b16 %v1013, %v1009
    %v1342 = vpack.c.b16 %v1018, %v1014
    %v1343 = vpack.c.b16 %v1019, %v1015
    %v1344 = vpack.c.b16 %v1020, %v1016
    %v1345 = vpack.c.b16 %v1021, %v1017
    %v1346 = vpack.c.b16 %v1026, %v1022
    %v1347 = vpack.c.b16 %v1027, %v1023
    %v1348 = vpack.c.b16 %v1028, %v1024
    %v1349 = vpack.c.b16 %v1029, %v1025
    %v1350 = vpack.c.b16 %v1034, %v1030
    %v1351 = vpack.c.b16 %v1035, %v1031
    %v1352 = vpack.c.b16 %v1036, %v1032
    %v1353 = vpack.c.b16 %v1037, %v1033
    %v1354 = vpack.c.b16 %v1042, %v1038
    %v1355 = vpack.c.b16 %v1043, %v1039
    %v1356 = vpack.c.b16 %v1044, %v1040
    %v1357 = vpack.c.b16 %v1045, %v1041
    %v1358 = vpack.c.b16 %v1050, %v1046
    %v1359 = vpack.c.b16 %v1051, %v1047
    %v1360 = vpack.c.b16 %v1052, %v1048
    %v1361 = vpack.c.b16 %v1053, %v1049
    %v1362 = vpack.c.b16 %v1058, %v1054
    %v1363 = vpack.c.b16 %v1059, %v1055
    %v1364 = vpack.c.b16 %v1060, %v1056
    %v1365 = vpack.c.b16 %v1061, %v1057
    %v1366 = vpack.c.b16 %v1066, %v1062
    %v1367 = vpack.c.b16 %v1067, %v1063
    %v1368 = vpack.c.b16 %v1068, %v1064
    %v1369 = vpack.c.b16 %v1069, %v1065
    %v1370 = vpack.c.b16 %v1074, %v1070
    %v1371 = vpack.c.b16 %v1075, %v1071
    %v1372 = vpack.c.b16 %v1076, %v1072
    %v1373 = vpack.c.b16 %v1077, %v1073
    %v1374 = vpack.c.b16 %v1082, %v1078
    %v1375 = vpack.c.b16 %v1083, %v1079
    %v1376 = vpack.c.b16 %v1084, %v1080
    %v1377 = vpack.c.b16 %v1085, %v1081
    %v1378 = vpack.c.b16 %v1090, %v1086
    %v1379 = vpack.c.b16 %v1091, %v1087
    %v1380 = vpack.c.b16 %v1092, %v1088
    %v1381 = vpack.c.b16 %v1093, %v1089
    %v1382 = vpack.c.b16 %v1098, %v1094
    %v1383 = vpack.c.b16 %v1099, %v1095
    %v1384 = vpack.c.b16 %v1100, %v1096
    %v1385 = vpack.c.b16 %v1101, %v1097
    %v1386 = vpack.c.b16 %v1106, %v1102
    %v1387 = vpack.c.b16 %v1107, %v1103
    %v1388 = vpack.c.b16 %v1108, %v1104
    %v1389 = vpack.c.b16 %v1109, %v1105
    %v1390 = vpack.c.b16 %v1114, %v1110
    %v1391 = vpack.c.b16 %v1115, %v1111
    %v1392 = vpack.c.b16 %v1116, %v1112
    %v1393 = vpack.c.b16 %v1117, %v1113
    %v1394 = vpack.c.b16 %v1122, %v1118
    %v1395 = vpack.c.b16 %v1123, %v1119
    %v1396 = vpack.c.b16 %v1124, %v1120
    %v1397 = vpack.c.b16 %v1125, %v1121
    %v1398 = vpack.c.b16 %v1130, %v1126
    %v1399 = vpack.c.b16 %v1131, %v1127
    %v1400 = vpack.c.b16 %v1132, %v1128
    %v1401 = vpack.c.b16 %v1133, %v1129
    %v1402 = vpack.c.b16 %v1138, %v1134
    %v1403 = vpack.c.b16 %v1139, %v1135
    %v1404 = vpack.c.b16 %v1140, %v1136
    %v1405 = vpack.c.b16 %v1141, %v1137
    %v1406 = vpack.c.b16 %v1146, %v1142
    %v1407 = vpack.c.b16 %v1147, %v1143
    %v1408 = vpack.c.b16 %v1148, %v1144
    %v1409 = vpack.c.b16 %v1149, %v1145
    %v1410 = vpack.c.b16 %v1154, %v1150
    %v1411 = vpack.c.b16 %v1155, %v1151
    %v1412 = vpack.c.b16 %v1156, %v1152
    %v1413 = vpack.c.b16 %v1157, %v1153
    %1670 = vmatprep.subr.bf16.mxu0 %v1159
    %1671 = vmatpush1.bf16.msra.mxu0 %v1158
    %1672 = vmatprep.subr.bf16.mxu0 %v1163
    %1673 = vmatpush1.bf16.msra.mxu0 %v1162
    %1674 = vmatprep.subr.bf16.mxu0 %v1167
    %1675 = vmatpush1.bf16.msra.mxu0 %v1166
    %1676 = vmatprep.subr.bf16.mxu0 %v1171
    %1677 = vmatpush1.bf16.msra.mxu0 %v1170
    %1678 = vmatprep.subr.bf16.mxu0 %v1175
    %1679 = vmatpush1.bf16.msra.mxu0 %v1174
    %1680 = vmatprep.subr.bf16.mxu0 %v1179
    %1681 = vmatpush1.bf16.msra.mxu0 %v1178
    %1682 = vmatprep.subr.bf16.mxu0 %v1183
    %1683 = vmatpush1.bf16.msra.mxu0 %v1182
    %1684 = vmatprep.subr.bf16.mxu0 %v1187
    %1685 = vmatpush1.bf16.msra.mxu0 %v1186
    %1686 = vmatprep.subr.bf16.mxu0 %v1191
    %1687 = vmatpush1.bf16.msra.mxu0 %v1190
    %1688 = vmatprep.subr.bf16.mxu0 %v1195
    %1689 = vmatpush1.bf16.msra.mxu0 %v1194
    %1690 = vmatprep.subr.bf16.mxu0 %v1199
    %1691 = vmatpush1.bf16.msra.mxu0 %v1198
    %1692 = vmatprep.subr.bf16.mxu0 %v1203
    %1693 = vmatpush1.bf16.msra.mxu0 %v1202
    %1694 = vmatprep.subr.bf16.mxu0 %v1207
    %1695 = vmatpush1.bf16.msra.mxu0 %v1206
    %1696 = vmatprep.subr.bf16.mxu0 %v1211
    %1697 = vmatpush1.bf16.msra.mxu0 %v1210
    %1698 = vmatprep.subr.bf16.mxu0 %v1215
    %1699 = vmatpush1.bf16.msra.mxu0 %v1214
    %1700 = vmatprep.subr.bf16.mxu0 %v1219
    %1701 = vmatpush1.bf16.msra.mxu0 %v1218
    %1702 = vmatprep.mubr.bf16.mxu0 %v105
    %1703 = vmatmul.mubr.bf16.gmra.mrb[0].mxu0 %v104
    %v1704 = vpop.f32.mrb[0].mxu0
    %v1705 = vadd.f32 %v373, %v1704
    %v1706 = vpop.f32.mrb[0].mxu0
    %v1707 = vadd.f32 %v377, %v1706
    %v1708 = vpop.f32.mrb[0].mxu0
    %v1709 = vadd.f32 %v373, %v1708
    %v1710 = vpop.f32.mrb[0].mxu0
    %v1711 = vadd.f32 %v377, %v1710
    %1712 = vdwg.mxu0
    %1713 = vmatprep.subr.bf16.mxu0 %v1223
    %1714 = vmatpush1.bf16.msra.mxu0 %v1222
    %1715 = vmatprep.subr.bf16.mxu0 %v1227
    %1716 = vmatpush1.bf16.msra.mxu0 %v1226
    %1717 = vmatprep.subr.bf16.mxu0 %v1231
    %1718 = vmatpush1.bf16.msra.mxu0 %v1230
    %1719 = vmatprep.subr.bf16.mxu0 %v1235
    %1720 = vmatpush1.bf16.msra.mxu0 %v1234
    %1721 = vmatprep.subr.bf16.mxu0 %v1239
    %1722 = vmatpush1.bf16.msra.mxu0 %v1238
    %1723 = vmatprep.subr.bf16.mxu0 %v1243
    %1724 = vmatpush1.bf16.msra.mxu0 %v1242
    %1725 = vmatprep.subr.bf16.mxu0 %v1247
    %1726 = vmatpush1.bf16.msra.mxu0 %v1246
    %1727 = vmatprep.subr.bf16.mxu0 %v1251
    %1728 = vmatpush1.bf16.msra.mxu0 %v1250
    %1729 = vmatprep.subr.bf16.mxu0 %v1255
    %1730 = vmatpush1.bf16.msra.mxu0 %v1254
    %1731 = vmatprep.subr.bf16.mxu0 %v1259
    %1732 = vmatpush1.bf16.msra.mxu0 %v1258
    %1733 = vmatprep.subr.bf16.mxu0 %v1263
    %1734 = vmatpush1.bf16.msra.mxu0 %v1262
    %1735 = vmatprep.subr.bf16.mxu0 %v1267
    %1736 = vmatpush1.bf16.msra.mxu0 %v1266
    %1737 = vmatprep.subr.bf16.mxu0 %v1271
    %1738 = vmatpush1.bf16.msra.mxu0 %v1270
    %1739 = vmatprep.subr.bf16.mxu0 %v1275
    %1740 = vmatpush1.bf16.msra.mxu0 %v1274
    %1741 = vmatprep.subr.bf16.mxu0 %v1279
    %1742 = vmatpush1.bf16.msra.mxu0 %v1278
    %1743 = vmatprep.subr.bf16.mxu0 %v1283
    %1744 = vmatpush1.bf16.msra.mxu0 %v1282
    %1745 = vmatprep.mubr.bf16.mxu0 %v107
    %1746 = vmatmul.mubr.bf16.gmra.mrb[0].mxu0 %v106
    %v1747 = vpop.f32.mrb[0].mxu0
    %v1748 = vadd.f32 %v1705, %v1747
    %v1749 = vpop.f32.mrb[0].mxu0
    %v1750 = vadd.f32 %v1707, %v1749
    %v1751 = vpop.f32.mrb[0].mxu0
    %v1752 = vadd.f32 %v1709, %v1751
    %v1753 = vpop.f32.mrb[0].mxu0
    %v1754 = vadd.f32 %v1711, %v1753
    %1755 = vdwg.mxu0
    %1756 = vmatprep.subr.bf16.mxu0 %v1287
    %1757 = vmatpush1.bf16.msra.mxu0 %v1286
    %1758 = vmatprep.subr.bf16.mxu0 %v1291
    %1759 = vmatpush1.bf16.msra.mxu0 %v1290
    %1760 = vmatprep.subr.bf16.mxu0 %v1295
    %1761 = vmatpush1.bf16.msra.mxu0 %v1294
    %1762 = vmatprep.subr.bf16.mxu0 %v1299
    %1763 = vmatpush1.bf16.msra.mxu0 %v1298
    %1764 = vmatprep.subr.bf16.mxu0 %v1303
    %1765 = vmatpush1.bf16.msra.mxu0 %v1302
    %1766 = vmatprep.subr.bf16.mxu0 %v1307
    %1767 = vmatpush1.bf16.msra.mxu0 %v1306
    %1768 = vmatprep.subr.bf16.mxu0 %v1311
    %1769 = vmatpush1.bf16.msra.mxu0 %v1310
    %1770 = vmatprep.subr.bf16.mxu0 %v1315
    %1771 = vmatpush1.bf16.msra.mxu0 %v1314
    %1772 = vmatprep.subr.bf16.mxu0 %v1319
    %1773 = vmatpush1.bf16.msra.mxu0 %v1318
    %1774 = vmatprep.subr.bf16.mxu0 %v1323
    %1775 = vmatpush1.bf16.msra.mxu0 %v1322
    %1776 = vmatprep.subr.bf16.mxu0 %v1327
    %1777 = vmatpush1.bf16.msra.mxu0 %v1326
    %1778 = vmatprep.subr.bf16.mxu0 %v1331
    %1779 = vmatpush1.bf16.msra.mxu0 %v1330
    %1780 = vmatprep.subr.bf16.mxu0 %v1335
    %1781 = vmatpush1.bf16.msra.mxu0 %v1334
    %1782 = vmatprep.subr.bf16.mxu0 %v1339
    %1783 = vmatpush1.bf16.msra.mxu0 %v1338
    %1784 = vmatprep.subr.bf16.mxu0 %v1343
    %1785 = vmatpush1.bf16.msra.mxu0 %v1342
    %1786 = vmatprep.subr.bf16.mxu0 %v1347
    %1787 = vmatpush1.bf16.msra.mxu0 %v1346
    %1788 = vmatprep.mubr.bf16.mxu0 %v109
    %1789 = vmatmul.mubr.bf16.gmra.mrb[0].mxu0 %v108
    %v1790 = vpop.f32.mrb[0].mxu0
    %v1791 = vadd.f32 %v1748, %v1790
    %v1792 = vpop.f32.mrb[0].mxu0
    %v1793 = vadd.f32 %v1750, %v1792
    %v1794 = vpop.f32.mrb[0].mxu0
    %v1795 = vadd.f32 %v1752, %v1794
    %v1796 = vpop.f32.mrb[0].mxu0
    %v1797 = vadd.f32 %v1754, %v1796
    %1798 = vdwg.mxu0
    %1799 = vmatprep.subr.bf16.mxu0 %v1351
    %1800 = vmatpush1.bf16.msra.mxu0 %v1350
    %1801 = vmatprep.subr.bf16.mxu0 %v1355
    %1802 = vmatpush1.bf16.msra.mxu0 %v1354
    %1803 = vmatprep.subr.bf16.mxu0 %v1359
    %1804 = vmatpush1.bf16.msra.mxu0 %v1358
    %1805 = vmatprep.subr.bf16.mxu0 %v1363
    %1806 = vmatpush1.bf16.msra.mxu0 %v1362
    %1807 = vmatprep.subr.bf16.mxu0 %v1367
    %1808 = vmatpush1.bf16.msra.mxu0 %v1366
    %1809 = vmatprep.subr.bf16.mxu0 %v1371
    %1810 = vmatpush1.bf16.msra.mxu0 %v1370
    %1811 = vmatprep.subr.bf16.mxu0 %v1375
    %1812 = vmatpush1.bf16.msra.mxu0 %v1374
    %1813 = vmatprep.subr.bf16.mxu0 %v1379
    %1814 = vmatpush1.bf16.msra.mxu0 %v1378
    %1815 = vmatprep.subr.bf16.mxu0 %v1383
    %1816 = vmatpush1.bf16.msra.mxu0 %v1382
    %1817 = vmatprep.subr.bf16.mxu0 %v1387
    %1818 = vmatpush1.bf16.msra.mxu0 %v1386
    %1819 = vmatprep.subr.bf16.mxu0 %v1391
    %1820 = vmatpush1.bf16.msra.mxu0 %v1390
    %1821 = vmatprep.subr.bf16.mxu0 %v1395
    %1822 = vmatpush1.bf16.msra.mxu0 %v1394
    %1823 = vmatprep.subr.bf16.mxu0 %v1399
    %1824 = vmatpush1.bf16.msra.mxu0 %v1398
    %1825 = vmatprep.subr.bf16.mxu0 %v1403
    %1826 = vmatpush1.bf16.msra.mxu0 %v1402
    %1827 = vmatprep.subr.bf16.mxu0 %v1407
    %1828 = vmatpush1.bf16.msra.mxu0 %v1406
    %1829 = vmatprep.subr.bf16.mxu0 %v1411
    %1830 = vmatpush1.bf16.msra.mxu0 %v1410
    %1831 = vmatprep.mubr.bf16.mxu0 %v111
    %1832 = vmatmul.mubr.bf16.gmra.mrb[0].mxu0 %v110
    %v1833 = vpop.f32.mrb[0].mxu0
    %v1834 = vadd.f32 %v1791, %v1833
    %v1835 = vpop.f32.mrb[0].mxu0
    %v1836 = vadd.f32 %v1793, %v1835
    %v1837 = vpop.f32.mrb[0].mxu0
    %v1838 = vadd.f32 %v1795, %v1837
    %v1839 = vpop.f32.mrb[0].mxu0
    %v1840 = vadd.f32 %v1797, %v1839
    %1841 = vdwg.mxu0
    %1842 = vmatprep.subr.bf16.mxu0 %v1161
    %1843 = vmatpush1.bf16.msra.mxu0 %v1160
    %1844 = vmatprep.subr.bf16.mxu0 %v1165
    %1845 = vmatpush1.bf16.msra.mxu0 %v1164
    %1846 = vmatprep.subr.bf16.mxu0 %v1169
    %1847 = vmatpush1.bf16.msra.mxu0 %v1168
    %1848 = vmatprep.subr.bf16.mxu0 %v1173
    %1849 = vmatpush1.bf16.msra.mxu0 %v1172
    %1850 = vmatprep.subr.bf16.mxu0 %v1177
    %1851 = vmatpush1.bf16.msra.mxu0 %v1176
    %1852 = vmatprep.subr.bf16.mxu0 %v1181
    %1853 = vmatpush1.bf16.msra.mxu0 %v1180
    %1854 = vmatprep.subr.bf16.mxu0 %v1185
    %1855 = vmatpush1.bf16.msra.mxu0 %v1184
    %1856 = vmatprep.subr.bf16.mxu0 %v1189
    %1857 = vmatpush1.bf16.msra.mxu0 %v1188
    %1858 = vmatprep.subr.bf16.mxu0 %v1193
    %1859 = vmatpush1.bf16.msra.mxu0 %v1192
    %1860 = vmatprep.subr.bf16.mxu0 %v1197
    %1861 = vmatpush1.bf16.msra.mxu0 %v1196
    %1862 = vmatprep.subr.bf16.mxu0 %v1201
    %1863 = vmatpush1.bf16.msra.mxu0 %v1200
    %1864 = vmatprep.subr.bf16.mxu0 %v1205
    %1865 = vmatpush1.bf16.msra.mxu0 %v1204
    %1866 = vmatprep.subr.bf16.mxu0 %v1209
    %1867 = vmatpush1.bf16.msra.mxu0 %v1208
    %1868 = vmatprep.subr.bf16.mxu0 %v1213
    %1869 = vmatpush1.bf16.msra.mxu0 %v1212
    %1870 = vmatprep.subr.bf16.mxu0 %v1217
    %1871 = vmatpush1.bf16.msra.mxu0 %v1216
    %1872 = vmatprep.subr.bf16.mxu0 %v1221
    %1873 = vmatpush1.bf16.msra.mxu0 %v1220
    %1874 = vmatprep.mubr.bf16.mxu0 %v105
    %1875 = vmatmul.mubr.bf16.gmra.mrb[0].mxu0 %v104
    %v1876 = vpop.f32.mrb[0].mxu0
    %v1877 = vadd.f32 %v381, %v1876
    %v1878 = vpop.f32.mrb[0].mxu0
    %v1879 = vadd.f32 %v385, %v1878
    %v1880 = vpop.f32.mrb[0].mxu0
    %v1881 = vadd.f32 %v381, %v1880
    %v1882 = vpop.f32.mrb[0].mxu0
    %v1883 = vadd.f32 %v385, %v1882
    %1884 = vdwg.mxu0
    %1885 = vmatprep.subr.bf16.mxu0 %v1225
    %1886 = vmatpush1.bf16.msra.mxu0 %v1224
    %1887 = vmatprep.subr.bf16.mxu0 %v1229
    %1888 = vmatpush1.bf16.msra.mxu0 %v1228
    %1889 = vmatprep.subr.bf16.mxu0 %v1233
    %1890 = vmatpush1.bf16.msra.mxu0 %v1232
    %1891 = vmatprep.subr.bf16.mxu0 %v1237
    %1892 = vmatpush1.bf16.msra.mxu0 %v1236
    %1893 = vmatprep.subr.bf16.mxu0 %v1241
    %1894 = vmatpush1.bf16.msra.mxu0 %v1240
    %1895 = vmatprep.subr.bf16.mxu0 %v1245
    %1896 = vmatpush1.bf16.msra.mxu0 %v1244
    %1897 = vmatprep.subr.bf16.mxu0 %v1249
    %1898 = vmatpush1.bf16.msra.mxu0 %v1248
    %1899 = vmatprep.subr.bf16.mxu0 %v1253
    %1900 = vmatpush1.bf16.msra.mxu0 %v1252
    %1901 = vmatprep.subr.bf16.mxu0 %v1257
    %1902 = vmatpush1.bf16.msra.mxu0 %v1256
    %1903 = vmatprep.subr.bf16.mxu0 %v1261
    %1904 = vmatpush1.bf16.msra.mxu0 %v1260
    %1905 = vmatprep.subr.bf16.mxu0 %v1265
    %1906 = vmatpush1.bf16.msra.mxu0 %v1264
    %1907 = vmatprep.subr.bf16.mxu0 %v1269
    %1908 = vmatpush1.bf16.msra.mxu0 %v1268
    %1909 = vmatprep.subr.bf16.mxu0 %v1273
    %1910 = vmatpush1.bf16.msra.mxu0 %v1272
    %1911 = vmatprep.subr.bf16.mxu0 %v1277
    %1912 = vmatpush1.bf16.msra.mxu0 %v1276
    %1913 = vmatprep.subr.bf16.mxu0 %v1281
    %1914 = vmatpush1.bf16.msra.mxu0 %v1280
    %1915 = vmatprep.subr.bf16.mxu0 %v1285
    %1916 = vmatpush1.bf16.msra.mxu0 %v1284
    %1917 = vmatprep.mubr.bf16.mxu0 %v107
    %1918 = vmatmul.mubr.bf16.gmra.mrb[0].mxu0 %v106
    %v1919 = vpop.f32.mrb[0].mxu0
    %v1920 = vadd.f32 %v1877, %v1919
    %v1921 = vpop.f32.mrb[0].mxu0
    %v1922 = vadd.f32 %v1879, %v1921
    %v1923 = vpop.f32.mrb[0].mxu0
    %v1924 = vadd.f32 %v1881, %v1923
    %v1925 = vpop.f32.mrb[0].mxu0
    %v1926 = vadd.f32 %v1883, %v1925
    %1927 = vdwg.mxu0
    %1928 = vmatprep.subr.bf16.mxu0 %v1289
    %1929 = vmatpush1.bf16.msra.mxu0 %v1288
    %1930 = vmatprep.subr.bf16.mxu0 %v1293
    %1931 = vmatpush1.bf16.msra.mxu0 %v1292
    %1932 = vmatprep.subr.bf16.mxu0 %v1297
    %1933 = vmatpush1.bf16.msra.mxu0 %v1296
    %1934 = vmatprep.subr.bf16.mxu0 %v1301
    %1935 = vmatpush1.bf16.msra.mxu0 %v1300
    %1936 = vmatprep.subr.bf16.mxu0 %v1305
    %1937 = vmatpush1.bf16.msra.mxu0 %v1304
    %1938 = vmatprep.subr.bf16.mxu0 %v1309
    %1939 = vmatpush1.bf16.msra.mxu0 %v1308
    %1940 = vmatprep.subr.bf16.mxu0 %v1313
    %1941 = vmatpush1.bf16.msra.mxu0 %v1312
    %1942 = vmatprep.subr.bf16.mxu0 %v1317
    %1943 = vmatpush1.bf16.msra.mxu0 %v1316
    %1944 = vmatprep.subr.bf16.mxu0 %v1321
    %1945 = vmatpush1.bf16.msra.mxu0 %v1320
    %1946 = vmatprep.subr.bf16.mxu0 %v1325
    %1947 = vmatpush1.bf16.msra.mxu0 %v1324
    %1948 = vmatprep.subr.bf16.mxu0 %v1329
    %1949 = vmatpush1.bf16.msra.mxu0 %v1328
    %1950 = vmatprep.subr.bf16.mxu0 %v1333
    %1951 = vmatpush1.bf16.msra.mxu0 %v1332
    %1952 = vmatprep.subr.bf16.mxu0 %v1337
    %1953 = vmatpush1.bf16.msra.mxu0 %v1336
    %1954 = vmatprep.subr.bf16.mxu0 %v1341
    %1955 = vmatpush1.bf16.msra.mxu0 %v1340
    %1956 = vmatprep.subr.bf16.mxu0 %v1345
    %1957 = vmatpush1.bf16.msra.mxu0 %v1344
    %1958 = vmatprep.subr.bf16.mxu0 %v1349
    %1959 = vmatpush1.bf16.msra.mxu0 %v1348
    %1960 = vmatprep.mubr.bf16.mxu0 %v109
    %1961 = vmatmul.mubr.bf16.gmra.mrb[0].mxu0 %v108
    %v1962 = vpop.f32.mrb[0].mxu0
    %v1963 = vadd.f32 %v1920, %v1962
    %v1964 = vpop.f32.mrb[0].mxu0
    %v1965 = vadd.f32 %v1922, %v1964
    %v1966 = vpop.f32.mrb[0].mxu0
    %v1967 = vadd.f32 %v1924, %v1966
    %v1968 = vpop.f32.mrb[0].mxu0
    %v1969 = vadd.f32 %v1926, %v1968
    %1970 = vdwg.mxu0
    %1971 = vmatprep.subr.bf16.mxu0 %v1353
    %1972 = vmatpush1.bf16.msra.mxu0 %v1352
    %1973 = vmatprep.subr.bf16.mxu0 %v1357
    %1974 = vmatpush1.bf16.msra.mxu0 %v1356
    %1975 = vmatprep.subr.bf16.mxu0 %v1361
    %1976 = vmatpush1.bf16.msra.mxu0 %v1360
    %1977 = vmatprep.subr.bf16.mxu0 %v1365
    %1978 = vmatpush1.bf16.msra.mxu0 %v1364
    %1979 = vmatprep.subr.bf16.mxu0 %v1369
    %1980 = vmatpush1.bf16.msra.mxu0 %v1368
    %1981 = vmatprep.subr.bf16.mxu0 %v1373
    %1982 = vmatpush1.bf16.msra.mxu0 %v1372
    %1983 = vmatprep.subr.bf16.mxu0 %v1377
    %1984 = vmatpush1.bf16.msra.mxu0 %v1376
    %1985 = vmatprep.subr.bf16.mxu0 %v1381
    %1986 = vmatpush1.bf16.msra.mxu0 %v1380
    %1987 = vmatprep.subr.bf16.mxu0 %v1385
    %1988 = vmatpush1.bf16.msra.mxu0 %v1384
    %1989 = vmatprep.subr.bf16.mxu0 %v1389
    %1990 = vmatpush1.bf16.msra.mxu0 %v1388
    %1991 = vmatprep.subr.bf16.mxu0 %v1393
    %1992 = vmatpush1.bf16.msra.mxu0 %v1392
    %1993 = vmatprep.subr.bf16.mxu0 %v1397
    %1994 = vmatpush1.bf16.msra.mxu0 %v1396
    %1995 = vmatprep.subr.bf16.mxu0 %v1401
    %1996 = vmatpush1.bf16.msra.mxu0 %v1400
    %1997 = vmatprep.subr.bf16.mxu0 %v1405
    %1998 = vmatpush1.bf16.msra.mxu0 %v1404
    %1999 = vmatprep.subr.bf16.mxu0 %v1409
    %2000 = vmatpush1.bf16.msra.mxu0 %v1408
    %2001 = vmatprep.subr.bf16.mxu0 %v1413
    %2002 = vmatpush1.bf16.msra.mxu0 %v1412
    %2003 = vmatprep.mubr.bf16.mxu0 %v111
    %2004 = vmatmul.mubr.bf16.gmra.mrb[0].mxu0 %v110
    %v2005 = vpop.f32.mrb[0].mxu0
    %v2006 = vadd.f32 %v1963, %v2005
    %v2007 = vpop.f32.mrb[0].mxu0
    %v2008 = vadd.f32 %v1965, %v2007
    %v2009 = vpop.f32.mrb[0].mxu0
    %v2010 = vadd.f32 %v1967, %v2009
    %v2011 = vpop.f32.mrb[0].mxu0
    %v2012 = vadd.f32 %v1969, %v2011
    %2013 = vdwg.mxu0
    %v2014 = vpack.c.bf16 %v1838, %v1834
    %v2015 = vpack.c.bf16 %v1840, %v1836
    %v2016 = vpack.c.bf16 %v2010, %v2006
    %v2017 = vpack.c.bf16 %v2012, %v2008
    %v2018 = vld [vmem:[#allocation4] sm:$0xff]
    %v2019 = vld [vmem:[#allocation4 + $0x8] sm:$0xff]
    %v2020 = vld [vmem:[#allocation4 + $0x10] sm:$0xff]
    %v2021 = vld [vmem:[#allocation4 + $0x18] sm:$0xff]
    %v2022 = vld [vmem:[#allocation4 + $0x20] sm:$0xff]
    %v2023 = vld [vmem:[#allocation4 + $0x28] sm:$0xff]
    %v2024 = vld [vmem:[#allocation4 + $0x30] sm:$0xff]
    %v2025 = vld [vmem:[#allocation4 + $0x38] sm:$0xff]
    %v2026 = vld [vmem:[#allocation4 + $0x40] sm:$0xff]
    %v2027 = vld [vmem:[#allocation4 + $0x48] sm:$0xff]
    %v2028 = vld [vmem:[#allocation4 + $0x50] sm:$0xff]
    %v2029 = vld [vmem:[#allocation4 + $0x58] sm:$0xff]
    %v2030 = vld [vmem:[#allocation4 + $0x60] sm:$0xff]
    %v2031 = vld [vmem:[#allocation4 + $0x68] sm:$0xff]
    %v2032 = vld [vmem:[#allocation4 + $0x70] sm:$0xff]
    %v2033 = vld [vmem:[#allocation4 + $0x78] sm:$0xff]
    %v2034 = vld [vmem:[#allocation4 + $0x80] sm:$0xff]
    %v2035 = vld [vmem:[#allocation4 + $0x88] sm:$0xff]
    %v2036 = vld [vmem:[#allocation4 + $0x90] sm:$0xff]
    %v2037 = vld [vmem:[#allocation4 + $0x98] sm:$0xff]
    %v2038 = vld [vmem:[#allocation4 + $0xa0] sm:$0xff]
    %v2039 = vld [vmem:[#allocation4 + $0xa8] sm:$0xff]
    %v2040 = vld [vmem:[#allocation4 + $0xb0] sm:$0xff]
    %v2041 = vld [vmem:[#allocation4 + $0xb8] sm:$0xff]
    %v2042 = vld [vmem:[#allocation4 + $0xc0] sm:$0xff]
    %v2043 = vld [vmem:[#allocation4 + $0xc8] sm:$0xff]
    %v2044 = vld [vmem:[#allocation4 + $0xd0] sm:$0xff]
    %v2045 = vld [vmem:[#allocation4 + $0xd8] sm:$0xff]
    %v2046 = vld [vmem:[#allocation4 + $0xe0] sm:$0xff]
    %v2047 = vld [vmem:[#allocation4 + $0xe8] sm:$0xff]
    %v2048 = vld [vmem:[#allocation4 + $0xf0] sm:$0xff]
    %v2049 = vld [vmem:[#allocation4 + $0xf8] sm:$0xff]
    %v2050 = vld [vmem:[#allocation4 + $0x100] sm:$0xff]
    %v2051 = vld [vmem:[#allocation4 + $0x108] sm:$0xff]
    %v2052 = vld [vmem:[#allocation4 + $0x110] sm:$0xff]
    %v2053 = vld [vmem:[#allocation4 + $0x118] sm:$0xff]
    %v2054 = vld [vmem:[#allocation4 + $0x120] sm:$0xff]
    %v2055 = vld [vmem:[#allocation4 + $0x128] sm:$0xff]
    %v2056 = vld [vmem:[#allocation4 + $0x130] sm:$0xff]
    %v2057 = vld [vmem:[#allocation4 + $0x138] sm:$0xff]
    %v2058 = vld [vmem:[#allocation4 + $0x140] sm:$0xff]
    %v2059 = vld [vmem:[#allocation4 + $0x148] sm:$0xff]
    %v2060 = vld [vmem:[#allocation4 + $0x150] sm:$0xff]
    %v2061 = vld [vmem:[#allocation4 + $0x158] sm:$0xff]
    %v2062 = vld [vmem:[#allocation4 + $0x160] sm:$0xff]
    %v2063 = vld [vmem:[#allocation4 + $0x168] sm:$0xff]
    %v2064 = vld [vmem:[#allocation4 + $0x170] sm:$0xff]
    %v2065 = vld [vmem:[#allocation4 + $0x178] sm:$0xff]
    %v2066 = vld [vmem:[#allocation4 + $0x180] sm:$0xff]
    %v2067 = vld [vmem:[#allocation4 + $0x188] sm:$0xff]
    %v2068 = vld [vmem:[#allocation4 + $0x190] sm:$0xff]
    %v2069 = vld [vmem:[#allocation4 + $0x198] sm:$0xff]
    %v2070 = vld [vmem:[#allocation4 + $0x1a0] sm:$0xff]
    %v2071 = vld [vmem:[#allocation4 + $0x1a8] sm:$0xff]
    %v2072 = vld [vmem:[#allocation4 + $0x1b0] sm:$0xff]
    %v2073 = vld [vmem:[#allocation4 + $0x1b8] sm:$0xff]
    %v2074 = vld [vmem:[#allocation4 + $0x1c0] sm:$0xff]
    %v2075 = vld [vmem:[#allocation4 + $0x1c8] sm:$0xff]
    %v2076 = vld [vmem:[#allocation4 + $0x1d0] sm:$0xff]
    %v2077 = vld [vmem:[#allocation4 + $0x1d8] sm:$0xff]
    %v2078 = vld [vmem:[#allocation4 + $0x1e0] sm:$0xff]
    %v2079 = vld [vmem:[#allocation4 + $0x1e8] sm:$0xff]
    %v2080 = vld [vmem:[#allocation4 + $0x1f0] sm:$0xff]
    %v2081 = vld [vmem:[#allocation4 + $0x1f8] sm:$0xff]
    %v2082 = vld [vmem:[#allocation4 + $0x200] sm:$0xff]
    %v2083 = vld [vmem:[#allocation4 + $0x208] sm:$0xff]
    %v2084 = vld [vmem:[#allocation4 + $0x210] sm:$0xff]
    %v2085 = vld [vmem:[#allocation4 + $0x218] sm:$0xff]
    %v2086 = vld [vmem:[#allocation4 + $0x220] sm:$0xff]
    %v2087 = vld [vmem:[#allocation4 + $0x228] sm:$0xff]
    %v2088 = vld [vmem:[#allocation4 + $0x230] sm:$0xff]
    %v2089 = vld [vmem:[#allocation4 + $0x238] sm:$0xff]
    %v2090 = vld [vmem:[#allocation4 + $0x240] sm:$0xff]
    %v2091 = vld [vmem:[#allocation4 + $0x248] sm:$0xff]
    %v2092 = vld [vmem:[#allocation4 + $0x250] sm:$0xff]
    %v2093 = vld [vmem:[#allocation4 + $0x258] sm:$0xff]
    %v2094 = vld [vmem:[#allocation4 + $0x260] sm:$0xff]
    %v2095 = vld [vmem:[#allocation4 + $0x268] sm:$0xff]
    %v2096 = vld [vmem:[#allocation4 + $0x270] sm:$0xff]
    %v2097 = vld [vmem:[#allocation4 + $0x278] sm:$0xff]
    %v2098 = vld [vmem:[#allocation4 + $0x280] sm:$0xff]
    %v2099 = vld [vmem:[#allocation4 + $0x288] sm:$0xff]
    %v2100 = vld [vmem:[#allocation4 + $0x290] sm:$0xff]
    %v2101 = vld [vmem:[#allocation4 + $0x298] sm:$0xff]
    %v2102 = vld [vmem:[#allocation4 + $0x2a0] sm:$0xff]
    %v2103 = vld [vmem:[#allocation4 + $0x2a8] sm:$0xff]
    %v2104 = vld [vmem:[#allocation4 + $0x2b0] sm:$0xff]
    %v2105 = vld [vmem:[#allocation4 + $0x2b8] sm:$0xff]
    %v2106 = vld [vmem:[#allocation4 + $0x2c0] sm:$0xff]
    %v2107 = vld [vmem:[#allocation4 + $0x2c8] sm:$0xff]
    %v2108 = vld [vmem:[#allocation4 + $0x2d0] sm:$0xff]
    %v2109 = vld [vmem:[#allocation4 + $0x2d8] sm:$0xff]
    %v2110 = vld [vmem:[#allocation4 + $0x2e0] sm:$0xff]
    %v2111 = vld [vmem:[#allocation4 + $0x2e8] sm:$0xff]
    %v2112 = vld [vmem:[#allocation4 + $0x2f0] sm:$0xff]
    %v2113 = vld [vmem:[#allocation4 + $0x2f8] sm:$0xff]
    %v2114 = vld [vmem:[#allocation4 + $0x300] sm:$0xff]
    %v2115 = vld [vmem:[#allocation4 + $0x308] sm:$0xff]
    %v2116 = vld [vmem:[#allocation4 + $0x310] sm:$0xff]
    %v2117 = vld [vmem:[#allocation4 + $0x318] sm:$0xff]
    %v2118 = vld [vmem:[#allocation4 + $0x320] sm:$0xff]
    %v2119 = vld [vmem:[#allocation4 + $0x328] sm:$0xff]
    %v2120 = vld [vmem:[#allocation4 + $0x330] sm:$0xff]
    %v2121 = vld [vmem:[#allocation4 + $0x338] sm:$0xff]
    %v2122 = vld [vmem:[#allocation4 + $0x340] sm:$0xff]
    %v2123 = vld [vmem:[#allocation4 + $0x348] sm:$0xff]
    %v2124 = vld [vmem:[#allocation4 + $0x350] sm:$0xff]
    %v2125 = vld [vmem:[#allocation4 + $0x358] sm:$0xff]
    %v2126 = vld [vmem:[#allocation4 + $0x360] sm:$0xff]
    %v2127 = vld [vmem:[#allocation4 + $0x368] sm:$0xff]
    %v2128 = vld [vmem:[#allocation4 + $0x370] sm:$0xff]
    %v2129 = vld [vmem:[#allocation4 + $0x378] sm:$0xff]
    %v2130 = vld [vmem:[#allocation4 + $0x380] sm:$0xff]
    %v2131 = vld [vmem:[#allocation4 + $0x388] sm:$0xff]
    %v2132 = vld [vmem:[#allocation4 + $0x390] sm:$0xff]
    %v2133 = vld [vmem:[#allocation4 + $0x398] sm:$0xff]
    %v2134 = vld [vmem:[#allocation4 + $0x3a0] sm:$0xff]
    %v2135 = vld [vmem:[#allocation4 + $0x3a8] sm:$0xff]
    %v2136 = vld [vmem:[#allocation4 + $0x3b0] sm:$0xff]
    %v2137 = vld [vmem:[#allocation4 + $0x3b8] sm:$0xff]
    %v2138 = vld [vmem:[#allocation4 + $0x3c0] sm:$0xff]
    %v2139 = vld [vmem:[#allocation4 + $0x3c8] sm:$0xff]
    %v2140 = vld [vmem:[#allocation4 + $0x3d0] sm:$0xff]
    %v2141 = vld [vmem:[#allocation4 + $0x3d8] sm:$0xff]
    %v2142 = vld [vmem:[#allocation4 + $0x3e0] sm:$0xff]
    %v2143 = vld [vmem:[#allocation4 + $0x3e8] sm:$0xff]
    %v2144 = vld [vmem:[#allocation4 + $0x3f0] sm:$0xff]
    %v2145 = vld [vmem:[#allocation4 + $0x3f8] sm:$0xff]
    %v2146 = vld [vmem:[%s4] sm:$0xf]
    %v2148 = vlaneseq
    %v2149 = vshrl.u32 %v2148, 7
    %v2150 = vsub.s32 0, %v2149
    %v2151 = vrot.slane %v2146, %v2150
    %v2152 = vlaneseq
    %v2153 = vshrl.u32 %v2152, 7
    %v2154 = vsub.s32 1, %v2153
    %v2155 = vrot.slane %v2146, %v2154
    %v2156 = vlaneseq
    %v2157 = vshrl.u32 %v2156, 7
    %v2158 = vsub.s32 2, %v2157
    %v2159 = vrot.slane %v2146, %v2158
    %v2160 = vlaneseq
    %v2161 = vshrl.u32 %v2160, 7
    %v2162 = vsub.s32 3, %v2161
    %v2163 = vrot.slane %v2146, %v2162
    %v2296 = vunpack.c.l.b16 %v2018
    %v2297 = vunpack.c.h.b16 %v2018
    %v2298 = vunpack.c.l.b16 %v2019
    %v2299 = vunpack.c.h.b16 %v2019
    %v2300 = vunpack.c.l.b16 %v2020
    %v2301 = vunpack.c.h.b16 %v2020
    %v2302 = vunpack.c.l.b16 %v2021
    %v2303 = vunpack.c.h.b16 %v2021
    %v2304 = vunpack.c.l.b16 %v2022
    %v2305 = vunpack.c.h.b16 %v2022
    %v2306 = vunpack.c.l.b16 %v2023
    %v2307 = vunpack.c.h.b16 %v2023
    %v2308 = vunpack.c.l.b16 %v2024
    %v2309 = vunpack.c.h.b16 %v2024
    %v2310 = vunpack.c.l.b16 %v2025
    %v2311 = vunpack.c.h.b16 %v2025
    %v2312 = vunpack.c.l.b16 %v2026
    %v2313 = vunpack.c.h.b16 %v2026
    %v2314 = vunpack.c.l.b16 %v2027
    %v2315 = vunpack.c.h.b16 %v2027
    %v2316 = vunpack.c.l.b16 %v2028
    %v2317 = vunpack.c.h.b16 %v2028
    %v2318 = vunpack.c.l.b16 %v2029
    %v2319 = vunpack.c.h.b16 %v2029
    %v2320 = vunpack.c.l.b16 %v2030
    %v2321 = vunpack.c.h.b16 %v2030
    %v2322 = vunpack.c.l.b16 %v2031
    %v2323 = vunpack.c.h.b16 %v2031
    %v2324 = vunpack.c.l.b16 %v2032
    %v2325 = vunpack.c.h.b16 %v2032
    %v2326 = vunpack.c.l.b16 %v2033
    %v2327 = vunpack.c.h.b16 %v2033
    %v2328 = vunpack.c.l.b16 %v2034
    %v2329 = vunpack.c.h.b16 %v2034
    %v2330 = vunpack.c.l.b16 %v2035
    %v2331 = vunpack.c.h.b16 %v2035
    %v2332 = vunpack.c.l.b16 %v2036
    %v2333 = vunpack.c.h.b16 %v2036
    %v2334 = vunpack.c.l.b16 %v2037
    %v2335 = vunpack.c.h.b16 %v2037
    %v2336 = vunpack.c.l.b16 %v2038
    %v2337 = vunpack.c.h.b16 %v2038
    %v2338 = vunpack.c.l.b16 %v2039
    %v2339 = vunpack.c.h.b16 %v2039
    %v2340 = vunpack.c.l.b16 %v2040
    %v2341 = vunpack.c.h.b16 %v2040
    %v2342 = vunpack.c.l.b16 %v2041
    %v2343 = vunpack.c.h.b16 %v2041
    %v2344 = vunpack.c.l.b16 %v2042
    %v2345 = vunpack.c.h.b16 %v2042
    %v2346 = vunpack.c.l.b16 %v2043
    %v2347 = vunpack.c.h.b16 %v2043
    %v2348 = vunpack.c.l.b16 %v2044
    %v2349 = vunpack.c.h.b16 %v2044
    %v2350 = vunpack.c.l.b16 %v2045
    %v2351 = vunpack.c.h.b16 %v2045
    %v2352 = vunpack.c.l.b16 %v2046
    %v2353 = vunpack.c.h.b16 %v2046
    %v2354 = vunpack.c.l.b16 %v2047
    %v2355 = vunpack.c.h.b16 %v2047
    %v2356 = vunpack.c.l.b16 %v2048
    %v2357 = vunpack.c.h.b16 %v2048
    %v2358 = vunpack.c.l.b16 %v2049
    %v2359 = vunpack.c.h.b16 %v2049
    %v2360 = vunpack.c.l.b16 %v2050
    %v2361 = vunpack.c.h.b16 %v2050
    %v2362 = vunpack.c.l.b16 %v2051
    %v2363 = vunpack.c.h.b16 %v2051
    %v2364 = vunpack.c.l.b16 %v2052
    %v2365 = vunpack.c.h.b16 %v2052
    %v2366 = vunpack.c.l.b16 %v2053
    %v2367 = vunpack.c.h.b16 %v2053
    %v2368 = vunpack.c.l.b16 %v2054
    %v2369 = vunpack.c.h.b16 %v2054
    %v2370 = vunpack.c.l.b16 %v2055
    %v2371 = vunpack.c.h.b16 %v2055
    %v2372 = vunpack.c.l.b16 %v2056
    %v2373 = vunpack.c.h.b16 %v2056
    %v2374 = vunpack.c.l.b16 %v2057
    %v2375 = vunpack.c.h.b16 %v2057
    %v2376 = vunpack.c.l.b16 %v2058
    %v2377 = vunpack.c.h.b16 %v2058
    %v2378 = vunpack.c.l.b16 %v2059
    %v2379 = vunpack.c.h.b16 %v2059
    %v2380 = vunpack.c.l.b16 %v2060
    %v2381 = vunpack.c.h.b16 %v2060
    %v2382 = vunpack.c.l.b16 %v2061
    %v2383 = vunpack.c.h.b16 %v2061
    %v2384 = vunpack.c.l.b16 %v2062
    %v2385 = vunpack.c.h.b16 %v2062
    %v2386 = vunpack.c.l.b16 %v2063
    %v2387 = vunpack.c.h.b16 %v2063
    %v2388 = vunpack.c.l.b16 %v2064
    %v2389 = vunpack.c.h.b16 %v2064
    %v2390 = vunpack.c.l.b16 %v2065
    %v2391 = vunpack.c.h.b16 %v2065
    %v2392 = vunpack.c.l.b16 %v2066
    %v2393 = vunpack.c.h.b16 %v2066
    %v2394 = vunpack.c.l.b16 %v2067
    %v2395 = vunpack.c.h.b16 %v2067
    %v2396 = vunpack.c.l.b16 %v2068
    %v2397 = vunpack.c.h.b16 %v2068
    %v2398 = vunpack.c.l.b16 %v2069
    %v2399 = vunpack.c.h.b16 %v2069
    %v2400 = vunpack.c.l.b16 %v2070
    %v2401 = vunpack.c.h.b16 %v2070
    %v2402 = vunpack.c.l.b16 %v2071
    %v2403 = vunpack.c.h.b16 %v2071
    %v2404 = vunpack.c.l.b16 %v2072
    %v2405 = vunpack.c.h.b16 %v2072
    %v2406 = vunpack.c.l.b16 %v2073
    %v2407 = vunpack.c.h.b16 %v2073
    %v2408 = vunpack.c.l.b16 %v2074
    %v2409 = vunpack.c.h.b16 %v2074
    %v2410 = vunpack.c.l.b16 %v2075
    %v2411 = vunpack.c.h.b16 %v2075
    %v2412 = vunpack.c.l.b16 %v2076
    %v2413 = vunpack.c.h.b16 %v2076
    %v2414 = vunpack.c.l.b16 %v2077
    %v2415 = vunpack.c.h.b16 %v2077
    %v2416 = vunpack.c.l.b16 %v2078
    %v2417 = vunpack.c.h.b16 %v2078
    %v2418 = vunpack.c.l.b16 %v2079
    %v2419 = vunpack.c.h.b16 %v2079
    %v2420 = vunpack.c.l.b16 %v2080
    %v2421 = vunpack.c.h.b16 %v2080
    %v2422 = vunpack.c.l.b16 %v2081
    %v2423 = vunpack.c.h.b16 %v2081
    %v2424 = vunpack.c.l.b16 %v2082
    %v2425 = vunpack.c.h.b16 %v2082
    %v2426 = vunpack.c.l.b16 %v2083
    %v2427 = vunpack.c.h.b16 %v2083
    %v2428 = vunpack.c.l.b16 %v2084
    %v2429 = vunpack.c.h.b16 %v2084
    %v2430 = vunpack.c.l.b16 %v2085
    %v2431 = vunpack.c.h.b16 %v2085
    %v2432 = vunpack.c.l.b16 %v2086
    %v2433 = vunpack.c.h.b16 %v2086
    %v2434 = vunpack.c.l.b16 %v2087
    %v2435 = vunpack.c.h.b16 %v2087
    %v2436 = vunpack.c.l.b16 %v2088
    %v2437 = vunpack.c.h.b16 %v2088
    %v2438 = vunpack.c.l.b16 %v2089
    %v2439 = vunpack.c.h.b16 %v2089
    %v2440 = vunpack.c.l.b16 %v2090
    %v2441 = vunpack.c.h.b16 %v2090
    %v2442 = vunpack.c.l.b16 %v2091
    %v2443 = vunpack.c.h.b16 %v2091
    %v2444 = vunpack.c.l.b16 %v2092
    %v2445 = vunpack.c.h.b16 %v2092
    %v2446 = vunpack.c.l.b16 %v2093
    %v2447 = vunpack.c.h.b16 %v2093
    %v2448 = vunpack.c.l.b16 %v2094
    %v2449 = vunpack.c.h.b16 %v2094
    %v2450 = vunpack.c.l.b16 %v2095
    %v2451 = vunpack.c.h.b16 %v2095
    %v2452 = vunpack.c.l.b16 %v2096
    %v2453 = vunpack.c.h.b16 %v2096
    %v2454 = vunpack.c.l.b16 %v2097
    %v2455 = vunpack.c.h.b16 %v2097
    %v2456 = vunpack.c.l.b16 %v2098
    %v2457 = vunpack.c.h.b16 %v2098
    %v2458 = vunpack.c.l.b16 %v2099
    %v2459 = vunpack.c.h.b16 %v2099
    %v2460 = vunpack.c.l.b16 %v2100
    %v2461 = vunpack.c.h.b16 %v2100
    %v2462 = vunpack.c.l.b16 %v2101
    %v2463 = vunpack.c.h.b16 %v2101
    %v2464 = vunpack.c.l.b16 %v2102
    %v2465 = vunpack.c.h.b16 %v2102
    %v2466 = vunpack.c.l.b16 %v2103
    %v2467 = vunpack.c.h.b16 %v2103
    %v2468 = vunpack.c.l.b16 %v2104
    %v2469 = vunpack.c.h.b16 %v2104
    %v2470 = vunpack.c.l.b16 %v2105
    %v2471 = vunpack.c.h.b16 %v2105
    %v2472 = vunpack.c.l.b16 %v2106
    %v2473 = vunpack.c.h.b16 %v2106
    %v2474 = vunpack.c.l.b16 %v2107
    %v2475 = vunpack.c.h.b16 %v2107
    %v2476 = vunpack.c.l.b16 %v2108
    %v2477 = vunpack.c.h.b16 %v2108
    %v2478 = vunpack.c.l.b16 %v2109
    %v2479 = vunpack.c.h.b16 %v2109
    %v2480 = vunpack.c.l.b16 %v2110
    %v2481 = vunpack.c.h.b16 %v2110
    %v2482 = vunpack.c.l.b16 %v2111
    %v2483 = vunpack.c.h.b16 %v2111
    %v2484 = vunpack.c.l.b16 %v2112
    %v2485 = vunpack.c.h.b16 %v2112
    %v2486 = vunpack.c.l.b16 %v2113
    %v2487 = vunpack.c.h.b16 %v2113
    %v2488 = vunpack.c.l.b16 %v2114
    %v2489 = vunpack.c.h.b16 %v2114
    %v2490 = vunpack.c.l.b16 %v2115
    %v2491 = vunpack.c.h.b16 %v2115
    %v2492 = vunpack.c.l.b16 %v2116
    %v2493 = vunpack.c.h.b16 %v2116
    %v2494 = vunpack.c.l.b16 %v2117
    %v2495 = vunpack.c.h.b16 %v2117
    %v2496 = vunpack.c.l.b16 %v2118
    %v2497 = vunpack.c.h.b16 %v2118
    %v2498 = vunpack.c.l.b16 %v2119
    %v2499 = vunpack.c.h.b16 %v2119
    %v2500 = vunpack.c.l.b16 %v2120
    %v2501 = vunpack.c.h.b16 %v2120
    %v2502 = vunpack.c.l.b16 %v2121
    %v2503 = vunpack.c.h.b16 %v2121
    %v2504 = vunpack.c.l.b16 %v2122
    %v2505 = vunpack.c.h.b16 %v2122
    %v2506 = vunpack.c.l.b16 %v2123
    %v2507 = vunpack.c.h.b16 %v2123
    %v2508 = vunpack.c.l.b16 %v2124
    %v2509 = vunpack.c.h.b16 %v2124
    %v2510 = vunpack.c.l.b16 %v2125
    %v2511 = vunpack.c.h.b16 %v2125
    %v2512 = vunpack.c.l.b16 %v2126
    %v2513 = vunpack.c.h.b16 %v2126
    %v2514 = vunpack.c.l.b16 %v2127
    %v2515 = vunpack.c.h.b16 %v2127
    %v2516 = vunpack.c.l.b16 %v2128
    %v2517 = vunpack.c.h.b16 %v2128
    %v2518 = vunpack.c.l.b16 %v2129
    %v2519 = vunpack.c.h.b16 %v2129
    %v2520 = vunpack.c.l.b16 %v2130
    %v2521 = vunpack.c.h.b16 %v2130
    %v2522 = vunpack.c.l.b16 %v2131
    %v2523 = vunpack.c.h.b16 %v2131
    %v2524 = vunpack.c.l.b16 %v2132
    %v2525 = vunpack.c.h.b16 %v2132
    %v2526 = vunpack.c.l.b16 %v2133
    %v2527 = vunpack.c.h.b16 %v2133
    %v2528 = vunpack.c.l.b16 %v2134
    %v2529 = vunpack.c.h.b16 %v2134
    %v2530 = vunpack.c.l.b16 %v2135
    %v2531 = vunpack.c.h.b16 %v2135
    %v2532 = vunpack.c.l.b16 %v2136
    %v2533 = vunpack.c.h.b16 %v2136
    %v2534 = vunpack.c.l.b16 %v2137
    %v2535 = vunpack.c.h.b16 %v2137
    %v2536 = vunpack.c.l.b16 %v2138
    %v2537 = vunpack.c.h.b16 %v2138
    %v2538 = vunpack.c.l.b16 %v2139
    %v2539 = vunpack.c.h.b16 %v2139
    %v2540 = vunpack.c.l.b16 %v2140
    %v2541 = vunpack.c.h.b16 %v2140
    %v2542 = vunpack.c.l.b16 %v2141
    %v2543 = vunpack.c.h.b16 %v2141
    %v2544 = vunpack.c.l.b16 %v2142
    %v2545 = vunpack.c.h.b16 %v2142
    %v2546 = vunpack.c.l.b16 %v2143
    %v2547 = vunpack.c.h.b16 %v2143
    %v2548 = vunpack.c.l.b16 %v2144
    %v2549 = vunpack.c.h.b16 %v2144
    %v2550 = vunpack.c.l.b16 %v2145
    %v2551 = vunpack.c.h.b16 %v2145
    %v2552 = vpack.c.b16 %v2300, %v2296
    %v2553 = vpack.c.b16 %v2301, %v2297
    %v2554 = vpack.c.b16 %v2302, %v2298
    %v2555 = vpack.c.b16 %v2303, %v2299
    %v2556 = vpack.c.b16 %v2308, %v2304
    %v2557 = vpack.c.b16 %v2309, %v2305
    %v2558 = vpack.c.b16 %v2310, %v2306
    %v2559 = vpack.c.b16 %v2311, %v2307
    %v2560 = vpack.c.b16 %v2316, %v2312
    %v2561 = vpack.c.b16 %v2317, %v2313
    %v2562 = vpack.c.b16 %v2318, %v2314
    %v2563 = vpack.c.b16 %v2319, %v2315
    %v2564 = vpack.c.b16 %v2324, %v2320
    %v2565 = vpack.c.b16 %v2325, %v2321
    %v2566 = vpack.c.b16 %v2326, %v2322
    %v2567 = vpack.c.b16 %v2327, %v2323
    %v2568 = vpack.c.b16 %v2332, %v2328
    %v2569 = vpack.c.b16 %v2333, %v2329
    %v2570 = vpack.c.b16 %v2334, %v2330
    %v2571 = vpack.c.b16 %v2335, %v2331
    %v2572 = vpack.c.b16 %v2340, %v2336
    %v2573 = vpack.c.b16 %v2341, %v2337
    %v2574 = vpack.c.b16 %v2342, %v2338
    %v2575 = vpack.c.b16 %v2343, %v2339
    %v2576 = vpack.c.b16 %v2348, %v2344
    %v2577 = vpack.c.b16 %v2349, %v2345
    %v2578 = vpack.c.b16 %v2350, %v2346
    %v2579 = vpack.c.b16 %v2351, %v2347
    %v2580 = vpack.c.b16 %v2356, %v2352
    %v2581 = vpack.c.b16 %v2357, %v2353
    %v2582 = vpack.c.b16 %v2358, %v2354
    %v2583 = vpack.c.b16 %v2359, %v2355
    %v2584 = vpack.c.b16 %v2364, %v2360
    %v2585 = vpack.c.b16 %v2365, %v2361
    %v2586 = vpack.c.b16 %v2366, %v2362
    %v2587 = vpack.c.b16 %v2367, %v2363
    %v2588 = vpack.c.b16 %v2372, %v2368
    %v2589 = vpack.c.b16 %v2373, %v2369
    %v2590 = vpack.c.b16 %v2374, %v2370
    %v2591 = vpack.c.b16 %v2375, %v2371
    %v2592 = vpack.c.b16 %v2380, %v2376
    %v2593 = vpack.c.b16 %v2381, %v2377
    %v2594 = vpack.c.b16 %v2382, %v2378
    %v2595 = vpack.c.b16 %v2383, %v2379
    %v2596 = vpack.c.b16 %v2388, %v2384
    %v2597 = vpack.c.b16 %v2389, %v2385
    %v2598 = vpack.c.b16 %v2390, %v2386
    %v2599 = vpack.c.b16 %v2391, %v2387
    %v2600 = vpack.c.b16 %v2396, %v2392
    %v2601 = vpack.c.b16 %v2397, %v2393
    %v2602 = vpack.c.b16 %v2398, %v2394
    %v2603 = vpack.c.b16 %v2399, %v2395
    %v2604 = vpack.c.b16 %v2404, %v2400
    %v2605 = vpack.c.b16 %v2405, %v2401
    %v2606 = vpack.c.b16 %v2406, %v2402
    %v2607 = vpack.c.b16 %v2407, %v2403
    %v2608 = vpack.c.b16 %v2412, %v2408
    %v2609 = vpack.c.b16 %v2413, %v2409
    %v2610 = vpack.c.b16 %v2414, %v2410
    %v2611 = vpack.c.b16 %v2415, %v2411
    %v2612 = vpack.c.b16 %v2420, %v2416
    %v2613 = vpack.c.b16 %v2421, %v2417
    %v2614 = vpack.c.b16 %v2422, %v2418
    %v2615 = vpack.c.b16 %v2423, %v2419
    %v2616 = vpack.c.b16 %v2428, %v2424
    %v2617 = vpack.c.b16 %v2429, %v2425
    %v2618 = vpack.c.b16 %v2430, %v2426
    %v2619 = vpack.c.b16 %v2431, %v2427
    %v2620 = vpack.c.b16 %v2436, %v2432
    %v2621 = vpack.c.b16 %v2437, %v2433
    %v2622 = vpack.c.b16 %v2438, %v2434
    %v2623 = vpack.c.b16 %v2439, %v2435
    %v2624 = vpack.c.b16 %v2444, %v2440
    %v2625 = vpack.c.b16 %v2445, %v2441
    %v2626 = vpack.c.b16 %v2446, %v2442
    %v2627 = vpack.c.b16 %v2447, %v2443
    %v2628 = vpack.c.b16 %v2452, %v2448
    %v2629 = vpack.c.b16 %v2453, %v2449
    %v2630 = vpack.c.b16 %v2454, %v2450
    %v2631 = vpack.c.b16 %v2455, %v2451
    %v2632 = vpack.c.b16 %v2460, %v2456
    %v2633 = vpack.c.b16 %v2461, %v2457
    %v2634 = vpack.c.b16 %v2462, %v2458
    %v2635 = vpack.c.b16 %v2463, %v2459
    %v2636 = vpack.c.b16 %v2468, %v2464
    %v2637 = vpack.c.b16 %v2469, %v2465
    %v2638 = vpack.c.b16 %v2470, %v2466
    %v2639 = vpack.c.b16 %v2471, %v2467
    %v2640 = vpack.c.b16 %v2476, %v2472
    %v2641 = vpack.c.b16 %v2477, %v2473
    %v2642 = vpack.c.b16 %v2478, %v2474
    %v2643 = vpack.c.b16 %v2479, %v2475
    %v2644 = vpack.c.b16 %v2484, %v2480
    %v2645 = vpack.c.b16 %v2485, %v2481
    %v2646 = vpack.c.b16 %v2486, %v2482
    %v2647 = vpack.c.b16 %v2487, %v2483
    %v2648 = vpack.c.b16 %v2492, %v2488
    %v2649 = vpack.c.b16 %v2493, %v2489
    %v2650 = vpack.c.b16 %v2494, %v2490
    %v2651 = vpack.c.b16 %v2495, %v2491
    %v2652 = vpack.c.b16 %v2500, %v2496
    %v2653 = vpack.c.b16 %v2501, %v2497
    %v2654 = vpack.c.b16 %v2502, %v2498
    %v2655 = vpack.c.b16 %v2503, %v2499
    %v2656 = vpack.c.b16 %v2508, %v2504
    %v2657 = vpack.c.b16 %v2509, %v2505
    %v2658 = vpack.c.b16 %v2510, %v2506
    %v2659 = vpack.c.b16 %v2511, %v2507
    %v2660 = vpack.c.b16 %v2516, %v2512
    %v2661 = vpack.c.b16 %v2517, %v2513
    %v2662 = vpack.c.b16 %v2518, %v2514
    %v2663 = vpack.c.b16 %v2519, %v2515
    %v2664 = vpack.c.b16 %v2524, %v2520
    %v2665 = vpack.c.b16 %v2525, %v2521
    %v2666 = vpack.c.b16 %v2526, %v2522
    %v2667 = vpack.c.b16 %v2527, %v2523
    %v2668 = vpack.c.b16 %v2532, %v2528
    %v2669 = vpack.c.b16 %v2533, %v2529
    %v2670 = vpack.c.b16 %v2534, %v2530
    %v2671 = vpack.c.b16 %v2535, %v2531
    %v2672 = vpack.c.b16 %v2540, %v2536
    %v2673 = vpack.c.b16 %v2541, %v2537
    %v2674 = vpack.c.b16 %v2542, %v2538
    %v2675 = vpack.c.b16 %v2543, %v2539
    %v2676 = vpack.c.b16 %v2548, %v2544
    %v2677 = vpack.c.b16 %v2549, %v2545
    %v2678 = vpack.c.b16 %v2550, %v2546
    %v2679 = vpack.c.b16 %v2551, %v2547
    %2808 = vmatprep.subr.bf16.mxu0 %v2553
    %2809 = vmatpush1.bf16.msra.mxu0 %v2552
    %2810 = vmatprep.subr.bf16.mxu0 %v2557
    %2811 = vmatpush1.bf16.msra.mxu0 %v2556
    %2812 = vmatprep.subr.bf16.mxu0 %v2561
    %2813 = vmatpush1.bf16.msra.mxu0 %v2560
    %2814 = vmatprep.subr.bf16.mxu0 %v2565
    %2815 = vmatpush1.bf16.msra.mxu0 %v2564
    %2816 = vmatprep.subr.bf16.mxu0 %v2569
    %2817 = vmatpush1.bf16.msra.mxu0 %v2568
    %2818 = vmatprep.subr.bf16.mxu0 %v2573
    %2819 = vmatpush1.bf16.msra.mxu0 %v2572
    %2820 = vmatprep.subr.bf16.mxu0 %v2577
    %2821 = vmatpush1.bf16.msra.mxu0 %v2576
    %2822 = vmatprep.subr.bf16.mxu0 %v2581
    %2823 = vmatpush1.bf16.msra.mxu0 %v2580
    %2824 = vmatprep.subr.bf16.mxu0 %v2585
    %2825 = vmatpush1.bf16.msra.mxu0 %v2584
    %2826 = vmatprep.subr.bf16.mxu0 %v2589
    %2827 = vmatpush1.bf16.msra.mxu0 %v2588
    %2828 = vmatprep.subr.bf16.mxu0 %v2593
    %2829 = vmatpush1.bf16.msra.mxu0 %v2592
    %2830 = vmatprep.subr.bf16.mxu0 %v2597
    %2831 = vmatpush1.bf16.msra.mxu0 %v2596
    %2832 = vmatprep.subr.bf16.mxu0 %v2601
    %2833 = vmatpush1.bf16.msra.mxu0 %v2600
    %2834 = vmatprep.subr.bf16.mxu0 %v2605
    %2835 = vmatpush1.bf16.msra.mxu0 %v2604
    %2836 = vmatprep.subr.bf16.mxu0 %v2609
    %2837 = vmatpush1.bf16.msra.mxu0 %v2608
    %2838 = vmatprep.subr.bf16.mxu0 %v2613
    %2839 = vmatpush1.bf16.msra.mxu0 %v2612
    %2840 = vmatprep.mubr.bf16.mxu0 %v2015
    %2841 = vmatmul.mubr.bf16.gmra.mrb[0].mxu0 %v2014
    %v2842 = vpop.f32.mrb[0].mxu0
    %v2843 = vadd.f32 %v2151, %v2842
    %v2844 = vpop.f32.mrb[0].mxu0
    %v2845 = vadd.f32 %v2155, %v2844
    %v2846 = vpop.f32.mrb[0].mxu0
    %v2847 = vadd.f32 %v2151, %v2846
    %v2848 = vpop.f32.mrb[0].mxu0
    %v2849 = vadd.f32 %v2155, %v2848
    %2850 = vdwg.mxu0
    %2851 = vmatprep.subr.bf16.mxu0 %v2617
    %2852 = vmatpush1.bf16.msra.mxu0 %v2616
    %2853 = vmatprep.subr.bf16.mxu0 %v2621
    %2854 = vmatpush1.bf16.msra.mxu0 %v2620
    %2855 = vmatprep.subr.bf16.mxu0 %v2625
    %2856 = vmatpush1.bf16.msra.mxu0 %v2624
    %2857 = vmatprep.subr.bf16.mxu0 %v2629
    %2858 = vmatpush1.bf16.msra.mxu0 %v2628
    %2859 = vmatprep.subr.bf16.mxu0 %v2633
    %2860 = vmatpush1.bf16.msra.mxu0 %v2632
    %2861 = vmatprep.subr.bf16.mxu0 %v2637
    %2862 = vmatpush1.bf16.msra.mxu0 %v2636
    %2863 = vmatprep.subr.bf16.mxu0 %v2641
    %2864 = vmatpush1.bf16.msra.mxu0 %v2640
    %2865 = vmatprep.subr.bf16.mxu0 %v2645
    %2866 = vmatpush1.bf16.msra.mxu0 %v2644
    %2867 = vmatprep.subr.bf16.mxu0 %v2649
    %2868 = vmatpush1.bf16.msra.mxu0 %v2648
    %2869 = vmatprep.subr.bf16.mxu0 %v2653
    %2870 = vmatpush1.bf16.msra.mxu0 %v2652
    %2871 = vmatprep.subr.bf16.mxu0 %v2657
    %2872 = vmatpush1.bf16.msra.mxu0 %v2656
    %2873 = vmatprep.subr.bf16.mxu0 %v2661
    %2874 = vmatpush1.bf16.msra.mxu0 %v2660
    %2875 = vmatprep.subr.bf16.mxu0 %v2665
    %2876 = vmatpush1.bf16.msra.mxu0 %v2664
    %2877 = vmatprep.subr.bf16.mxu0 %v2669
    %2878 = vmatpush1.bf16.msra.mxu0 %v2668
    %2879 = vmatprep.subr.bf16.mxu0 %v2673
    %2880 = vmatpush1.bf16.msra.mxu0 %v2672
    %2881 = vmatprep.subr.bf16.mxu0 %v2677
    %2882 = vmatpush1.bf16.msra.mxu0 %v2676
    %2883 = vmatprep.mubr.bf16.mxu0 %v2017
    %2884 = vmatmul.mubr.bf16.gmra.mrb[0].mxu0 %v2016
    %v2885 = vpop.f32.mrb[0].mxu0
    %v2886 = vadd.f32 %v2843, %v2885
    %v2887 = vpop.f32.mrb[0].mxu0
    %v2888 = vadd.f32 %v2845, %v2887
    %v2889 = vpop.f32.mrb[0].mxu0
    %v2890 = vadd.f32 %v2847, %v2889
    %v2891 = vpop.f32.mrb[0].mxu0
    %v2892 = vadd.f32 %v2849, %v2891
    %2893 = vdwg.mxu0
    %2894 = vmatprep.subr.bf16.mxu0 %v2555
    %2895 = vmatpush1.bf16.msra.mxu0 %v2554
    %2896 = vmatprep.subr.bf16.mxu0 %v2559
    %2897 = vmatpush1.bf16.msra.mxu0 %v2558
    %2898 = vmatprep.subr.bf16.mxu0 %v2563
    %2899 = vmatpush1.bf16.msra.mxu0 %v2562
    %2900 = vmatprep.subr.bf16.mxu0 %v2567
    %2901 = vmatpush1.bf16.msra.mxu0 %v2566
    %2902 = vmatprep.subr.bf16.mxu0 %v2571
    %2903 = vmatpush1.bf16.msra.mxu0 %v2570
    %2904 = vmatprep.subr.bf16.mxu0 %v2575
    %2905 = vmatpush1.bf16.msra.mxu0 %v2574
    %2906 = vmatprep.subr.bf16.mxu0 %v2579
    %2907 = vmatpush1.bf16.msra.mxu0 %v2578
    %2908 = vmatprep.subr.bf16.mxu0 %v2583
    %2909 = vmatpush1.bf16.msra.mxu0 %v2582
    %2910 = vmatprep.subr.bf16.mxu0 %v2587
    %2911 = vmatpush1.bf16.msra.mxu0 %v2586
    %2912 = vmatprep.subr.bf16.mxu0 %v2591
    %2913 = vmatpush1.bf16.msra.mxu0 %v2590
    %2914 = vmatprep.subr.bf16.mxu0 %v2595
    %2915 = vmatpush1.bf16.msra.mxu0 %v2594
    %2916 = vmatprep.subr.bf16.mxu0 %v2599
    %2917 = vmatpush1.bf16.msra.mxu0 %v2598
    %2918 = vmatprep.subr.bf16.mxu0 %v2603
    %2919 = vmatpush1.bf16.msra.mxu0 %v2602
    %2920 = vmatprep.subr.bf16.mxu0 %v2607
    %2921 = vmatpush1.bf16.msra.mxu0 %v2606
    %2922 = vmatprep.subr.bf16.mxu0 %v2611
    %2923 = vmatpush1.bf16.msra.mxu0 %v2610
    %2924 = vmatprep.subr.bf16.mxu0 %v2615
    %2925 = vmatpush1.bf16.msra.mxu0 %v2614
    %2926 = vmatprep.mubr.bf16.mxu0 %v2015
    %2927 = vmatmul.mubr.bf16.gmra.mrb[0].mxu0 %v2014
    %v2928 = vpop.f32.mrb[0].mxu0
    %v2929 = vadd.f32 %v2159, %v2928
    %v2930 = vpop.f32.mrb[0].mxu0
    %v2931 = vadd.f32 %v2163, %v2930
    %v2932 = vpop.f32.mrb[0].mxu0
    %v2933 = vadd.f32 %v2159, %v2932
    %v2934 = vpop.f32.mrb[0].mxu0
    %v2935 = vadd.f32 %v2163, %v2934
    %2936 = vdwg.mxu0
    %2937 = vmatprep.subr.bf16.mxu0 %v2619
    %2938 = vmatpush1.bf16.msra.mxu0 %v2618
    %2939 = vmatprep.subr.bf16.mxu0 %v2623
    %2940 = vmatpush1.bf16.msra.mxu0 %v2622
    %2941 = vmatprep.subr.bf16.mxu0 %v2627
    %2942 = vmatpush1.bf16.msra.mxu0 %v2626
    %2943 = vmatprep.subr.bf16.mxu0 %v2631
    %2944 = vmatpush1.bf16.msra.mxu0 %v2630
    %2945 = vmatprep.subr.bf16.mxu0 %v2635
    %2946 = vmatpush1.bf16.msra.mxu0 %v2634
    %2947 = vmatprep.subr.bf16.mxu0 %v2639
    %2948 = vmatpush1.bf16.msra.mxu0 %v2638
    %2949 = vmatprep.subr.bf16.mxu0 %v2643
    %2950 = vmatpush1.bf16.msra.mxu0 %v2642
    %2951 = vmatprep.subr.bf16.mxu0 %v2647
    %2952 = vmatpush1.bf16.msra.mxu0 %v2646
    %2953 = vmatprep.subr.bf16.mxu0 %v2651
    %2954 = vmatpush1.bf16.msra.mxu0 %v2650
    %2955 = vmatprep.subr.bf16.mxu0 %v2655
    %2956 = vmatpush1.bf16.msra.mxu0 %v2654
    %2957 = vmatprep.subr.bf16.mxu0 %v2659
    %2958 = vmatpush1.bf16.msra.mxu0 %v2658
    %2959 = vmatprep.subr.bf16.mxu0 %v2663
    %2960 = vmatpush1.bf16.msra.mxu0 %v2662
    %2961 = vmatprep.subr.bf16.mxu0 %v2667
    %2962 = vmatpush1.bf16.msra.mxu0 %v2666
    %2963 = vmatprep.subr.bf16.mxu0 %v2671
    %2964 = vmatpush1.bf16.msra.mxu0 %v2670
    %2965 = vmatprep.subr.bf16.mxu0 %v2675
    %2966 = vmatpush1.bf16.msra.mxu0 %v2674
    %2967 = vmatprep.subr.bf16.mxu0 %v2679
    %2968 = vmatpush1.bf16.msra.mxu0 %v2678
    %2969 = vmatprep.mubr.bf16.mxu0 %v2017
    %2970 = vmatmul.mubr.bf16.gmra.mrb[0].mxu0 %v2016
    %v2971 = vpop.f32.mrb[0].mxu0
    %v2972 = vadd.f32 %v2929, %v2971
    %v2973 = vpop.f32.mrb[0].mxu0
    %v2974 = vadd.f32 %v2931, %v2973
    %v2975 = vpop.f32.mrb[0].mxu0
    %v2976 = vadd.f32 %v2933, %v2975
    %v2977 = vpop.f32.mrb[0].mxu0
    %v2978 = vadd.f32 %v2935, %v2977
    %2979 = vdwg.mxu0
    %v2980 = vmax.f32 %v2886, 0.0
    %v2981 = vmax.f32 %v2888, 0.0
    %v2982 = vmax.f32 %v2972, 0.0
    %v2983 = vmax.f32 %v2974, 0.0
    %v2984 = vmax.f32 %v2890, 0.0
    %v2985 = vmax.f32 %v2892, 0.0
    %v2986 = vmax.f32 %v2976, 0.0
    %v2987 = vmax.f32 %v2978, 0.0
    %v2988 = vpack.c.bf16 %v2984, %v2980
    %v2989 = vpack.c.bf16 %v2985, %v2981
    %v2990 = vpack.c.bf16 %v2986, %v2982
    %v2991 = vpack.c.bf16 %v2987, %v2983
    %v2992 = vld [vmem:[#allocation6] sm:$0xff]
    %v2993 = vld [vmem:[#allocation6 + $0x8] sm:$0xff]
    %v2994 = vld [vmem:[#allocation6 + $0x10] sm:$0xff]
    %v2995 = vld [vmem:[#allocation6 + $0x18] sm:$0xff]
    %v2996 = vld [vmem:[#allocation6 + $0x20] sm:$0xff]
    %v2997 = vld [vmem:[#allocation6 + $0x28] sm:$0xff]
    %v2998 = vld [vmem:[#allocation6 + $0x30] sm:$0xff]
    %v2999 = vld [vmem:[#allocation6 + $0x38] sm:$0xff]
    %v3000 = vld [vmem:[#allocation6 + $0x40] sm:$0xff]
    %v3001 = vld [vmem:[#allocation6 + $0x48] sm:$0xff]
    %v3002 = vld [vmem:[#allocation6 + $0x50] sm:$0xff]
    %v3003 = vld [vmem:[#allocation6 + $0x58] sm:$0xff]
    %v3004 = vld [vmem:[#allocation6 + $0x60] sm:$0xff]
    %v3005 = vld [vmem:[#allocation6 + $0x68] sm:$0xff]
    %v3006 = vld [vmem:[#allocation6 + $0x70] sm:$0xff]
    %v3007 = vld [vmem:[#allocation6 + $0x78] sm:$0xff]
    %v3008 = vld [vmem:[#allocation6 + $0x80] sm:$0xff]
    %v3009 = vld [vmem:[#allocation6 + $0x88] sm:$0xff]
    %v3010 = vld [vmem:[#allocation6 + $0x90] sm:$0xff]
    %v3011 = vld [vmem:[#allocation6 + $0x98] sm:$0xff]
    %v3012 = vld [vmem:[#allocation6 + $0xa0] sm:$0xff]
    %v3013 = vld [vmem:[#allocation6 + $0xa8] sm:$0xff]
    %v3014 = vld [vmem:[#allocation6 + $0xb0] sm:$0xff]
    %v3015 = vld [vmem:[#allocation6 + $0xb8] sm:$0xff]
    %v3016 = vld [vmem:[#allocation6 + $0xc0] sm:$0xff]
    %v3017 = vld [vmem:[#allocation6 + $0xc8] sm:$0xff]
    %v3018 = vld [vmem:[#allocation6 + $0xd0] sm:$0xff]
    %v3019 = vld [vmem:[#allocation6 + $0xd8] sm:$0xff]
    %v3020 = vld [vmem:[#allocation6 + $0xe0] sm:$0xff]
    %v3021 = vld [vmem:[#allocation6 + $0xe8] sm:$0xff]
    %v3022 = vld [vmem:[#allocation6 + $0xf0] sm:$0xff]
    %v3023 = vld [vmem:[#allocation6 + $0xf8] sm:$0xff]
    %v3024 = vld [vmem:[#allocation6 + $0x100] sm:$0xff]
    %v3025 = vld [vmem:[#allocation6 + $0x108] sm:$0xff]
    %v3026 = vld [vmem:[#allocation6 + $0x110] sm:$0xff]
    %v3027 = vld [vmem:[#allocation6 + $0x118] sm:$0xff]
    %v3028 = vld [vmem:[#allocation6 + $0x120] sm:$0xff]
    %v3029 = vld [vmem:[#allocation6 + $0x128] sm:$0xff]
    %v3030 = vld [vmem:[#allocation6 + $0x130] sm:$0xff]
    %v3031 = vld [vmem:[#allocation6 + $0x138] sm:$0xff]
    %v3032 = vld [vmem:[#allocation6 + $0x140] sm:$0xff]
    %v3033 = vld [vmem:[#allocation6 + $0x148] sm:$0xff]
    %v3034 = vld [vmem:[#allocation6 + $0x150] sm:$0xff]
    %v3035 = vld [vmem:[#allocation6 + $0x158] sm:$0xff]
    %v3036 = vld [vmem:[#allocation6 + $0x160] sm:$0xff]
    %v3037 = vld [vmem:[#allocation6 + $0x168] sm:$0xff]
    %v3038 = vld [vmem:[#allocation6 + $0x170] sm:$0xff]
    %v3039 = vld [vmem:[#allocation6 + $0x178] sm:$0xff]
    %v3040 = vld [vmem:[#allocation6 + $0x180] sm:$0xff]
    %v3041 = vld [vmem:[#allocation6 + $0x188] sm:$0xff]
    %v3042 = vld [vmem:[#allocation6 + $0x190] sm:$0xff]
    %v3043 = vld [vmem:[#allocation6 + $0x198] sm:$0xff]
    %v3044 = vld [vmem:[#allocation6 + $0x1a0] sm:$0xff]
    %v3045 = vld [vmem:[#allocation6 + $0x1a8] sm:$0xff]
    %v3046 = vld [vmem:[#allocation6 + $0x1b0] sm:$0xff]
    %v3047 = vld [vmem:[#allocation6 + $0x1b8] sm:$0xff]
    %v3048 = vld [vmem:[#allocation6 + $0x1c0] sm:$0xff]
    %v3049 = vld [vmem:[#allocation6 + $0x1c8] sm:$0xff]
    %v3050 = vld [vmem:[#allocation6 + $0x1d0] sm:$0xff]
    %v3051 = vld [vmem:[#allocation6 + $0x1d8] sm:$0xff]
    %v3052 = vld [vmem:[#allocation6 + $0x1e0] sm:$0xff]
    %v3053 = vld [vmem:[#allocation6 + $0x1e8] sm:$0xff]
    %v3054 = vld [vmem:[#allocation6 + $0x1f0] sm:$0xff]
    %v3055 = vld [vmem:[#allocation6 + $0x1f8] sm:$0xff]
    %v3056 = vld [vmem:[#allocation6 + $0x200] sm:$0xff]
    %v3057 = vld [vmem:[#allocation6 + $0x208] sm:$0xff]
    %v3058 = vld [vmem:[#allocation6 + $0x210] sm:$0xff]
    %v3059 = vld [vmem:[#allocation6 + $0x218] sm:$0xff]
    %v3060 = vld [vmem:[#allocation6 + $0x220] sm:$0xff]
    %v3061 = vld [vmem:[#allocation6 + $0x228] sm:$0xff]
    %v3062 = vld [vmem:[#allocation6 + $0x230] sm:$0xff]
    %v3063 = vld [vmem:[#allocation6 + $0x238] sm:$0xff]
    %v3064 = vld [vmem:[#allocation6 + $0x240] sm:$0xff]
    %v3065 = vld [vmem:[#allocation6 + $0x248] sm:$0xff]
    %v3066 = vld [vmem:[#allocation6 + $0x250] sm:$0xff]
    %v3067 = vld [vmem:[#allocation6 + $0x258] sm:$0xff]
    %v3068 = vld [vmem:[#allocation6 + $0x260] sm:$0xff]
    %v3069 = vld [vmem:[#allocation6 + $0x268] sm:$0xff]
    %v3070 = vld [vmem:[#allocation6 + $0x270] sm:$0xff]
    %v3071 = vld [vmem:[#allocation6 + $0x278] sm:$0xff]
    %v3072 = vld [vmem:[#allocation6 + $0x280] sm:$0xff]
    %v3073 = vld [vmem:[#allocation6 + $0x288] sm:$0xff]
    %v3074 = vld [vmem:[#allocation6 + $0x290] sm:$0xff]
    %v3075 = vld [vmem:[#allocation6 + $0x298] sm:$0xff]
    %v3076 = vld [vmem:[#allocation6 + $0x2a0] sm:$0xff]
    %v3077 = vld [vmem:[#allocation6 + $0x2a8] sm:$0xff]
    %v3078 = vld [vmem:[#allocation6 + $0x2b0] sm:$0xff]
    %v3079 = vld [vmem:[#allocation6 + $0x2b8] sm:$0xff]
    %v3080 = vld [vmem:[#allocation6 + $0x2c0] sm:$0xff]
    %v3081 = vld [vmem:[#allocation6 + $0x2c8] sm:$0xff]
    %v3082 = vld [vmem:[#allocation6 + $0x2d0] sm:$0xff]
    %v3083 = vld [vmem:[#allocation6 + $0x2d8] sm:$0xff]
    %v3084 = vld [vmem:[#allocation6 + $0x2e0] sm:$0xff]
    %v3085 = vld [vmem:[#allocation6 + $0x2e8] sm:$0xff]
    %v3086 = vld [vmem:[#allocation6 + $0x2f0] sm:$0xff]
    %v3087 = vld [vmem:[#allocation6 + $0x2f8] sm:$0xff]
    %v3088 = vld [vmem:[#allocation6 + $0x300] sm:$0xff]
    %v3089 = vld [vmem:[#allocation6 + $0x308] sm:$0xff]
    %v3090 = vld [vmem:[#allocation6 + $0x310] sm:$0xff]
    %v3091 = vld [vmem:[#allocation6 + $0x318] sm:$0xff]
    %v3092 = vld [vmem:[#allocation6 + $0x320] sm:$0xff]
    %v3093 = vld [vmem:[#allocation6 + $0x328] sm:$0xff]
    %v3094 = vld [vmem:[#allocation6 + $0x330] sm:$0xff]
    %v3095 = vld [vmem:[#allocation6 + $0x338] sm:$0xff]
    %v3096 = vld [vmem:[#allocation6 + $0x340] sm:$0xff]
    %v3097 = vld [vmem:[#allocation6 + $0x348] sm:$0xff]
    %v3098 = vld [vmem:[#allocation6 + $0x350] sm:$0xff]
    %v3099 = vld [vmem:[#allocation6 + $0x358] sm:$0xff]
    %v3100 = vld [vmem:[#allocation6 + $0x360] sm:$0xff]
    %v3101 = vld [vmem:[#allocation6 + $0x368] sm:$0xff]
    %v3102 = vld [vmem:[#allocation6 + $0x370] sm:$0xff]
    %v3103 = vld [vmem:[#allocation6 + $0x378] sm:$0xff]
    %v3104 = vld [vmem:[#allocation6 + $0x380] sm:$0xff]
    %v3105 = vld [vmem:[#allocation6 + $0x388] sm:$0xff]
    %v3106 = vld [vmem:[#allocation6 + $0x390] sm:$0xff]
    %v3107 = vld [vmem:[#allocation6 + $0x398] sm:$0xff]
    %v3108 = vld [vmem:[#allocation6 + $0x3a0] sm:$0xff]
    %v3109 = vld [vmem:[#allocation6 + $0x3a8] sm:$0xff]
    %v3110 = vld [vmem:[#allocation6 + $0x3b0] sm:$0xff]
    %v3111 = vld [vmem:[#allocation6 + $0x3b8] sm:$0xff]
    %v3112 = vld [vmem:[#allocation6 + $0x3c0] sm:$0xff]
    %v3113 = vld [vmem:[#allocation6 + $0x3c8] sm:$0xff]
    %v3114 = vld [vmem:[#allocation6 + $0x3d0] sm:$0xff]
    %v3115 = vld [vmem:[#allocation6 + $0x3d8] sm:$0xff]
    %v3116 = vld [vmem:[#allocation6 + $0x3e0] sm:$0xff]
    %v3117 = vld [vmem:[#allocation6 + $0x3e8] sm:$0xff]
    %v3118 = vld [vmem:[#allocation6 + $0x3f0] sm:$0xff]
    %v3119 = vld [vmem:[#allocation6 + $0x3f8] sm:$0xff]
    %v3120 = vld [vmem:[%s6] sm:$0xf]
    %v3122 = vlaneseq
    %v3123 = vshrl.u32 %v3122, 7
    %v3124 = vsub.s32 0, %v3123
    %v3125 = vrot.slane %v3120, %v3124
    %v3126 = vlaneseq
    %v3127 = vshrl.u32 %v3126, 7
    %v3128 = vsub.s32 1, %v3127
    %v3129 = vrot.slane %v3120, %v3128
    %v3130 = vlaneseq
    %v3131 = vshrl.u32 %v3130, 7
    %v3132 = vsub.s32 2, %v3131
    %v3133 = vrot.slane %v3120, %v3132
    %v3134 = vlaneseq
    %v3135 = vshrl.u32 %v3134, 7
    %v3136 = vsub.s32 3, %v3135
    %v3137 = vrot.slane %v3120, %v3136
    %v3270 = vunpack.c.l.b16 %v2992
    %v3271 = vunpack.c.h.b16 %v2992
    %v3272 = vunpack.c.l.b16 %v2993
    %v3273 = vunpack.c.h.b16 %v2993
    %v3274 = vunpack.c.l.b16 %v2994
    %v3275 = vunpack.c.h.b16 %v2994
    %v3276 = vunpack.c.l.b16 %v2995
    %v3277 = vunpack.c.h.b16 %v2995
    %v3278 = vunpack.c.l.b16 %v2996
    %v3279 = vunpack.c.h.b16 %v2996
    %v3280 = vunpack.c.l.b16 %v2997
    %v3281 = vunpack.c.h.b16 %v2997
    %v3282 = vunpack.c.l.b16 %v2998
    %v3283 = vunpack.c.h.b16 %v2998
    %v3284 = vunpack.c.l.b16 %v2999
    %v3285 = vunpack.c.h.b16 %v2999
    %v3286 = vunpack.c.l.b16 %v3000
    %v3287 = vunpack.c.h.b16 %v3000
    %v3288 = vunpack.c.l.b16 %v3001
    %v3289 = vunpack.c.h.b16 %v3001
    %v3290 = vunpack.c.l.b16 %v3002
    %v3291 = vunpack.c.h.b16 %v3002
    %v3292 = vunpack.c.l.b16 %v3003
    %v3293 = vunpack.c.h.b16 %v3003
    %v3294 = vunpack.c.l.b16 %v3004
    %v3295 = vunpack.c.h.b16 %v3004
    %v3296 = vunpack.c.l.b16 %v3005
    %v3297 = vunpack.c.h.b16 %v3005
    %v3298 = vunpack.c.l.b16 %v3006
    %v3299 = vunpack.c.h.b16 %v3006
    %v3300 = vunpack.c.l.b16 %v3007
    %v3301 = vunpack.c.h.b16 %v3007
    %v3302 = vunpack.c.l.b16 %v3008
    %v3303 = vunpack.c.h.b16 %v3008
    %v3304 = vunpack.c.l.b16 %v3009
    %v3305 = vunpack.c.h.b16 %v3009
    %v3306 = vunpack.c.l.b16 %v3010
    %v3307 = vunpack.c.h.b16 %v3010
    %v3308 = vunpack.c.l.b16 %v3011
    %v3309 = vunpack.c.h.b16 %v3011
    %v3310 = vunpack.c.l.b16 %v3012
    %v3311 = vunpack.c.h.b16 %v3012
    %v3312 = vunpack.c.l.b16 %v3013
    %v3313 = vunpack.c.h.b16 %v3013
    %v3314 = vunpack.c.l.b16 %v3014
    %v3315 = vunpack.c.h.b16 %v3014
    %v3316 = vunpack.c.l.b16 %v3015
    %v3317 = vunpack.c.h.b16 %v3015
    %v3318 = vunpack.c.l.b16 %v3016
    %v3319 = vunpack.c.h.b16 %v3016
    %v3320 = vunpack.c.l.b16 %v3017
    %v3321 = vunpack.c.h.b16 %v3017
    %v3322 = vunpack.c.l.b16 %v3018
    %v3323 = vunpack.c.h.b16 %v3018
    %v3324 = vunpack.c.l.b16 %v3019
    %v3325 = vunpack.c.h.b16 %v3019
    %v3326 = vunpack.c.l.b16 %v3020
    %v3327 = vunpack.c.h.b16 %v3020
    %v3328 = vunpack.c.l.b16 %v3021
    %v3329 = vunpack.c.h.b16 %v3021
    %v3330 = vunpack.c.l.b16 %v3022
    %v3331 = vunpack.c.h.b16 %v3022
    %v3332 = vunpack.c.l.b16 %v3023
    %v3333 = vunpack.c.h.b16 %v3023
    %v3334 = vunpack.c.l.b16 %v3024
    %v3335 = vunpack.c.h.b16 %v3024
    %v3336 = vunpack.c.l.b16 %v3025
    %v3337 = vunpack.c.h.b16 %v3025
    %v3338 = vunpack.c.l.b16 %v3026
    %v3339 = vunpack.c.h.b16 %v3026
    %v3340 = vunpack.c.l.b16 %v3027
    %v3341 = vunpack.c.h.b16 %v3027
    %v3342 = vunpack.c.l.b16 %v3028
    %v3343 = vunpack.c.h.b16 %v3028
    %v3344 = vunpack.c.l.b16 %v3029
    %v3345 = vunpack.c.h.b16 %v3029
    %v3346 = vunpack.c.l.b16 %v3030
    %v3347 = vunpack.c.h.b16 %v3030
    %v3348 = vunpack.c.l.b16 %v3031
    %v3349 = vunpack.c.h.b16 %v3031
    %v3350 = vunpack.c.l.b16 %v3032
    %v3351 = vunpack.c.h.b16 %v3032
    %v3352 = vunpack.c.l.b16 %v3033
    %v3353 = vunpack.c.h.b16 %v3033
    %v3354 = vunpack.c.l.b16 %v3034
    %v3355 = vunpack.c.h.b16 %v3034
    %v3356 = vunpack.c.l.b16 %v3035
    %v3357 = vunpack.c.h.b16 %v3035
    %v3358 = vunpack.c.l.b16 %v3036
    %v3359 = vunpack.c.h.b16 %v3036
    %v3360 = vunpack.c.l.b16 %v3037
    %v3361 = vunpack.c.h.b16 %v3037
    %v3362 = vunpack.c.l.b16 %v3038
    %v3363 = vunpack.c.h.b16 %v3038
    %v3364 = vunpack.c.l.b16 %v3039
    %v3365 = vunpack.c.h.b16 %v3039
    %v3366 = vunpack.c.l.b16 %v3040
    %v3367 = vunpack.c.h.b16 %v3040
    %v3368 = vunpack.c.l.b16 %v3041
    %v3369 = vunpack.c.h.b16 %v3041
    %v3370 = vunpack.c.l.b16 %v3042
    %v3371 = vunpack.c.h.b16 %v3042
    %v3372 = vunpack.c.l.b16 %v3043
    %v3373 = vunpack.c.h.b16 %v3043
    %v3374 = vunpack.c.l.b16 %v3044
    %v3375 = vunpack.c.h.b16 %v3044
    %v3376 = vunpack.c.l.b16 %v3045
    %v3377 = vunpack.c.h.b16 %v3045
    %v3378 = vunpack.c.l.b16 %v3046
    %v3379 = vunpack.c.h.b16 %v3046
    %v3380 = vunpack.c.l.b16 %v3047
    %v3381 = vunpack.c.h.b16 %v3047
    %v3382 = vunpack.c.l.b16 %v3048
    %v3383 = vunpack.c.h.b16 %v3048
    %v3384 = vunpack.c.l.b16 %v3049
    %v3385 = vunpack.c.h.b16 %v3049
    %v3386 = vunpack.c.l.b16 %v3050
    %v3387 = vunpack.c.h.b16 %v3050
    %v3388 = vunpack.c.l.b16 %v3051
    %v3389 = vunpack.c.h.b16 %v3051
    %v3390 = vunpack.c.l.b16 %v3052
    %v3391 = vunpack.c.h.b16 %v3052
    %v3392 = vunpack.c.l.b16 %v3053
    %v3393 = vunpack.c.h.b16 %v3053
    %v3394 = vunpack.c.l.b16 %v3054
    %v3395 = vunpack.c.h.b16 %v3054
    %v3396 = vunpack.c.l.b16 %v3055
    %v3397 = vunpack.c.h.b16 %v3055
    %v3398 = vunpack.c.l.b16 %v3056
    %v3399 = vunpack.c.h.b16 %v3056
    %v3400 = vunpack.c.l.b16 %v3057
    %v3401 = vunpack.c.h.b16 %v3057
    %v3402 = vunpack.c.l.b16 %v3058
    %v3403 = vunpack.c.h.b16 %v3058
    %v3404 = vunpack.c.l.b16 %v3059
    %v3405 = vunpack.c.h.b16 %v3059
    %v3406 = vunpack.c.l.b16 %v3060
    %v3407 = vunpack.c.h.b16 %v3060
    %v3408 = vunpack.c.l.b16 %v3061
    %v3409 = vunpack.c.h.b16 %v3061
    %v3410 = vunpack.c.l.b16 %v3062
    %v3411 = vunpack.c.h.b16 %v3062
    %v3412 = vunpack.c.l.b16 %v3063
    %v3413 = vunpack.c.h.b16 %v3063
    %v3414 = vunpack.c.l.b16 %v3064
    %v3415 = vunpack.c.h.b16 %v3064
    %v3416 = vunpack.c.l.b16 %v3065
    %v3417 = vunpack.c.h.b16 %v3065
    %v3418 = vunpack.c.l.b16 %v3066
    %v3419 = vunpack.c.h.b16 %v3066
    %v3420 = vunpack.c.l.b16 %v3067
    %v3421 = vunpack.c.h.b16 %v3067
    %v3422 = vunpack.c.l.b16 %v3068
    %v3423 = vunpack.c.h.b16 %v3068
    %v3424 = vunpack.c.l.b16 %v3069
    %v3425 = vunpack.c.h.b16 %v3069
    %v3426 = vunpack.c.l.b16 %v3070
    %v3427 = vunpack.c.h.b16 %v3070
    %v3428 = vunpack.c.l.b16 %v3071
    %v3429 = vunpack.c.h.b16 %v3071
    %v3430 = vunpack.c.l.b16 %v3072
    %v3431 = vunpack.c.h.b16 %v3072
    %v3432 = vunpack.c.l.b16 %v3073
    %v3433 = vunpack.c.h.b16 %v3073
    %v3434 = vunpack.c.l.b16 %v3074
    %v3435 = vunpack.c.h.b16 %v3074
    %v3436 = vunpack.c.l.b16 %v3075
    %v3437 = vunpack.c.h.b16 %v3075
    %v3438 = vunpack.c.l.b16 %v3076
    %v3439 = vunpack.c.h.b16 %v3076
    %v3440 = vunpack.c.l.b16 %v3077
    %v3441 = vunpack.c.h.b16 %v3077
    %v3442 = vunpack.c.l.b16 %v3078
    %v3443 = vunpack.c.h.b16 %v3078
    %v3444 = vunpack.c.l.b16 %v3079
    %v3445 = vunpack.c.h.b16 %v3079
    %v3446 = vunpack.c.l.b16 %v3080
    %v3447 = vunpack.c.h.b16 %v3080
    %v3448 = vunpack.c.l.b16 %v3081
    %v3449 = vunpack.c.h.b16 %v3081
    %v3450 = vunpack.c.l.b16 %v3082
    %v3451 = vunpack.c.h.b16 %v3082
    %v3452 = vunpack.c.l.b16 %v3083
    %v3453 = vunpack.c.h.b16 %v3083
    %v3454 = vunpack.c.l.b16 %v3084
    %v3455 = vunpack.c.h.b16 %v3084
    %v3456 = vunpack.c.l.b16 %v3085
    %v3457 = vunpack.c.h.b16 %v3085
    %v3458 = vunpack.c.l.b16 %v3086
    %v3459 = vunpack.c.h.b16 %v3086
    %v3460 = vunpack.c.l.b16 %v3087
    %v3461 = vunpack.c.h.b16 %v3087
    %v3462 = vunpack.c.l.b16 %v3088
    %v3463 = vunpack.c.h.b16 %v3088
    %v3464 = vunpack.c.l.b16 %v3089
    %v3465 = vunpack.c.h.b16 %v3089
    %v3466 = vunpack.c.l.b16 %v3090
    %v3467 = vunpack.c.h.b16 %v3090
    %v3468 = vunpack.c.l.b16 %v3091
    %v3469 = vunpack.c.h.b16 %v3091
    %v3470 = vunpack.c.l.b16 %v3092
    %v3471 = vunpack.c.h.b16 %v3092
    %v3472 = vunpack.c.l.b16 %v3093
    %v3473 = vunpack.c.h.b16 %v3093
    %v3474 = vunpack.c.l.b16 %v3094
    %v3475 = vunpack.c.h.b16 %v3094
    %v3476 = vunpack.c.l.b16 %v3095
    %v3477 = vunpack.c.h.b16 %v3095
    %v3478 = vunpack.c.l.b16 %v3096
    %v3479 = vunpack.c.h.b16 %v3096
    %v3480 = vunpack.c.l.b16 %v3097
    %v3481 = vunpack.c.h.b16 %v3097
    %v3482 = vunpack.c.l.b16 %v3098
    %v3483 = vunpack.c.h.b16 %v3098
    %v3484 = vunpack.c.l.b16 %v3099
    %v3485 = vunpack.c.h.b16 %v3099
    %v3486 = vunpack.c.l.b16 %v3100
    %v3487 = vunpack.c.h.b16 %v3100
    %v3488 = vunpack.c.l.b16 %v3101
    %v3489 = vunpack.c.h.b16 %v3101
    %v3490 = vunpack.c.l.b16 %v3102
    %v3491 = vunpack.c.h.b16 %v3102
    %v3492 = vunpack.c.l.b16 %v3103
    %v3493 = vunpack.c.h.b16 %v3103
    %v3494 = vunpack.c.l.b16 %v3104
    %v3495 = vunpack.c.h.b16 %v3104
    %v3496 = vunpack.c.l.b16 %v3105
    %v3497 = vunpack.c.h.b16 %v3105
    %v3498 = vunpack.c.l.b16 %v3106
    %v3499 = vunpack.c.h.b16 %v3106
    %v3500 = vunpack.c.l.b16 %v3107
    %v3501 = vunpack.c.h.b16 %v3107
    %v3502 = vunpack.c.l.b16 %v3108
    %v3503 = vunpack.c.h.b16 %v3108
    %v3504 = vunpack.c.l.b16 %v3109
    %v3505 = vunpack.c.h.b16 %v3109
    %v3506 = vunpack.c.l.b16 %v3110
    %v3507 = vunpack.c.h.b16 %v3110
    %v3508 = vunpack.c.l.b16 %v3111
    %v3509 = vunpack.c.h.b16 %v3111
    %v3510 = vunpack.c.l.b16 %v3112
    %v3511 = vunpack.c.h.b16 %v3112
    %v3512 = vunpack.c.l.b16 %v3113
    %v3513 = vunpack.c.h.b16 %v3113
    %v3514 = vunpack.c.l.b16 %v3114
    %v3515 = vunpack.c.h.b16 %v3114
    %v3516 = vunpack.c.l.b16 %v3115
    %v3517 = vunpack.c.h.b16 %v3115
    %v3518 = vunpack.c.l.b16 %v3116
    %v3519 = vunpack.c.h.b16 %v3116
    %v3520 = vunpack.c.l.b16 %v3117
    %v3521 = vunpack.c.h.b16 %v3117
    %v3522 = vunpack.c.l.b16 %v3118
    %v3523 = vunpack.c.h.b16 %v3118
    %v3524 = vunpack.c.l.b16 %v3119
    %v3525 = vunpack.c.h.b16 %v3119
    %v3526 = vpack.c.b16 %v3274, %v3270
    %v3527 = vpack.c.b16 %v3275, %v3271
    %v3528 = vpack.c.b16 %v3276, %v3272
    %v3529 = vpack.c.b16 %v3277, %v3273
    %v3530 = vpack.c.b16 %v3282, %v3278
    %v3531 = vpack.c.b16 %v3283, %v3279
    %v3532 = vpack.c.b16 %v3284, %v3280
    %v3533 = vpack.c.b16 %v3285, %v3281
    %v3534 = vpack.c.b16 %v3290, %v3286
    %v3535 = vpack.c.b16 %v3291, %v3287
    %v3536 = vpack.c.b16 %v3292, %v3288
    %v3537 = vpack.c.b16 %v3293, %v3289
    %v3538 = vpack.c.b16 %v3298, %v3294
    %v3539 = vpack.c.b16 %v3299, %v3295
    %v3540 = vpack.c.b16 %v3300, %v3296
    %v3541 = vpack.c.b16 %v3301, %v3297
    %v3542 = vpack.c.b16 %v3306, %v3302
    %v3543 = vpack.c.b16 %v3307, %v3303
    %v3544 = vpack.c.b16 %v3308, %v3304
    %v3545 = vpack.c.b16 %v3309, %v3305
    %v3546 = vpack.c.b16 %v3314, %v3310
    %v3547 = vpack.c.b16 %v3315, %v3311
    %v3548 = vpack.c.b16 %v3316, %v3312
    %v3549 = vpack.c.b16 %v3317, %v3313
    %v3550 = vpack.c.b16 %v3322, %v3318
    %v3551 = vpack.c.b16 %v3323, %v3319
    %v3552 = vpack.c.b16 %v3324, %v3320
    %v3553 = vpack.c.b16 %v3325, %v3321
    %v3554 = vpack.c.b16 %v3330, %v3326
    %v3555 = vpack.c.b16 %v3331, %v3327
    %v3556 = vpack.c.b16 %v3332, %v3328
    %v3557 = vpack.c.b16 %v3333, %v3329
    %v3558 = vpack.c.b16 %v3338, %v3334
    %v3559 = vpack.c.b16 %v3339, %v3335
    %v3560 = vpack.c.b16 %v3340, %v3336
    %v3561 = vpack.c.b16 %v3341, %v3337
    %v3562 = vpack.c.b16 %v3346, %v3342
    %v3563 = vpack.c.b16 %v3347, %v3343
    %v3564 = vpack.c.b16 %v3348, %v3344
    %v3565 = vpack.c.b16 %v3349, %v3345
    %v3566 = vpack.c.b16 %v3354, %v3350
    %v3567 = vpack.c.b16 %v3355, %v3351
    %v3568 = vpack.c.b16 %v3356, %v3352
    %v3569 = vpack.c.b16 %v3357, %v3353
    %v3570 = vpack.c.b16 %v3362, %v3358
    %v3571 = vpack.c.b16 %v3363, %v3359
    %v3572 = vpack.c.b16 %v3364, %v3360
    %v3573 = vpack.c.b16 %v3365, %v3361
    %v3574 = vpack.c.b16 %v3370, %v3366
    %v3575 = vpack.c.b16 %v3371, %v3367
    %v3576 = vpack.c.b16 %v3372, %v3368
    %v3577 = vpack.c.b16 %v3373, %v3369
    %v3578 = vpack.c.b16 %v3378, %v3374
    %v3579 = vpack.c.b16 %v3379, %v3375
    %v3580 = vpack.c.b16 %v3380, %v3376
    %v3581 = vpack.c.b16 %v3381, %v3377
    %v3582 = vpack.c.b16 %v3386, %v3382
    %v3583 = vpack.c.b16 %v3387, %v3383
    %v3584 = vpack.c.b16 %v3388, %v3384
    %v3585 = vpack.c.b16 %v3389, %v3385
    %v3586 = vpack.c.b16 %v3394, %v3390
    %v3587 = vpack.c.b16 %v3395, %v3391
    %v3588 = vpack.c.b16 %v3396, %v3392
    %v3589 = vpack.c.b16 %v3397, %v3393
    %v3590 = vpack.c.b16 %v3402, %v3398
    %v3591 = vpack.c.b16 %v3403, %v3399
    %v3592 = vpack.c.b16 %v3404, %v3400
    %v3593 = vpack.c.b16 %v3405, %v3401
    %v3594 = vpack.c.b16 %v3410, %v3406
    %v3595 = vpack.c.b16 %v3411, %v3407
    %v3596 = vpack.c.b16 %v3412, %v3408
    %v3597 = vpack.c.b16 %v3413, %v3409
    %v3598 = vpack.c.b16 %v3418, %v3414
    %v3599 = vpack.c.b16 %v3419, %v3415
    %v3600 = vpack.c.b16 %v3420, %v3416
    %v3601 = vpack.c.b16 %v3421, %v3417
    %v3602 = vpack.c.b16 %v3426, %v3422
    %v3603 = vpack.c.b16 %v3427, %v3423
    %v3604 = vpack.c.b16 %v3428, %v3424
    %v3605 = vpack.c.b16 %v3429, %v3425
    %v3606 = vpack.c.b16 %v3434, %v3430
    %v3607 = vpack.c.b16 %v3435, %v3431
    %v3608 = vpack.c.b16 %v3436, %v3432
    %v3609 = vpack.c.b16 %v3437, %v3433
    %v3610 = vpack.c.b16 %v3442, %v3438
    %v3611 = vpack.c.b16 %v3443, %v3439
    %v3612 = vpack.c.b16 %v3444, %v3440
    %v3613 = vpack.c.b16 %v3445, %v3441
    %v3614 = vpack.c.b16 %v3450, %v3446
    %v3615 = vpack.c.b16 %v3451, %v3447
    %v3616 = vpack.c.b16 %v3452, %v3448
    %v3617 = vpack.c.b16 %v3453, %v3449
    %v3618 = vpack.c.b16 %v3458, %v3454
    %v3619 = vpack.c.b16 %v3459, %v3455
    %v3620 = vpack.c.b16 %v3460, %v3456
    %v3621 = vpack.c.b16 %v3461, %v3457
    %v3622 = vpack.c.b16 %v3466, %v3462
    %v3623 = vpack.c.b16 %v3467, %v3463
    %v3624 = vpack.c.b16 %v3468, %v3464
    %v3625 = vpack.c.b16 %v3469, %v3465
    %v3626 = vpack.c.b16 %v3474, %v3470
    %v3627 = vpack.c.b16 %v3475, %v3471
    %v3628 = vpack.c.b16 %v3476, %v3472
    %v3629 = vpack.c.b16 %v3477, %v3473
    %v3630 = vpack.c.b16 %v3482, %v3478
    %v3631 = vpack.c.b16 %v3483, %v3479
    %v3632 = vpack.c.b16 %v3484, %v3480
    %v3633 = vpack.c.b16 %v3485, %v3481
    %v3634 = vpack.c.b16 %v3490, %v3486
    %v3635 = vpack.c.b16 %v3491, %v3487
    %v3636 = vpack.c.b16 %v3492, %v3488
    %v3637 = vpack.c.b16 %v3493, %v3489
    %v3638 = vpack.c.b16 %v3498, %v3494
    %v3639 = vpack.c.b16 %v3499, %v3495
    %v3640 = vpack.c.b16 %v3500, %v3496
    %v3641 = vpack.c.b16 %v3501, %v3497
    %v3642 = vpack.c.b16 %v3506, %v3502
    %v3643 = vpack.c.b16 %v3507, %v3503
    %v3644 = vpack.c.b16 %v3508, %v3504
    %v3645 = vpack.c.b16 %v3509, %v3505
    %v3646 = vpack.c.b16 %v3514, %v3510
    %v3647 = vpack.c.b16 %v3515, %v3511
    %v3648 = vpack.c.b16 %v3516, %v3512
    %v3649 = vpack.c.b16 %v3517, %v3513
    %v3650 = vpack.c.b16 %v3522, %v3518
    %v3651 = vpack.c.b16 %v3523, %v3519
    %v3652 = vpack.c.b16 %v3524, %v3520
    %v3653 = vpack.c.b16 %v3525, %v3521
    %3782 = vmatprep.subr.bf16.mxu0 %v3527
    %3783 = vmatpush1.bf16.msra.mxu0 %v3526
    %3784 = vmatprep.subr.bf16.mxu0 %v3531
    %3785 = vmatpush1.bf16.msra.mxu0 %v3530
    %3786 = vmatprep.subr.bf16.mxu0 %v3535
    %3787 = vmatpush1.bf16.msra.mxu0 %v3534
    %3788 = vmatprep.subr.bf16.mxu0 %v3539
    %3789 = vmatpush1.bf16.msra.mxu0 %v3538
    %3790 = vmatprep.subr.bf16.mxu0 %v3543
    %3791 = vmatpush1.bf16.msra.mxu0 %v3542
    %3792 = vmatprep.subr.bf16.mxu0 %v3547
    %3793 = vmatpush1.bf16.msra.mxu0 %v3546
    %3794 = vmatprep.subr.bf16.mxu0 %v3551
    %3795 = vmatpush1.bf16.msra.mxu0 %v3550
    %3796 = vmatprep.subr.bf16.mxu0 %v3555
    %3797 = vmatpush1.bf16.msra.mxu0 %v3554
    %3798 = vmatprep.subr.bf16.mxu0 %v3559
    %3799 = vmatpush1.bf16.msra.mxu0 %v3558
    %3800 = vmatprep.subr.bf16.mxu0 %v3563
    %3801 = vmatpush1.bf16.msra.mxu0 %v3562
    %3802 = vmatprep.subr.bf16.mxu0 %v3567
    %3803 = vmatpush1.bf16.msra.mxu0 %v3566
    %3804 = vmatprep.subr.bf16.mxu0 %v3571
    %3805 = vmatpush1.bf16.msra.mxu0 %v3570
    %3806 = vmatprep.subr.bf16.mxu0 %v3575
    %3807 = vmatpush1.bf16.msra.mxu0 %v3574
    %3808 = vmatprep.subr.bf16.mxu0 %v3579
    %3809 = vmatpush1.bf16.msra.mxu0 %v3578
    %3810 = vmatprep.subr.bf16.mxu0 %v3583
    %3811 = vmatpush1.bf16.msra.mxu0 %v3582
    %3812 = vmatprep.subr.bf16.mxu0 %v3587
    %3813 = vmatpush1.bf16.msra.mxu0 %v3586
    %3814 = vmatprep.mubr.bf16.mxu0 %v2989
    %3815 = vmatmul.mubr.bf16.gmra.mrb[0].mxu0 %v2988
    %v3816 = vpop.f32.mrb[0].mxu0
    %v3817 = vadd.f32 %v3125, %v3816
    %v3818 = vpop.f32.mrb[0].mxu0
    %v3819 = vadd.f32 %v3129, %v3818
    %v3820 = vpop.f32.mrb[0].mxu0
    %v3821 = vadd.f32 %v3125, %v3820
    %v3822 = vpop.f32.mrb[0].mxu0
    %v3823 = vadd.f32 %v3129, %v3822
    %3824 = vdwg.mxu0
    %3825 = vmatprep.subr.bf16.mxu0 %v3591
    %3826 = vmatpush1.bf16.msra.mxu0 %v3590
    %3827 = vmatprep.subr.bf16.mxu0 %v3595
    %3828 = vmatpush1.bf16.msra.mxu0 %v3594
    %3829 = vmatprep.subr.bf16.mxu0 %v3599
    %3830 = vmatpush1.bf16.msra.mxu0 %v3598
    %3831 = vmatprep.subr.bf16.mxu0 %v3603
    %3832 = vmatpush1.bf16.msra.mxu0 %v3602
    %3833 = vmatprep.subr.bf16.mxu0 %v3607
    %3834 = vmatpush1.bf16.msra.mxu0 %v3606
    %3835 = vmatprep.subr.bf16.mxu0 %v3611
    %3836 = vmatpush1.bf16.msra.mxu0 %v3610
    %3837 = vmatprep.subr.bf16.mxu0 %v3615
    %3838 = vmatpush1.bf16.msra.mxu0 %v3614
    %3839 = vmatprep.subr.bf16.mxu0 %v3619
    %3840 = vmatpush1.bf16.msra.mxu0 %v3618
    %3841 = vmatprep.subr.bf16.mxu0 %v3623
    %3842 = vmatpush1.bf16.msra.mxu0 %v3622
    %3843 = vmatprep.subr.bf16.mxu0 %v3627
    %3844 = vmatpush1.bf16.msra.mxu0 %v3626
    %3845 = vmatprep.subr.bf16.mxu0 %v3631
    %3846 = vmatpush1.bf16.msra.mxu0 %v3630
    %3847 = vmatprep.subr.bf16.mxu0 %v3635
    %3848 = vmatpush1.bf16.msra.mxu0 %v3634
    %3849 = vmatprep.subr.bf16.mxu0 %v3639
    %3850 = vmatpush1.bf16.msra.mxu0 %v3638
    %3851 = vmatprep.subr.bf16.mxu0 %v3643
    %3852 = vmatpush1.bf16.msra.mxu0 %v3642
    %3853 = vmatprep.subr.bf16.mxu0 %v3647
    %3854 = vmatpush1.bf16.msra.mxu0 %v3646
    %3855 = vmatprep.subr.bf16.mxu0 %v3651
    %3856 = vmatpush1.bf16.msra.mxu0 %v3650
    %3857 = vmatprep.mubr.bf16.mxu0 %v2991
    %3858 = vmatmul.mubr.bf16.gmra.mrb[0].mxu0 %v2990
    %v3859 = vpop.f32.mrb[0].mxu0
    %v3860 = vadd.f32 %v3817, %v3859
    %v3861 = vpop.f32.mrb[0].mxu0
    %v3862 = vadd.f32 %v3819, %v3861
    %v3863 = vpop.f32.mrb[0].mxu0
    %v3864 = vadd.f32 %v3821, %v3863
    %v3865 = vpop.f32.mrb[0].mxu0
    %v3866 = vadd.f32 %v3823, %v3865
    %3867 = vdwg.mxu0
    %3868 = vmatprep.subr.bf16.mxu0 %v3529
    %3869 = vmatpush1.bf16.msra.mxu0 %v3528
    %3870 = vmatprep.subr.bf16.mxu0 %v3533
    %3871 = vmatpush1.bf16.msra.mxu0 %v3532
    %3872 = vmatprep.subr.bf16.mxu0 %v3537
    %3873 = vmatpush1.bf16.msra.mxu0 %v3536
    %3874 = vmatprep.subr.bf16.mxu0 %v3541
    %3875 = vmatpush1.bf16.msra.mxu0 %v3540
    %3876 = vmatprep.subr.bf16.mxu0 %v3545
    %3877 = vmatpush1.bf16.msra.mxu0 %v3544
    %3878 = vmatprep.subr.bf16.mxu0 %v3549
    %3879 = vmatpush1.bf16.msra.mxu0 %v3548
    %3880 = vmatprep.subr.bf16.mxu0 %v3553
    %3881 = vmatpush1.bf16.msra.mxu0 %v3552
    %3882 = vmatprep.subr.bf16.mxu0 %v3557
    %3883 = vmatpush1.bf16.msra.mxu0 %v3556
    %3884 = vmatprep.subr.bf16.mxu0 %v3561
    %3885 = vmatpush1.bf16.msra.mxu0 %v3560
    %3886 = vmatprep.subr.bf16.mxu0 %v3565
    %3887 = vmatpush1.bf16.msra.mxu0 %v3564
    %3888 = vmatprep.subr.bf16.mxu0 %v3569
    %3889 = vmatpush1.bf16.msra.mxu0 %v3568
    %3890 = vmatprep.subr.bf16.mxu0 %v3573
    %3891 = vmatpush1.bf16.msra.mxu0 %v3572
    %3892 = vmatprep.subr.bf16.mxu0 %v3577
    %3893 = vmatpush1.bf16.msra.mxu0 %v3576
    %3894 = vmatprep.subr.bf16.mxu0 %v3581
    %3895 = vmatpush1.bf16.msra.mxu0 %v3580
    %3896 = vmatprep.subr.bf16.mxu0 %v3585
    %3897 = vmatpush1.bf16.msra.mxu0 %v3584
    %3898 = vmatprep.subr.bf16.mxu0 %v3589
    %3899 = vmatpush1.bf16.msra.mxu0 %v3588
    %3900 = vmatprep.mubr.bf16.mxu0 %v2989
    %3901 = vmatmul.mubr.bf16.gmra.mrb[0].mxu0 %v2988
    %v3902 = vpop.f32.mrb[0].mxu0
    %v3903 = vadd.f32 %v3133, %v3902
    %v3904 = vpop.f32.mrb[0].mxu0
    %v3905 = vadd.f32 %v3137, %v3904
    %v3906 = vpop.f32.mrb[0].mxu0
    %v3907 = vadd.f32 %v3133, %v3906
    %v3908 = vpop.f32.mrb[0].mxu0
    %v3909 = vadd.f32 %v3137, %v3908
    %3910 = vdwg.mxu0
    %3911 = vmatprep.subr.bf16.mxu0 %v3593
    %3912 = vmatpush1.bf16.msra.mxu0 %v3592
    %3913 = vmatprep.subr.bf16.mxu0 %v3597
    %3914 = vmatpush1.bf16.msra.mxu0 %v3596
    %3915 = vmatprep.subr.bf16.mxu0 %v3601
    %3916 = vmatpush1.bf16.msra.mxu0 %v3600
    %3917 = vmatprep.subr.bf16.mxu0 %v3605
    %3918 = vmatpush1.bf16.msra.mxu0 %v3604
    %3919 = vmatprep.subr.bf16.mxu0 %v3609
    %3920 = vmatpush1.bf16.msra.mxu0 %v3608
    %3921 = vmatprep.subr.bf16.mxu0 %v3613
    %3922 = vmatpush1.bf16.msra.mxu0 %v3612
    %3923 = vmatprep.subr.bf16.mxu0 %v3617
    %3924 = vmatpush1.bf16.msra.mxu0 %v3616
    %3925 = vmatprep.subr.bf16.mxu0 %v3621
    %3926 = vmatpush1.bf16.msra.mxu0 %v3620
    %3927 = vmatprep.subr.bf16.mxu0 %v3625
    %3928 = vmatpush1.bf16.msra.mxu0 %v3624
    %3929 = vmatprep.subr.bf16.mxu0 %v3629
    %3930 = vmatpush1.bf16.msra.mxu0 %v3628
    %3931 = vmatprep.subr.bf16.mxu0 %v3633
    %3932 = vmatpush1.bf16.msra.mxu0 %v3632
    %3933 = vmatprep.subr.bf16.mxu0 %v3637
    %3934 = vmatpush1.bf16.msra.mxu0 %v3636
    %3935 = vmatprep.subr.bf16.mxu0 %v3641
    %3936 = vmatpush1.bf16.msra.mxu0 %v3640
    %3937 = vmatprep.subr.bf16.mxu0 %v3645
    %3938 = vmatpush1.bf16.msra.mxu0 %v3644
    %3939 = vmatprep.subr.bf16.mxu0 %v3649
    %3940 = vmatpush1.bf16.msra.mxu0 %v3648
    %3941 = vmatprep.subr.bf16.mxu0 %v3653
    %3942 = vmatpush1.bf16.msra.mxu0 %v3652
    %3943 = vmatprep.mubr.bf16.mxu0 %v2991
    %3944 = vmatmul.mubr.bf16.gmra.mrb[0].mxu0 %v2990
    %v3945 = vpop.f32.mrb[0].mxu0
    %v3946 = vadd.f32 %v3903, %v3945
    %v3947 = vpop.f32.mrb[0].mxu0
    %v3948 = vadd.f32 %v3905, %v3947
    %v3949 = vpop.f32.mrb[0].mxu0
    %v3950 = vadd.f32 %v3907, %v3949
    %v3951 = vpop.f32.mrb[0].mxu0
    %v3952 = vadd.f32 %v3909, %v3951
    %3953 = vdwg.mxu0
    %v3954 = vmax.f32 %v3860, 0.0
    %v3955 = vmax.f32 %v3862, 0.0
    %v3956 = vmax.f32 %v3946, 0.0
    %v3957 = vmax.f32 %v3948, 0.0
    %v3958 = vmax.f32 %v3864, 0.0
    %v3959 = vmax.f32 %v3866, 0.0
    %v3960 = vmax.f32 %v3950, 0.0
    %v3961 = vmax.f32 %v3952, 0.0
    %v3962 = vpack.c.bf16 %v3958, %v3954
    %v3963 = vpack.c.bf16 %v3959, %v3955
    %v3964 = vpack.c.bf16 %v3960, %v3956
    %v3965 = vpack.c.bf16 %v3961, %v3957
    %v3966 = vld [vmem:[#allocation7] sm:$0xf]
    %v3967 = vld [vmem:[#allocation7 + $0x4] sm:$0xf]
    %v3968 = vld [vmem:[#allocation7 + $0x8] sm:$0xf]
    %v3969 = vld [vmem:[#allocation7 + $0xc] sm:$0xf]
    %v3970 = vld [vmem:[#allocation7 + $0x10] sm:$0xf]
    %v3971 = vld [vmem:[#allocation7 + $0x14] sm:$0xf]
    %v3972 = vld [vmem:[#allocation7 + $0x18] sm:$0xf]
    %v3973 = vld [vmem:[#allocation7 + $0x1c] sm:$0xf]
    %v3974 = vld [vmem:[#allocation7 + $0x20] sm:$0xf]
    %v3975 = vld [vmem:[#allocation7 + $0x24] sm:$0xf]
    %v3976 = vld [vmem:[#allocation7 + $0x28] sm:$0xf]
    %v3977 = vld [vmem:[#allocation7 + $0x2c] sm:$0xf]
    %v3978 = vld [vmem:[#allocation7 + $0x30] sm:$0xf]
    %v3979 = vld [vmem:[#allocation7 + $0x34] sm:$0xf]
    %v3980 = vld [vmem:[#allocation7 + $0x38] sm:$0xf]
    %v3981 = vld [vmem:[#allocation7 + $0x3c] sm:$0xf]
    %v3982 = vld [vmem:[#allocation7 + $0x40] sm:$0xf]
    %v3983 = vld [vmem:[#allocation7 + $0x44] sm:$0xf]
    %v3984 = vld [vmem:[#allocation7 + $0x48] sm:$0xf]
    %v3985 = vld [vmem:[#allocation7 + $0x4c] sm:$0xf]
    %v3986 = vld [vmem:[#allocation7 + $0x50] sm:$0xf]
    %v3987 = vld [vmem:[#allocation7 + $0x54] sm:$0xf]
    %v3988 = vld [vmem:[#allocation7 + $0x58] sm:$0xf]
    %v3989 = vld [vmem:[#allocation7 + $0x5c] sm:$0xf]
    %v3990 = vld [vmem:[#allocation7 + $0x60] sm:$0xf]
    %v3991 = vld [vmem:[#allocation7 + $0x64] sm:$0xf]
    %v3992 = vld [vmem:[#allocation7 + $0x68] sm:$0xf]
    %v3993 = vld [vmem:[#allocation7 + $0x6c] sm:$0xf]
    %v3994 = vld [vmem:[#allocation7 + $0x70] sm:$0xf]
    %v3995 = vld [vmem:[#allocation7 + $0x74] sm:$0xf]
    %v3996 = vld [vmem:[#allocation7 + $0x78] sm:$0xf]
    %v3997 = vld [vmem:[#allocation7 + $0x7c] sm:$0xf]
    %v3998 = vld [vmem:[#allocation7 + $0x80] sm:$0xf]
    %v3999 = vld [vmem:[#allocation7 + $0x84] sm:$0xf]
    %v4000 = vld [vmem:[#allocation7 + $0x88] sm:$0xf]
    %v4001 = vld [vmem:[#allocation7 + $0x8c] sm:$0xf]
    %v4002 = vld [vmem:[#allocation7 + $0x90] sm:$0xf]
    %v4003 = vld [vmem:[#allocation7 + $0x94] sm:$0xf]
    %v4004 = vld [vmem:[#allocation7 + $0x98] sm:$0xf]
    %v4005 = vld [vmem:[#allocation7 + $0x9c] sm:$0xf]
    %v4006 = vld [vmem:[#allocation7 + $0xa0] sm:$0xf]
    %v4007 = vld [vmem:[#allocation7 + $0xa4] sm:$0xf]
    %v4008 = vld [vmem:[#allocation7 + $0xa8] sm:$0xf]
    %v4009 = vld [vmem:[#allocation7 + $0xac] sm:$0xf]
    %v4010 = vld [vmem:[#allocation7 + $0xb0] sm:$0xf]
    %v4011 = vld [vmem:[#allocation7 + $0xb4] sm:$0xf]
    %v4012 = vld [vmem:[#allocation7 + $0xb8] sm:$0xf]
    %v4013 = vld [vmem:[#allocation7 + $0xbc] sm:$0xf]
    %v4014 = vld [vmem:[#allocation7 + $0xc0] sm:$0xf]
    %v4015 = vld [vmem:[#allocation7 + $0xc4] sm:$0xf]
    %v4016 = vld [vmem:[#allocation7 + $0xc8] sm:$0xf]
    %v4017 = vld [vmem:[#allocation7 + $0xcc] sm:$0xf]
    %v4018 = vld [vmem:[#allocation7 + $0xd0] sm:$0xf]
    %v4019 = vld [vmem:[#allocation7 + $0xd4] sm:$0xf]
    %v4020 = vld [vmem:[#allocation7 + $0xd8] sm:$0xf]
    %v4021 = vld [vmem:[#allocation7 + $0xdc] sm:$0xf]
    %v4022 = vld [vmem:[#allocation7 + $0xe0] sm:$0xf]
    %v4023 = vld [vmem:[#allocation7 + $0xe4] sm:$0xf]
    %v4024 = vld [vmem:[#allocation7 + $0xe8] sm:$0xf]
    %v4025 = vld [vmem:[#allocation7 + $0xec] sm:$0xf]
    %v4026 = vld [vmem:[#allocation7 + $0xf0] sm:$0xf]
    %v4027 = vld [vmem:[#allocation7 + $0xf4] sm:$0xf]
    %v4028 = vld [vmem:[#allocation7 + $0xf8] sm:$0xf]
    %v4029 = vld [vmem:[#allocation7 + $0xfc] sm:$0xf]
    %v4030 = vld [vmem:[%s8] sm:$0x1]
    %v4032 = vlaneseq
    %v4033 = vshrl.u32 %v4032, 7
    %v4034 = vsub.s32 0, %v4033
    %v4035 = vrot.slane %v4030, %v4034
    %v4101 = vunpack.c.l.b16 %v3966
    %v4102 = vunpack.c.l.b16 %v3967
    %v4103 = vunpack.c.l.b16 %v3968
    %v4104 = vunpack.c.l.b16 %v3969
    %v4105 = vunpack.c.l.b16 %v3970
    %v4106 = vunpack.c.l.b16 %v3971
    %v4107 = vunpack.c.l.b16 %v3972
    %v4108 = vunpack.c.l.b16 %v3973
    %v4109 = vunpack.c.l.b16 %v3974
    %v4110 = vunpack.c.l.b16 %v3975
    %v4111 = vunpack.c.l.b16 %v3976
    %v4112 = vunpack.c.l.b16 %v3977
    %v4113 = vunpack.c.l.b16 %v3978
    %v4114 = vunpack.c.l.b16 %v3979
    %v4115 = vunpack.c.l.b16 %v3980
    %v4116 = vunpack.c.l.b16 %v3981
    %v4117 = vunpack.c.l.b16 %v3982
    %v4118 = vunpack.c.l.b16 %v3983
    %v4119 = vunpack.c.l.b16 %v3984
    %v4120 = vunpack.c.l.b16 %v3985
    %v4121 = vunpack.c.l.b16 %v3986
    %v4122 = vunpack.c.l.b16 %v3987
    %v4123 = vunpack.c.l.b16 %v3988
    %v4124 = vunpack.c.l.b16 %v3989
    %v4125 = vunpack.c.l.b16 %v3990
    %v4126 = vunpack.c.l.b16 %v3991
    %v4127 = vunpack.c.l.b16 %v3992
    %v4128 = vunpack.c.l.b16 %v3993
    %v4129 = vunpack.c.l.b16 %v3994
    %v4130 = vunpack.c.l.b16 %v3995
    %v4131 = vunpack.c.l.b16 %v3996
    %v4132 = vunpack.c.l.b16 %v3997
    %v4133 = vunpack.c.l.b16 %v3998
    %v4134 = vunpack.c.l.b16 %v3999
    %v4135 = vunpack.c.l.b16 %v4000
    %v4136 = vunpack.c.l.b16 %v4001
    %v4137 = vunpack.c.l.b16 %v4002
    %v4138 = vunpack.c.l.b16 %v4003
    %v4139 = vunpack.c.l.b16 %v4004
    %v4140 = vunpack.c.l.b16 %v4005
    %v4141 = vunpack.c.l.b16 %v4006
    %v4142 = vunpack.c.l.b16 %v4007
    %v4143 = vunpack.c.l.b16 %v4008
    %v4144 = vunpack.c.l.b16 %v4009
    %v4145 = vunpack.c.l.b16 %v4010
    %v4146 = vunpack.c.l.b16 %v4011
    %v4147 = vunpack.c.l.b16 %v4012
    %v4148 = vunpack.c.l.b16 %v4013
    %v4149 = vunpack.c.l.b16 %v4014
    %v4150 = vunpack.c.l.b16 %v4015
    %v4151 = vunpack.c.l.b16 %v4016
    %v4152 = vunpack.c.l.b16 %v4017
    %v4153 = vunpack.c.l.b16 %v4018
    %v4154 = vunpack.c.l.b16 %v4019
    %v4155 = vunpack.c.l.b16 %v4020
    %v4156 = vunpack.c.l.b16 %v4021
    %v4157 = vunpack.c.l.b16 %v4022
    %v4158 = vunpack.c.l.b16 %v4023
    %v4159 = vunpack.c.l.b16 %v4024
    %v4160 = vunpack.c.l.b16 %v4025
    %v4161 = vunpack.c.l.b16 %v4026
    %v4162 = vunpack.c.l.b16 %v4027
    %v4163 = vunpack.c.l.b16 %v4028
    %v4164 = vunpack.c.l.b16 %v4029
    %v4165 = vpack.c.b16 %v4102, %v4101
    %v4166 = vpack.c.b16 %v4104, %v4103
    %v4167 = vpack.c.b16 %v4106, %v4105
    %v4168 = vpack.c.b16 %v4108, %v4107
    %v4169 = vpack.c.b16 %v4110, %v4109
    %v4170 = vpack.c.b16 %v4112, %v4111
    %v4171 = vpack.c.b16 %v4114, %v4113
    %v4172 = vpack.c.b16 %v4116, %v4115
    %v4173 = vpack.c.b16 %v4118, %v4117
    %v4174 = vpack.c.b16 %v4120, %v4119
    %v4175 = vpack.c.b16 %v4122, %v4121
    %v4176 = vpack.c.b16 %v4124, %v4123
    %v4177 = vpack.c.b16 %v4126, %v4125
    %v4178 = vpack.c.b16 %v4128, %v4127
    %v4179 = vpack.c.b16 %v4130, %v4129
    %v4180 = vpack.c.b16 %v4132, %v4131
    %v4181 = vpack.c.b16 %v4134, %v4133
    %v4182 = vpack.c.b16 %v4136, %v4135
    %v4183 = vpack.c.b16 %v4138, %v4137
    %v4184 = vpack.c.b16 %v4140, %v4139
    %v4185 = vpack.c.b16 %v4142, %v4141
    %v4186 = vpack.c.b16 %v4144, %v4143
    %v4187 = vpack.c.b16 %v4146, %v4145
    %v4188 = vpack.c.b16 %v4148, %v4147
    %v4189 = vpack.c.b16 %v4150, %v4149
    %v4190 = vpack.c.b16 %v4152, %v4151
    %v4191 = vpack.c.b16 %v4154, %v4153
    %v4192 = vpack.c.b16 %v4156, %v4155
    %v4193 = vpack.c.b16 %v4158, %v4157
    %v4194 = vpack.c.b16 %v4160, %v4159
    %v4195 = vpack.c.b16 %v4162, %v4161
    %v4196 = vpack.c.b16 %v4164, %v4163
    %4229 = vmatprep.subr.bf16.mxu0 0
    %4230 = vmatpush1.bf16.msra.mxu0 %v4165
    %4231 = vmatprep.subr.bf16.mxu0 0
    %4232 = vmatpush1.bf16.msra.mxu0 %v4166
    %4233 = vmatprep.subr.bf16.mxu0 0
    %4234 = vmatpush1.bf16.msra.mxu0 %v4167
    %4235 = vmatprep.subr.bf16.mxu0 0
    %4236 = vmatpush1.bf16.msra.mxu0 %v4168
    %4237 = vmatprep.subr.bf16.mxu0 0
    %4238 = vmatpush1.bf16.msra.mxu0 %v4169
    %4239 = vmatprep.subr.bf16.mxu0 0
    %4240 = vmatpush1.bf16.msra.mxu0 %v4170
    %4241 = vmatprep.subr.bf16.mxu0 0
    %4242 = vmatpush1.bf16.msra.mxu0 %v4171
    %4243 = vmatprep.subr.bf16.mxu0 0
    %4244 = vmatpush1.bf16.msra.mxu0 %v4172
    %4245 = vmatprep.subr.bf16.mxu0 0
    %4246 = vmatpush1.bf16.msra.mxu0 %v4173
    %4247 = vmatprep.subr.bf16.mxu0 0
    %4248 = vmatpush1.bf16.msra.mxu0 %v4174
    %4249 = vmatprep.subr.bf16.mxu0 0
    %4250 = vmatpush1.bf16.msra.mxu0 %v4175
    %4251 = vmatprep.subr.bf16.mxu0 0
    %4252 = vmatpush1.bf16.msra.mxu0 %v4176
    %4253 = vmatprep.subr.bf16.mxu0 0
    %4254 = vmatpush1.bf16.msra.mxu0 %v4177
    %4255 = vmatprep.subr.bf16.mxu0 0
    %4256 = vmatpush1.bf16.msra.mxu0 %v4178
    %4257 = vmatprep.subr.bf16.mxu0 0
    %4258 = vmatpush1.bf16.msra.mxu0 %v4179
    %4259 = vmatprep.subr.bf16.mxu0 0
    %4260 = vmatpush1.bf16.msra.mxu0 %v4180
    %4261 = vmatprep.mubr.bf16.mxu0 %v3963
    %4262 = vmatmul.mubr.bf16.gmra.mrb[0].mxu0 %v3962
    %v4263 = vpop.f32.mrb[0].mxu0
    %v4264 = vadd.f32 %v4035, %v4263
    %v4265 = vpop.f32.mrb[0].mxu0
    %v4266 = vpop.f32.mrb[0].mxu0
    %v4267 = vadd.f32 %v4035, %v4266
    %v4268 = vpop.f32.mrb[0].mxu0
    %4269 = vdwg.mxu0
    %4270 = vmatprep.subr.bf16.mxu0 0
    %4271 = vmatpush1.bf16.msra.mxu0 %v4181
    %4272 = vmatprep.subr.bf16.mxu0 0
    %4273 = vmatpush1.bf16.msra.mxu0 %v4182
    %4274 = vmatprep.subr.bf16.mxu0 0
    %4275 = vmatpush1.bf16.msra.mxu0 %v4183
    %4276 = vmatprep.subr.bf16.mxu0 0
    %4277 = vmatpush1.bf16.msra.mxu0 %v4184
    %4278 = vmatprep.subr.bf16.mxu0 0
    %4279 = vmatpush1.bf16.msra.mxu0 %v4185
    %4280 = vmatprep.subr.bf16.mxu0 0
    %4281 = vmatpush1.bf16.msra.mxu0 %v4186
    %4282 = vmatprep.subr.bf16.mxu0 0
    %4283 = vmatpush1.bf16.msra.mxu0 %v4187
    %4284 = vmatprep.subr.bf16.mxu0 0
    %4285 = vmatpush1.bf16.msra.mxu0 %v4188
    %4286 = vmatprep.subr.bf16.mxu0 0
    %4287 = vmatpush1.bf16.msra.mxu0 %v4189
    %4288 = vmatprep.subr.bf16.mxu0 0
    %4289 = vmatpush1.bf16.msra.mxu0 %v4190
    %4290 = vmatprep.subr.bf16.mxu0 0
    %4291 = vmatpush1.bf16.msra.mxu0 %v4191
    %4292 = vmatprep.subr.bf16.mxu0 0
    %4293 = vmatpush1.bf16.msra.mxu0 %v4192
    %4294 = vmatprep.subr.bf16.mxu0 0
    %4295 = vmatpush1.bf16.msra.mxu0 %v4193
    %4296 = vmatprep.subr.bf16.mxu0 0
    %4297 = vmatpush1.bf16.msra.mxu0 %v4194
    %4298 = vmatprep.subr.bf16.mxu0 0
    %4299 = vmatpush1.bf16.msra.mxu0 %v4195
    %4300 = vmatprep.subr.bf16.mxu0 0
    %4301 = vmatpush1.bf16.msra.mxu0 %v4196
    %4302 = vmatprep.mubr.bf16.mxu0 %v3965
    %4303 = vmatmul.mubr.bf16.gmra.mrb[0].mxu0 %v3964
    %v4304 = vpop.f32.mrb[0].mxu0
    %v4305 = vadd.f32 %v4264, %v4304
    %v4306 = vpop.f32.mrb[0].mxu0
    %v4307 = vpop.f32.mrb[0].mxu0
    %v4308 = vadd.f32 %v4267, %v4307
    %v4309 = vpop.f32.mrb[0].mxu0
    %4310 = vdwg.mxu0
    %v4311 = vpack.c.bf16 %v4308, %v4305
    %v4313 = vunpack.c.l.b16 %v4311
    %v4314 = vunpack.c.h.b16 %v4311
    %v4315 = vpack.c.b16 %v4313, %v4313
    %v4316 = vpack.c.b16 %v4314, %v4314
    %4319 = vst [vmem:[%s9] sm:$0xf] %v4315
    %4320 = vst [vmem:[%s9 + $0x4] sm:$0xf] %v4316
    // Predicated region
    $region54: #{custom_model_head.1} parent=1 // pred_check
      _
    $region55: #{custom_model_head.1} parent=1 // pred_check_branch
      %4322 = sbr.rel (0) target = $region57
    $region56: #{custom_model_head.1} parent=1 // pred_region
      _
    $region57: #{custom_model_head.1} parent=1 // pred_fallthru
      _
    // Predicated region
    $region58: #{custom_model_head.1} parent=1 // pred_check
      _
    $region59: #{custom_model_head.1} parent=1 // pred_check_branch
      %4324 = sbr.rel (0) target = $region61
    $region60: #{custom_model_head.1} parent=1 // pred_region
      _
    $region61: #{custom_model_head.1} parent=1 // pred_fallthru
      _
    %4325 = vsyncpa [#allocation3], 1
    %4326 = vsyncpa [#allocation5], 1
    %4327 = vsyncpa [#allocation8], 1

</llo_original>
